<compile_context>
chip_gen: v5e
topology: v5e:2x2
jax: 0.10.0
libtpu: 0.0.40
codegen_flags: <defaults>
</compile_context>

<pallas_src>
import functools

import numpy as np
import jax
import jax.numpy as jnp
from jax import lax
from jax.experimental import pallas as pl
from jax.experimental.pallas import tpu as pltpu

EXPANSION = 4
DEFAULT_TM = 512                    # row tile (rows = N*H*W), tunable
MATMUL_DTYPE = jnp.float32          # set jnp.bfloat16 on v6e/v7x for more speed
VMEM_LIMIT_BYTES = 48 * 1024 * 1024  # raise scoped VMEM (safe on v5e/v6e/v7x)


def _round_up(x, m):
    return (x + m - 1) // m * m


def _pick_tm(m, tm=DEFAULT_TM):
    # Large row tiles approach the HBM roofline, but keep >=2 grid steps so
    # both v7x TensorCores get work when M is small.
    tm = min(tm, _round_up(pl.cdiv(m, 2), 8))
    return max(tm, 8)


def _compiler_params():
    return pltpu.CompilerParams(dimension_semantics=("parallel",),
                                vmem_limit_bytes=VMEM_LIMIT_BYTES)


# ----------------------------- Pallas kernels ------------------------------ #

def _mm_shift_kernel(apply_relu, x_ref, w_ref, shift_ref, o_ref):
    """out = [relu]( x @ w_scaled + shift )   (BN scale folded into w)."""
    acc = jnp.dot(x_ref[...], w_ref[...], preferred_element_type=jnp.float32)
    y = acc + shift_ref[...]
    if apply_relu:
        y = jnp.maximum(y, 0.0)
    o_ref[...] = y.astype(o_ref.dtype)


def _mm_shift_res_relu_kernel(x_ref, w_ref, shift_ref, res_ref, o_ref):
    """out = relu( x @ w_scaled + shift + residual )."""
    acc = jnp.dot(x_ref[...], w_ref[...], preferred_element_type=jnp.float32)
    y = acc + shift_ref[...] + res_ref[...].astype(jnp.float32)
    o_ref[...] = jnp.maximum(y, 0.0).astype(o_ref.dtype)


def _dual_mm_kernel(x_ref, w1_ref, s1_ref, w2_ref, s2_ref, o1_ref, o2_ref):
    """Fused conv1(+ReLU) and downsample-shortcut conv sharing one x tile."""
    x = x_ref[...]
    y1 = jnp.dot(x, w1_ref[...], preferred_element_type=jnp.float32) + s1_ref[...]
    o1_ref[...] = jnp.maximum(y1, 0.0).astype(o1_ref.dtype)
    y2 = jnp.dot(x, w2_ref[...], preferred_element_type=jnp.float32) + s2_ref[...]
    o2_ref[...] = y2.astype(o2_ref.dtype)


def _conv3x3_kernel(offsets, mi, x_ref, w_ref, shift_ref, o_ref):
    """Dilated 3x3 conv for one image: 9 shifted-row matmuls accumulated.

    x_ref:     (1, R, Cin)   flattened padded image (+ dmax zero rows each end)
    w_ref:     (9, Cin, Cout) per-tap weights with BN scale folded in
    shift_ref: (1, Cout)
    o_ref:     (1, Mi, Cout)  output on the padded grid (interior sliced later)
    """
    cout = w_ref.shape[2]
    acc = jnp.zeros((mi, cout), jnp.float32)
    for t, off in enumerate(offsets):              # static 9-way unroll
        xw = x_ref[0, off:off + mi, :]             # shifted window, VMEM-local
        acc = acc + jnp.dot(xw, w_ref[t], preferred_element_type=jnp.float32)
    y = acc + shift_ref[...]
    o_ref[0] = jnp.maximum(y, 0.0).astype(o_ref.dtype)


# ------------------------------ JAX wrappers -------------------------------- #

def _fold_bn(bn):
    inv = bn["gamma"] / jnp.sqrt(bn["var"] + bn["eps"])
    return inv, bn["beta"] - bn["mean"] * inv


def _matmul_bn(x2d, w2d_scaled, shift, residual2d=None, relu=True):
    """(M, K) @ (K, C) with fused BN shift (+residual) (+relu)."""
    M, K = x2d.shape
    C = w2d_scaled.shape[1]
    tm = _pick_tm(M)
    grid = (pl.cdiv(M, tm),)

    shift2 = shift.reshape(1, C).astype(jnp.float32)
    x_spec = pl.BlockSpec((tm, K), lambda i: (i, 0))
    w_spec = pl.BlockSpec((K, C), lambda i: (0, 0))     # resident across grid
    s_spec = pl.BlockSpec((1, C), lambda i: (0, 0))
    o_spec = pl.BlockSpec((tm, C), lambda i: (i, 0))
    out_shape = jax.ShapeDtypeStruct((M, C), jnp.float32)

    item = jnp.dtype(MATMUL_DTYPE).itemsize
    n_res = 1 if residual2d is None else 2
    cost = pl.CostEstimate(flops=2 * M * K * C, transcendentals=0,
                           bytes_accessed=(M * K + K * C) * item + n_res * M * C * 4)

    if residual2d is None:
        return pl.pallas_call(
            functools.partial(_mm_shift_kernel, relu),
            out_shape=out_shape,
            grid_spec=pltpu.PrefetchScalarGridSpec(
                num_scalar_prefetch=0, grid=grid,
                in_specs=[x_spec, w_spec, s_spec], out_specs=o_spec),
            compiler_params=_compiler_params(),
            cost_estimate=cost,
        )(x2d, w2d_scaled, shift2)

    return pl.pallas_call(
        _mm_shift_res_relu_kernel,
        out_shape=out_shape,
        grid_spec=pltpu.PrefetchScalarGridSpec(
            num_scalar_prefetch=0, grid=grid,
            in_specs=[x_spec, w_spec, s_spec,
                      pl.BlockSpec((tm, C), lambda i: (i, 0))],
            out_specs=o_spec),
        compiler_params=_compiler_params(),
        cost_estimate=cost,
    )(x2d, w2d_scaled, shift2, residual2d)


def conv1x1_bn(x_nhwc, w, bn, stride=1, relu=True, residual2d=None):
    """1x1 conv (PyTorch OIHW weight) + folded BN (+residual) (+relu)."""
    if stride > 1:
        x_nhwc = x_nhwc[:, ::stride, ::stride, :]
    N, H, W, Cin = x_nhwc.shape
    Cout = w.shape[0]
    scale, shift = _fold_bn(bn)
    w2d = (w.reshape(Cout, Cin).T * scale[None, :]).astype(MATMUL_DTYPE)
    x2d = x_nhwc.reshape(-1, Cin).astype(MATMUL_DTYPE)
    out2d = _matmul_bn(x2d, w2d, shift, residual2d=residual2d, relu=relu)
    return out2d.reshape(N, H, W, Cout)


def conv1_and_shortcut(x_nhwc, w1, bn1, wsc, bnsc, stride):
    """Fused: conv1(1x1)+BN+ReLU and shortcut conv(1x1)+BN from one x tile."""
    if stride > 1:
        x_nhwc = x_nhwc[:, ::stride, ::stride, :]
    N, H, W, Cin = x_nhwc.shape
    C1, Csc = w1.shape[0], wsc.shape[0]

    s1, b1 = _fold_bn(bn1)
    ssc, bsc = _fold_bn(bnsc)
    w1m = (w1.reshape(C1, Cin).T * s1[None, :]).astype(MATMUL_DTYPE)
    wscm = (wsc.reshape(Csc, Cin).T * ssc[None, :]).astype(MATMUL_DTYPE)
    x2d = x_nhwc.reshape(-1, Cin).astype(MATMUL_DTYPE)
    M = x2d.shape[0]

    tm = _pick_tm(M)
    grid = (pl.cdiv(M, tm),)
    item = jnp.dtype(MATMUL_DTYPE).itemsize
    cost = pl.CostEstimate(
        flops=2 * M * Cin * (C1 + Csc), transcendentals=0,
        bytes_accessed=(M * Cin + Cin * (C1 + Csc)) * item + M * (C1 + Csc) * 4)

    out1, outsc = pl.pallas_call(
        _dual_mm_kernel,
        out_shape=(jax.ShapeDtypeStruct((M, C1), jnp.float32),
                   jax.ShapeDtypeStruct((M, Csc), jnp.float32)),
        grid_spec=pltpu.PrefetchScalarGridSpec(
            num_scalar_prefetch=0, grid=grid,
            in_specs=[pl.BlockSpec((tm, Cin), lambda i: (i, 0)),
                      pl.BlockSpec((Cin, C1), lambda i: (0, 0)),
                      pl.BlockSpec((1, C1), lambda i: (0, 0)),
                      pl.BlockSpec((Cin, Csc), lambda i: (0, 0)),
                      pl.BlockSpec((1, Csc), lambda i: (0, 0))],
            out_specs=(pl.BlockSpec((tm, C1), lambda i: (i, 0)),
                       pl.BlockSpec((tm, Csc), lambda i: (i, 0)))),
        compiler_params=_compiler_params(),
        cost_estimate=cost,
    )(x2d, w1m, b1.reshape(1, C1).astype(jnp.float32),
      wscm, bsc.reshape(1, Csc).astype(jnp.float32))

    return out1.reshape(N, H, W, C1), outsc   # shortcut stays 2D (M, Csc)


def conv3x3_bn_relu(x_nhwc, w, bn, dilation=1):
    """3x3 dilated conv (stride 1, padding=dilation) + BN + ReLU.

    No HBM im2col: per image, the zero-padded picture is flattened to rows and
    each of the 9 taps is a constant row shift of that flattened matrix; the
    kernel accumulates 9 shifted-window matmuls from the resident VMEM block.
    """
    N, H, W, Cin = x_nhwc.shape
    Cout = w.shape[0]
    d = dilation
    Hp, Wp = H + 2 * d, W + 2 * d
    Mi = Hp * Wp                      # rows computed per image (padded grid)
    dmax = d * (Wp + 1)               # max |row shift| among the 9 taps
    R = Mi + 2 * dmax                 # extra zero rows so all shifts stay in-bounds

    scale, shift = _fold_bn(bn)
    # (Cout, Cin, 3, 3) -> (ky, kx, Cin, Cout) -> (9, Cin, Cout), BN scale folded.
    w9 = jnp.transpose(w, (2, 3, 1, 0)).reshape(9, Cin, Cout)
    w9 = (w9 * scale[None, None, :]).astype(MATMUL_DTYPE)
    shift2 = shift.reshape(1, Cout).astype(jnp.float32)

    xp = jnp.pad(x_nhwc, ((0, 0), (d, d), (d, d), (0, 0))).reshape(N, Mi, Cin)
    xp = jnp.pad(xp, ((0, 0), (dmax, dmax), (0, 0))).astype(MATMUL_DTYPE)

    # static row offsets of the 9 taps inside the (R, Cin) per-image block
    offsets = tuple(dmax + (ky - 1) * d * Wp + (kx - 1) * d
                    for ky in range(3) for kx in range(3))

    item = jnp.dtype(MATMUL_DTYPE).itemsize
    cost = pl.CostEstimate(
        flops=2 * N * Mi * 9 * Cin * Cout, transcendentals=0,
        bytes_accessed=(N * R * Cin + 9 * Cin * Cout) * item + N * Mi * Cout * 4)

    out = pl.pallas_call(
        functools.partial(_conv3x3_kernel, offsets, Mi),
        out_shape=jax.ShapeDtypeStruct((N, Mi, Cout), jnp.float32),
        grid_spec=pltpu.PrefetchScalarGridSpec(
            num_scalar_prefetch=0, grid=(N,),
            in_specs=[pl.BlockSpec((1, R, Cin), lambda n: (n, 0, 0)),
                      pl.BlockSpec((9, Cin, Cout), lambda n: (0, 0, 0)),
                      pl.BlockSpec((1, Cout), lambda n: (0, 0))],
            out_specs=pl.BlockSpec((1, Mi, Cout), lambda n: (n, 0, 0))),
        compiler_params=_compiler_params(),
        cost_estimate=cost,
    )(xp, w9, shift2)

    # keep only interior (valid) output positions
    return out.reshape(N, Hp, Wp, Cout)[:, d:d + H, d:d + W, :]


def bottleneck_forward(params, x_nchw, stride, dilation, downsample):
    """Matches Bottleneck.forward (PyTorch NCHW input/output), inference BN."""
    x = jnp.transpose(x_nchw, (0, 2, 3, 1))  # NCHW -> NHWC
    Cout = params["conv3_w"].shape[0]

    if downsample:
        out, res2d = conv1_and_shortcut(x, params["conv1_w"], params["bn1"],
                                        params["sc_w"], params["bn_sc"], stride)
    else:
        # nn.Identity shortcut is only valid when shapes already match.
        assert stride == 1 and x.shape[-1] == Cout, \
            "identity shortcut requires stride == 1 and in_planes == out_planes"
        out = conv1x1_bn(x, params["conv1_w"], params["bn1"],
                         stride=stride, relu=True)
        res2d = x.reshape(-1, Cout)

    out = conv3x3_bn_relu(out, params["conv2_w"], params["bn2"], dilation=dilation)
    out = conv1x1_bn(out, params["conv3_w"], params["bn3"], stride=1, relu=True,
                     residual2d=res2d)
    return jnp.transpose(out, (0, 3, 1, 2))  # NHWC -> NCHW


# --------------------------- parameter init -------------------------------- #

def _conv_weight(key, cout, cin, ks):
    fan_in = cin * ks * ks
    bound = 1.0 / np.sqrt(fan_in)
    return jax.random.uniform(key, (cout, cin, ks, ks), jnp.float32, -bound, bound)


def _bn_params(key, c):
    k1, k2, k3, k4 = jax.random.split(key, 4)
    return dict(
        gamma=jax.random.uniform(k1, (c,), jnp.float32, 0.5, 1.5),
        beta=jax.random.uniform(k2, (c,), jnp.float32, -0.5, 0.5),
        mean=jax.random.uniform(k3, (c,), jnp.float32, -0.5, 0.5),
        var=jax.random.uniform(k4, (c,), jnp.float32, 0.5, 1.5),
        eps=1e-5,
    )


def init_bottleneck_params(key, in_planes, out_planes, downsample):
    mid = out_planes // EXPANSION
    ks = jax.random.split(key, 8)
    params = dict(
        conv1_w=_conv_weight(ks[0], mid, in_planes, 1), bn1=_bn_params(ks[1], mid),
        conv2_w=_conv_weight(ks[2], mid, mid, 3),       bn2=_bn_params(ks[3], mid),
        conv3_w=_conv_weight(ks[4], out_planes, mid, 1), bn3=_bn_params(ks[5], out_planes),
    )
    if downsample:
        params["sc_w"] = _conv_weight(ks[6], out_planes, in_planes, 1)
        params["bn_sc"] = _bn_params(ks[7], out_planes)
    return params


# ---------------------------- reference (XLA) ------------------------------ #

def reference_forward(params, x, stride, dilation, downsample):
    def convbn(x, w, bn, stride=1, padding=0, dilation=1):
        y = lax.conv_general_dilated(
            x, w, window_strides=(stride, stride),
            padding=((padding, padding), (padding, padding)),
            rhs_dilation=(dilation, dilation),
            dimension_numbers=("NCHW", "OIHW", "NCHW"))
        inv = bn["gamma"] / jnp.sqrt(bn["var"] + bn["eps"])
        scale = inv.reshape(1, -1, 1, 1)
        shift = (bn["beta"] - bn["mean"] * inv).reshape(1, -1, 1, 1)
        return y * scale + shift

    out = jax.nn.relu(convbn(x, params["conv1_w"], params["bn1"], stride=stride))
    out = jax.nn.relu(convbn(out, params["conv2_w"], params["bn2"],
                             padding=dilation, dilation=dilation))
    out = convbn(out, params["conv3_w"], params["bn3"])
    sc = convbn(x, params["sc_w"], params["bn_sc"], stride=stride) if downsample else x
    return jax.nn.relu(out + sc)


# --------------------------------- main ------------------------------------ #

if __name__ == "__main__":
    IN_PLANES, OUT_PLANES = 8, 16
    STRIDE, DILATION, DOWNSAMPLE = 1, 2, True
    N, H, W = 2, 16, 16

    key = jax.random.PRNGKey(0)
    k_params, k_x = jax.random.split(key)
    params = init_bottleneck_params(k_params, IN_PLANES, OUT_PLANES, DOWNSAMPLE)
    x = jax.random.normal(k_x, (N, IN_PLANES, H, W), jnp.float32)

    fwd = jax.jit(bottleneck_forward,
                  static_argnames=("stride", "dilation", "downsample"))
    out = fwd(params, x, stride=STRIDE, dilation=DILATION, downsample=DOWNSAMPLE)
    out = jax.block_until_ready(out)

    ref = jax.block_until_ready(
        reference_forward(params, x, STRIDE, DILATION, DOWNSAMPLE))

    assert out.shape == ref.shape, (out.shape, ref.shape)
    np.testing.assert_allclose(np.asarray(out), np.asarray(ref),
                               rtol=1e-2, atol=1e-2)
    print("KERNEL_OK")
</pallas_src>

<mosaic_0001>
module attributes {stable_mosaic.version = 11 : i64} {
  func.func @_dual_mm_kernel(%arg0: i32, %arg1: memref<256x8xf32, #tpu.memory_space<vmem>>, %arg2: memref<8x4xf32, #tpu.memory_space<vmem>>, %arg3: memref<1x4xf32, #tpu.memory_space<vmem>>, %arg4: memref<8x16xf32, #tpu.memory_space<vmem>>, %arg5: memref<1x16xf32, #tpu.memory_space<vmem>>, %arg6: memref<256x4xf32, #tpu.memory_space<vmem>>, %arg7: memref<256x16xf32, #tpu.memory_space<vmem>>) attributes {dimension_semantics = [#tpu.dimension_semantics<parallel>], iteration_bounds = array<i64: 2>, scalar_prefetch = 0 : i64, scratch_operands = 0 : i64, tpu.core_type = #tpu.core_type<tc>, window_params = [{transform_indices = @transform_0, window_bounds = array<i64: 256, 8>}, {pipeline_mode = #tpu.pipeline_mode<synchronous>, transform_indices = @transform_1, window_bounds = array<i64: 8, 4>}, {pipeline_mode = #tpu.pipeline_mode<synchronous>, transform_indices = @transform_2, window_bounds = array<i64: 1, 4>}, {pipeline_mode = #tpu.pipeline_mode<synchronous>, transform_indices = @transform_3, window_bounds = array<i64: 8, 16>}, {pipeline_mode = #tpu.pipeline_mode<synchronous>, transform_indices = @transform_4, window_bounds = array<i64: 1, 16>}, {transform_indices = @transform_5, window_bounds = array<i64: 256, 4>}, {transform_indices = @transform_6, window_bounds = array<i64: 256, 16>}]} {
    %c0 = arith.constant 0 : index
    %c0_0 = arith.constant 0 : index
    %0 = vector.load %arg1[%c0, %c0_0] : memref<256x8xf32, #tpu.memory_space<vmem>>, vector<256x8xf32>
    %c0_1 = arith.constant 0 : index
    %c0_2 = arith.constant 0 : index
    %1 = vector.load %arg2[%c0_1, %c0_2] : memref<8x4xf32, #tpu.memory_space<vmem>>, vector<8x4xf32>
    %cst = arith.constant dense<0.000000e+00> : vector<256x4xf32>
    %2 = tpu.matmul %0, %1, %cst {dimension_numbers = #tpu.dot_dimension_numbers<[1], [0], [0], [1], [0, 0, 1, 1], [], []>} : vector<256x8xf32>, vector<8x4xf32>, vector<256x4xf32> -> vector<256x4xf32>
    %c0_3 = arith.constant 0 : index
    %c0_4 = arith.constant 0 : index
    %3 = vector.load %arg3[%c0_3, %c0_4] : memref<1x4xf32, #tpu.memory_space<vmem>>, vector<1x4xf32>
    %4 = vector.broadcast %3 : vector<1x4xf32> to vector<256x4xf32>
    %5 = arith.addf %2, %4 : vector<256x4xf32>
    %cst_5 = arith.constant 0.000000e+00 : f32
    %6 = vector.broadcast %cst_5 : f32 to vector<256x4xf32>
    %7 = arith.maximumf %5, %6 : vector<256x4xf32>
    %c0_6 = arith.constant 0 : index
    %c0_7 = arith.constant 0 : index
    %8 = vector.load %arg6[%c0_6, %c0_7] : memref<256x4xf32, #tpu.memory_space<vmem>>, vector<256x4xf32>
    tpu.vector_store %arg6[%c0_6, %c0_7], %7 {strides = array<i32>} : memref<256x4xf32, #tpu.memory_space<vmem>>, vector<256x4xf32>,
    %c0_8 = arith.constant 0 : index
    %c0_9 = arith.constant 0 : index
    %9 = vector.load %arg4[%c0_8, %c0_9] : memref<8x16xf32, #tpu.memory_space<vmem>>, vector<8x16xf32>
    %cst_10 = arith.constant dense<0.000000e+00> : vector<256x16xf32>
    %10 = tpu.matmul %0, %9, %cst_10 {dimension_numbers = #tpu.dot_dimension_numbers<[1], [0], [0], [1], [0, 0, 1, 1], [], []>} : vector<256x8xf32>, vector<8x16xf32>, vector<256x16xf32> -> vector<256x16xf32>
    %c0_11 = arith.constant 0 : index
    %c0_12 = arith.constant 0 : index
    %11 = vector.load %arg5[%c0_11, %c0_12] : memref<1x16xf32, #tpu.memory_space<vmem>>, vector<1x16xf32>
    %12 = vector.broadcast %11 : vector<1x16xf32> to vector<256x16xf32>
    %13 = arith.addf %10, %12 : vector<256x16xf32>
    %c0_13 = arith.constant 0 : index
    %c0_14 = arith.constant 0 : index
    %14 = vector.load %arg7[%c0_13, %c0_14] : memref<256x16xf32, #tpu.memory_space<vmem>>, vector<256x16xf32>
    tpu.vector_store %arg7[%c0_13, %c0_14], %13 {strides = array<i32>} : memref<256x16xf32, #tpu.memory_space<vmem>>, vector<256x16xf32>,
    return
  }
  func.func @transform_0(%arg0: i32) -> (i32, i32) {
    %c0_i32 = arith.constant 0 : i32
    %c0_i32_0 = arith.constant 0 : i32
    return %arg0, %c0_i32 : i32, i32
  }
  func.func @transform_1(%arg0: i32) -> (i32, i32) {
    %c0_i32 = arith.constant 0 : i32
    %c0_i32_0 = arith.constant 0 : i32
    %c0_i32_1 = arith.constant 0 : i32
    return %c0_i32, %c0_i32_0 : i32, i32
  }
  func.func @transform_2(%arg0: i32) -> (i32, i32) {
    %c0_i32 = arith.constant 0 : i32
    %c0_i32_0 = arith.constant 0 : i32
    %c0_i32_1 = arith.constant 0 : i32
    return %c0_i32, %c0_i32_0 : i32, i32
  }
  func.func @transform_3(%arg0: i32) -> (i32, i32) {
    %c0_i32 = arith.constant 0 : i32
    %c0_i32_0 = arith.constant 0 : i32
    %c0_i32_1 = arith.constant 0 : i32
    return %c0_i32, %c0_i32_0 : i32, i32
  }
  func.func @transform_4(%arg0: i32) -> (i32, i32) {
    %c0_i32 = arith.constant 0 : i32
    %c0_i32_0 = arith.constant 0 : i32
    %c0_i32_1 = arith.constant 0 : i32
    return %c0_i32, %c0_i32_0 : i32, i32
  }
  func.func @transform_5(%arg0: i32) -> (i32, i32) {
    %c0_i32 = arith.constant 0 : i32
    %c0_i32_0 = arith.constant 0 : i32
    return %arg0, %c0_i32 : i32, i32
  }
  func.func @transform_6(%arg0: i32) -> (i32, i32) {
    %c0_i32 = arith.constant 0 : i32
    %c0_i32_0 = arith.constant 0 : i32
    return %arg0, %c0_i32 : i32, i32
  }
}

module attributes {stable_mosaic.version = 11 : i64} {
  func.func @_conv3x3_kernel(%arg0: i32, %arg1: memref<1x484x4xf32, #tpu.memory_space<vmem>>, %arg2: memref<9x4x4xf32, #tpu.memory_space<vmem>>, %arg3: memref<1x4xf32, #tpu.memory_space<vmem>>, %arg4: memref<1x400x4xf32, #tpu.memory_space<vmem>>) attributes {dimension_semantics = [#tpu.dimension_semantics<parallel>], iteration_bounds = array<i64: 2>, scalar_prefetch = 0 : i64, scratch_operands = 0 : i64, tpu.core_type = #tpu.core_type<tc>, window_params = [{transform_indices = @transform_0, window_bounds = array<i64: 1, 484, 4>}, {pipeline_mode = #tpu.pipeline_mode<synchronous>, transform_indices = @transform_1, window_bounds = array<i64: 9, 4, 4>}, {pipeline_mode = #tpu.pipeline_mode<synchronous>, transform_indices = @transform_2, window_bounds = array<i64: 1, 4>}, {transform_indices = @transform_3, window_bounds = array<i64: 1, 400, 4>}]} {
    %cst = arith.constant 0.000000e+00 : f32
    %0 = vector.broadcast %cst : f32 to vector<400x4xf32>
    %c0 = arith.constant 0 : index
    %c0_0 = arith.constant 0 : index
    %c0_1 = arith.constant 0 : index
    %1 = vector.load %arg1[%c0, %c0_0, %c0_1] : memref<1x484x4xf32, #tpu.memory_space<vmem>>, vector<1x400x4xf32>
    %2 = vector.shape_cast %1 : vector<1x400x4xf32> to vector<400x4xf32>
    %c0_2 = arith.constant 0 : index
    %c0_3 = arith.constant 0 : index
    %c0_4 = arith.constant 0 : index
    %3 = vector.load %arg2[%c0_2, %c0_3, %c0_4] : memref<9x4x4xf32, #tpu.memory_space<vmem>>, vector<1x4x4xf32>
    %4 = vector.shape_cast %3 : vector<1x4x4xf32> to vector<4x4xf32>
    %cst_5 = arith.constant dense<0.000000e+00> : vector<400x4xf32>
    %5 = tpu.matmul %2, %4, %cst_5 {dimension_numbers = #tpu.dot_dimension_numbers<[1], [0], [0], [1], [0, 0, 1, 1], [], []>} : vector<400x4xf32>, vector<4x4xf32>, vector<400x4xf32> -> vector<400x4xf32>
    %6 = arith.addf %0, %5 : vector<400x4xf32>
    %c0_6 = arith.constant 0 : index
    %c2 = arith.constant 2 : index
    %c0_7 = arith.constant 0 : index
    %7 = vector.load %arg1[%c0_6, %c2, %c0_7] : memref<1x484x4xf32, #tpu.memory_space<vmem>>, vector<1x400x4xf32>
    %8 = vector.shape_cast %7 : vector<1x400x4xf32> to vector<400x4xf32>
    %c1 = arith.constant 1 : index
    %c0_8 = arith.constant 0 : index
    %c0_9 = arith.constant 0 : index
    %9 = vector.load %arg2[%c1, %c0_8, %c0_9] : memref<9x4x4xf32, #tpu.memory_space<vmem>>, vector<1x4x4xf32>
    %10 = vector.shape_cast %9 : vector<1x4x4xf32> to vector<4x4xf32>
    %cst_10 = arith.constant dense<0.000000e+00> : vector<400x4xf32>
    %11 = tpu.matmul %8, %10, %cst_10 {dimension_numbers = #tpu.dot_dimension_numbers<[1], [0], [0], [1], [0, 0, 1, 1], [], []>} : vector<400x4xf32>, vector<4x4xf32>, vector<400x4xf32> -> vector<400x4xf32>
    %12 = arith.addf %6, %11 : vector<400x4xf32>
    %c0_11 = arith.constant 0 : index
    %c4 = arith.constant 4 : index
    %c0_12 = arith.constant 0 : index
    %13 = vector.load %arg1[%c0_11, %c4, %c0_12] : memref<1x484x4xf32, #tpu.memory_space<vmem>>, vector<1x400x4xf32>
    %14 = vector.shape_cast %13 : vector<1x400x4xf32> to vector<400x4xf32>
    %c2_13 = arith.constant 2 : index
    %c0_14 = arith.constant 0 : index
    %c0_15 = arith.constant 0 : index
    %15 = vector.load %arg2[%c2_13, %c0_14, %c0_15] : memref<9x4x4xf32, #tpu.memory_space<vmem>>, vector<1x4x4xf32>
    %16 = vector.shape_cast %15 : vector<1x4x4xf32> to vector<4x4xf32>
    %cst_16 = arith.constant dense<0.000000e+00> : vector<400x4xf32>
    %17 = tpu.matmul %14, %16, %cst_16 {dimension_numbers = #tpu.dot_dimension_numbers<[1], [0], [0], [1], [0, 0, 1, 1], [], []>} : vector<400x4xf32>, vector<4x4xf32>, vector<400x4xf32> -> vector<400x4xf32>
    %18 = arith.addf %12, %17 : vector<400x4xf32>
    %c0_17 = arith.constant 0 : index
    %c40 = arith.constant 40 : index
    %c0_18 = arith.constant 0 : index
    %19 = vector.load %arg1[%c0_17, %c40, %c0_18] : memref<1x484x4xf32, #tpu.memory_space<vmem>>, vector<1x400x4xf32>
    %20 = vector.shape_cast %19 : vector<1x400x4xf32> to vector<400x4xf32>
    %c3 = arith.constant 3 : index
    %c0_19 = arith.constant 0 : index
    %c0_20 = arith.constant 0 : index
    %21 = vector.load %arg2[%c3, %c0_19, %c0_20] : memref<9x4x4xf32, #tpu.memory_space<vmem>>, vector<1x4x4xf32>
    %22 = vector.shape_cast %21 : vector<1x4x4xf32> to vector<4x4xf32>
    %cst_21 = arith.constant dense<0.000000e+00> : vector<400x4xf32>
    %23 = tpu.matmul %20, %22, %cst_21 {dimension_numbers = #tpu.dot_dimension_numbers<[1], [0], [0], [1], [0, 0, 1, 1], [], []>} : vector<400x4xf32>, vector<4x4xf32>, vector<400x4xf32> -> vector<400x4xf32>
    %24 = arith.addf %18, %23 : vector<400x4xf32>
    %c0_22 = arith.constant 0 : index
    %c42 = arith.constant 42 : index
    %c0_23 = arith.constant 0 : index
    %25 = vector.load %arg1[%c0_22, %c42, %c0_23] : memref<1x484x4xf32, #tpu.memory_space<vmem>>, vector<1x400x4xf32>
    %26 = vector.shape_cast %25 : vector<1x400x4xf32> to vector<400x4xf32>
    %c4_24 = arith.constant 4 : index
    %c0_25 = arith.constant 0 : index
    %c0_26 = arith.constant 0 : index
    %27 = vector.load %arg2[%c4_24, %c0_25, %c0_26] : memref<9x4x4xf32, #tpu.memory_space<vmem>>, vector<1x4x4xf32>
    %28 = vector.shape_cast %27 : vector<1x4x4xf32> to vector<4x4xf32>
    %cst_27 = arith.constant dense<0.000000e+00> : vector<400x4xf32>
    %29 = tpu.matmul %26, %28, %cst_27 {dimension_numbers = #tpu.dot_dimension_numbers<[1], [0], [0], [1], [0, 0, 1, 1], [], []>} : vector<400x4xf32>, vector<4x4xf32>, vector<400x4xf32> -> vector<400x4xf32>
    %30 = arith.addf %24, %29 : vector<400x4xf32>
    %c0_28 = arith.constant 0 : index
    %c44 = arith.constant 44 : index
    %c0_29 = arith.constant 0 : index
    %31 = vector.load %arg1[%c0_28, %c44, %c0_29] : memref<1x484x4xf32, #tpu.memory_space<vmem>>, vector<1x400x4xf32>
    %32 = vector.shape_cast %31 : vector<1x400x4xf32> to vector<400x4xf32>
    %c5 = arith.constant 5 : index
    %c0_30 = arith.constant 0 : index
    %c0_31 = arith.constant 0 : index
    %33 = vector.load %arg2[%c5, %c0_30, %c0_31] : memref<9x4x4xf32, #tpu.memory_space<vmem>>, vector<1x4x4xf32>
    %34 = vector.shape_cast %33 : vector<1x4x4xf32> to vector<4x4xf32>
    %cst_32 = arith.constant dense<0.000000e+00> : vector<400x4xf32>
    %35 = tpu.matmul %32, %34, %cst_32 {dimension_numbers = #tpu.dot_dimension_numbers<[1], [0], [0], [1], [0, 0, 1, 1], [], []>} : vector<400x4xf32>, vector<4x4xf32>, vector<400x4xf32> -> vector<400x4xf32>
    %36 = arith.addf %30, %35 : vector<400x4xf32>
    %c0_33 = arith.constant 0 : index
    %c80 = arith.constant 80 : index
    %c0_34 = arith.constant 0 : index
    %37 = vector.load %arg1[%c0_33, %c80, %c0_34] : memref<1x484x4xf32, #tpu.memory_space<vmem>>, vector<1x400x4xf32>
    %38 = vector.shape_cast %37 : vector<1x400x4xf32> to vector<400x4xf32>
    %c6 = arith.constant 6 : index
    %c0_35 = arith.constant 0 : index
    %c0_36 = arith.constant 0 : index
    %39 = vector.load %arg2[%c6, %c0_35, %c0_36] : memref<9x4x4xf32, #tpu.memory_space<vmem>>, vector<1x4x4xf32>
    %40 = vector.shape_cast %39 : vector<1x4x4xf32> to vector<4x4xf32>
    %cst_37 = arith.constant dense<0.000000e+00> : vector<400x4xf32>
    %41 = tpu.matmul %38, %40, %cst_37 {dimension_numbers = #tpu.dot_dimension_numbers<[1], [0], [0], [1], [0, 0, 1, 1], [], []>} : vector<400x4xf32>, vector<4x4xf32>, vector<400x4xf32> -> vector<400x4xf32>
    %42 = arith.addf %36, %41 : vector<400x4xf32>
    %c0_38 = arith.constant 0 : index
    %c82 = arith.constant 82 : index
    %c0_39 = arith.constant 0 : index
    %43 = vector.load %arg1[%c0_38, %c82, %c0_39] : memref<1x484x4xf32, #tpu.memory_space<vmem>>, vector<1x400x4xf32>
    %44 = vector.shape_cast %43 : vector<1x400x4xf32> to vector<400x4xf32>
    %c7 = arith.constant 7 : index
    %c0_40 = arith.constant 0 : index
    %c0_41 = arith.constant 0 : index
    %45 = vector.load %arg2[%c7, %c0_40, %c0_41] : memref<9x4x4xf32, #tpu.memory_space<vmem>>, vector<1x4x4xf32>
    %46 = vector.shape_cast %45 : vector<1x4x4xf32> to vector<4x4xf32>
    %cst_42 = arith.constant dense<0.000000e+00> : vector<400x4xf32>
    %47 = tpu.matmul %44, %46, %cst_42 {dimension_numbers = #tpu.dot_dimension_numbers<[1], [0], [0], [1], [0, 0, 1, 1], [], []>} : vector<400x4xf32>, vector<4x4xf32>, vector<400x4xf32> -> vector<400x4xf32>
    %48 = arith.addf %42, %47 : vector<400x4xf32>
    %c0_43 = arith.constant 0 : index
    %c84 = arith.constant 84 : index
    %c0_44 = arith.constant 0 : index
    %49 = vector.load %arg1[%c0_43, %c84, %c0_44] : memref<1x484x4xf32, #tpu.memory_space<vmem>>, vector<1x400x4xf32>
    %50 = vector.shape_cast %49 : vector<1x400x4xf32> to vector<400x4xf32>
    %c8 = arith.constant 8 : index
    %c0_45 = arith.constant 0 : index
    %c0_46 = arith.constant 0 : index
    %51 = vector.load %arg2[%c8, %c0_45, %c0_46] : memref<9x4x4xf32, #tpu.memory_space<vmem>>, vector<1x4x4xf32>
    %52 = vector.shape_cast %51 : vector<1x4x4xf32> to vector<4x4xf32>
    %cst_47 = arith.constant dense<0.000000e+00> : vector<400x4xf32>
    %53 = tpu.matmul %50, %52, %cst_47 {dimension_numbers = #tpu.dot_dimension_numbers<[1], [0], [0], [1], [0, 0, 1, 1], [], []>} : vector<400x4xf32>, vector<4x4xf32>, vector<400x4xf32> -> vector<400x4xf32>
    %54 = arith.addf %48, %53 : vector<400x4xf32>
    %c0_48 = arith.constant 0 : index
    %c0_49 = arith.constant 0 : index
    %55 = vector.load %arg3[%c0_48, %c0_49] : memref<1x4xf32, #tpu.memory_space<vmem>>, vector<1x4xf32>
    %56 = vector.broadcast %55 : vector<1x4xf32> to vector<400x4xf32>
    %57 = arith.addf %54, %56 : vector<400x4xf32>
    %cst_50 = arith.constant 0.000000e+00 : f32
    %58 = vector.broadcast %cst_50 : f32 to vector<400x4xf32>
    %59 = arith.maximumf %57, %58 : vector<400x4xf32>
    %c0_51 = arith.constant 0 : index
    %c0_52 = arith.constant 0 : index
    %c0_53 = arith.constant 0 : index
    %60 = vector.load %arg4[%c0_51, %c0_52, %c0_53] : memref<1x400x4xf32, #tpu.memory_space<vmem>>, vector<1x400x4xf32>
    %61 = vector.shape_cast %60 : vector<1x400x4xf32> to vector<400x4xf32>
    %62 = vector.shape_cast %59 : vector<400x4xf32> to vector<1x400x4xf32>
    tpu.vector_store %arg4[%c0_51, %c0_52, %c0_53], %62 {strides = array<i32>} : memref<1x400x4xf32, #tpu.memory_space<vmem>>, vector<1x400x4xf32>,
    return
  }
  func.func @transform_0(%arg0: i32) -> (i32, i32, i32) {
    %c0_i32 = arith.constant 0 : i32
    %c0_i32_0 = arith.constant 0 : i32
    %c0_i32_1 = arith.constant 0 : i32
    return %arg0, %c0_i32, %c0_i32_0 : i32, i32, i32
  }
  func.func @transform_1(%arg0: i32) -> (i32, i32, i32) {
    %c0_i32 = arith.constant 0 : i32
    %c0_i32_0 = arith.constant 0 : i32
    %c0_i32_1 = arith.constant 0 : i32
    %c0_i32_2 = arith.constant 0 : i32
    return %c0_i32, %c0_i32_0, %c0_i32_1 : i32, i32, i32
  }
  func.func @transform_2(%arg0: i32) -> (i32, i32) {
    %c0_i32 = arith.constant 0 : i32
    %c0_i32_0 = arith.constant 0 : i32
    %c0_i32_1 = arith.constant 0 : i32
    return %c0_i32, %c0_i32_0 : i32, i32
  }
  func.func @transform_3(%arg0: i32) -> (i32, i32, i32) {
    %c0_i32 = arith.constant 0 : i32
    %c0_i32_0 = arith.constant 0 : i32
    %c0_i32_1 = arith.constant 0 : i32
    return %arg0, %c0_i32, %c0_i32_0 : i32, i32, i32
  }
}

module attributes {stable_mosaic.version = 11 : i64} {
  func.func @_mm_shift_res_relu_kernel(%arg0: i32, %arg1: memref<256x4xf32, #tpu.memory_space<vmem>>, %arg2: memref<4x16xf32, #tpu.memory_space<vmem>>, %arg3: memref<1x16xf32, #tpu.memory_space<vmem>>, %arg4: memref<256x16xf32, #tpu.memory_space<vmem>>, %arg5: memref<256x16xf32, #tpu.memory_space<vmem>>) attributes {dimension_semantics = [#tpu.dimension_semantics<parallel>], iteration_bounds = array<i64: 2>, scalar_prefetch = 0 : i64, scratch_operands = 0 : i64, tpu.core_type = #tpu.core_type<tc>, window_params = [{transform_indices = @transform_0, window_bounds = array<i64: 256, 4>}, {pipeline_mode = #tpu.pipeline_mode<synchronous>, transform_indices = @transform_1, window_bounds = array<i64: 4, 16>}, {pipeline_mode = #tpu.pipeline_mode<synchronous>, transform_indices = @transform_2, window_bounds = array<i64: 1, 16>}, {transform_indices = @transform_3, window_bounds = array<i64: 256, 16>}, {transform_indices = @transform_4, window_bounds = array<i64: 256, 16>}]} {
    %c0 = arith.constant 0 : index
    %c0_0 = arith.constant 0 : index
    %0 = vector.load %arg1[%c0, %c0_0] : memref<256x4xf32, #tpu.memory_space<vmem>>, vector<256x4xf32>
    %c0_1 = arith.constant 0 : index
    %c0_2 = arith.constant 0 : index
    %1 = vector.load %arg2[%c0_1, %c0_2] : memref<4x16xf32, #tpu.memory_space<vmem>>, vector<4x16xf32>
    %cst = arith.constant dense<0.000000e+00> : vector<256x16xf32>
    %2 = tpu.matmul %0, %1, %cst {dimension_numbers = #tpu.dot_dimension_numbers<[1], [0], [0], [1], [0, 0, 1, 1], [], []>} : vector<256x4xf32>, vector<4x16xf32>, vector<256x16xf32> -> vector<256x16xf32>
    %c0_3 = arith.constant 0 : index
    %c0_4 = arith.constant 0 : index
    %3 = vector.load %arg3[%c0_3, %c0_4] : memref<1x16xf32, #tpu.memory_space<vmem>>, vector<1x16xf32>
    %4 = vector.broadcast %3 : vector<1x16xf32> to vector<256x16xf32>
    %5 = arith.addf %2, %4 : vector<256x16xf32>
    %c0_5 = arith.constant 0 : index
    %c0_6 = arith.constant 0 : index
    %6 = vector.load %arg4[%c0_5, %c0_6] : memref<256x16xf32, #tpu.memory_space<vmem>>, vector<256x16xf32>
    %7 = arith.addf %5, %6 : vector<256x16xf32>
    %cst_7 = arith.constant 0.000000e+00 : f32
    %8 = vector.broadcast %cst_7 : f32 to vector<256x16xf32>
    %9 = arith.maximumf %7, %8 : vector<256x16xf32>
    %c0_8 = arith.constant 0 : index
    %c0_9 = arith.constant 0 : index
    %10 = vector.load %arg5[%c0_8, %c0_9] : memref<256x16xf32, #tpu.memory_space<vmem>>, vector<256x16xf32>
    tpu.vector_store %arg5[%c0_8, %c0_9], %9 {strides = array<i32>} : memref<256x16xf32, #tpu.memory_space<vmem>>, vector<256x16xf32>,
    return
  }
  func.func @transform_0(%arg0: i32) -> (i32, i32) {
    %c0_i32 = arith.constant 0 : i32
    %c0_i32_0 = arith.constant 0 : i32
    return %arg0, %c0_i32 : i32, i32
  }
  func.func @transform_1(%arg0: i32) -> (i32, i32) {
    %c0_i32 = arith.constant 0 : i32
    %c0_i32_0 = arith.constant 0 : i32
    %c0_i32_1 = arith.constant 0 : i32
    return %c0_i32, %c0_i32_0 : i32, i32
  }
  func.func @transform_2(%arg0: i32) -> (i32, i32) {
    %c0_i32 = arith.constant 0 : i32
    %c0_i32_0 = arith.constant 0 : i32
    %c0_i32_1 = arith.constant 0 : i32
    return %c0_i32, %c0_i32_0 : i32, i32
  }
  func.func @transform_3(%arg0: i32) -> (i32, i32) {
    %c0_i32 = arith.constant 0 : i32
    %c0_i32_0 = arith.constant 0 : i32
    return %arg0, %c0_i32 : i32, i32
  }
  func.func @transform_4(%arg0: i32) -> (i32, i32) {
    %c0_i32 = arith.constant 0 : i32
    %c0_i32_0 = arith.constant 0 : i32
    return %arg0, %c0_i32 : i32, i32
  }
}

</mosaic_0001>

<llo_original>
// kernel: bottleneck_forward.3
$region0: #{bottleneck_forward.3}
  #allocation0 [shape = 'u32[]', space=smem, size = 0x4, offset = 0x4, fixed_abs, tag = 'smem constant byte address 0x4 - core index']
  #allocation1 [shape = 'u32[72,128]{1,0:T(1,128)}', space=vmem, size = 0x9000, scoped, tag = 'internal scratch']
  %s0 = inlined_call_operand.vmem [shape: f32[512,8], index: 0, kind: input, shape index: {}]
  %s1 = inlined_call_operand.vmem [shape: f32[8,4], index: 1, kind: input, shape index: {}]
  %s2 = inlined_call_operand.vmem [shape: f32[1,4], index: 2, kind: input, shape index: {}]
  %s3 = inlined_call_operand.vmem [shape: f32[8,16], index: 3, kind: input, shape index: {}]
  %s4 = inlined_call_operand.vmem [shape: f32[1,16], index: 4, kind: input, shape index: {}]
  %s5 = inlined_call_operand.vmem [shape: f32[512,4], index: 5, kind: output, shape index: {0}]
  %s6 = inlined_call_operand.vmem [shape: f32[512,16], index: 6, kind: output, shape index: {1}]
  %7 = xla_tuple %s5, %s6
  %s8 = sld [smem:[#allocation0]]
  $region61: #{bottleneck_forward.3} parent=0
    _
  %s10 = ssub.s32 1, %s8
  %s11 = scalar_select 0, %s10, %s8
  loop: start=0, step=1, limit=4
  $region2: #{bottleneck_forward.3} parent=0 // loop_pre_header
    _
  $region3: #{bottleneck_forward.3} parent=0 // loop_header
    %s13 = sphi 0, %s17
    %p14 = scmp.ge.s32.totalorder %s13, 4
    %s23 = sphi 0, %s25
    %s26 = sphi 0, %s23
    %s27 = sphi 0, %s26
    %s43 = sphi 0, %s27
    %s47 = sphi 0, %s47
    %s49 = sphi 0, %s47
    %s50 = sphi 0, %s49
    %s64 = sphi 0, %s50
    %s68 = sphi 0, %s68
    %s70 = sphi 0, %s68
    %s71 = sphi 0, %s70
    %s85 = sphi 0, %s71
    %s89 = sphi 0, %s89
    %s91 = sphi 0, %s89
    %s92 = sphi 0, %s91
    %s106 = sphi 0, %s92
    %s110 = sphi 0, %s110
    %s112 = sphi 0, %s110
    %s113 = sphi 0, %s112
    %s127 = sphi 0, %s113
    %s133 = sphi 0, %s135
    %s136 = sphi 0, %s133
    %s137 = sphi 0, %s136
    %s153 = sphi 0, %s137
    %s159 = sphi 0, %s161
    %s162 = sphi 0, %s159
    %s163 = sphi 0, %s162
    %s179 = sphi 0, %s163
  $region4: #{bottleneck_forward.3} parent=0 // loop_header_branch
    %16 = sbr.rel (%p14) target = $region8
  $region5: #{bottleneck_forward.3} parent=0 // loop_body
    %s18 = ssub.s32 %s13, 1
    %s19 = ssub.s32 %s13, 2
    %s20 = sadd.s32 %s13, 1
    %s21 = ssub.s32 %s13, %s20
    %p22 = scmp.eq.s32.totalorder %s21, 0
    %s24 = sadd.s32 %s23, 1
    %s25 = scalar_select %p22, %s23, %s24
    %p28 = pneg %p22
    %p29 = scmp.eq.s32.totalorder %s13, 1
    %p30 = por %p28, %p29
    %p31 = scmp.ne.s32.totalorder %s23, %s26
    %p32 = scmp.eq.s32.totalorder %s13, 0
    %p33 = por %p31, %p32
    %p34 = scmp.ne.s32.totalorder %s23, %s26
    %p35 = scmp.eq.s32.totalorder %s18, 1
    %p36 = por %p34, %p35
    %p37 = scmp.ne.s32.totalorder %s26, %s27
    %p38 = scmp.eq.s32.totalorder %s18, 0
    %p39 = por %p37, %p38
    %p40 = scmp.ne.s32.totalorder %s26, %s27
    %p41 = scmp.eq.s32.totalorder %s19, 1
    %p42 = por %p40, %p41
    %p44 = scmp.ne.s32.totalorder %s27, %s43
    %p45 = scmp.eq.s32.totalorder %s19, 0
    %p46 = por %p44, %p45
    %s48 = sadd.s32 %s47, 1
    %p51 = scmp.eq.s32.totalorder %s13, 1
    %p52 = scmp.ne.s32.totalorder %s47, %s49
    %p53 = scmp.eq.s32.totalorder %s13, 0
    %p54 = por %p52, %p53
    %p55 = scmp.ne.s32.totalorder %s47, %s49
    %p56 = scmp.eq.s32.totalorder %s18, 1
    %p57 = por %p55, %p56
    %p58 = scmp.ne.s32.totalorder %s49, %s50
    %p59 = scmp.eq.s32.totalorder %s18, 0
    %p60 = por %p58, %p59
    %p61 = scmp.ne.s32.totalorder %s49, %s50
    %p62 = scmp.eq.s32.totalorder %s19, 1
    %p63 = por %p61, %p62
    %p65 = scmp.ne.s32.totalorder %s50, %s64
    %p66 = scmp.eq.s32.totalorder %s19, 0
    %p67 = por %p65, %p66
    %s69 = sadd.s32 %s68, 1
    %p72 = scmp.eq.s32.totalorder %s13, 1
    %p73 = scmp.ne.s32.totalorder %s68, %s70
    %p74 = scmp.eq.s32.totalorder %s13, 0
    %p75 = por %p73, %p74
    %p76 = scmp.ne.s32.totalorder %s68, %s70
    %p77 = scmp.eq.s32.totalorder %s18, 1
    %p78 = por %p76, %p77
    %p79 = scmp.ne.s32.totalorder %s70, %s71
    %p80 = scmp.eq.s32.totalorder %s18, 0
    %p81 = por %p79, %p80
    %p82 = scmp.ne.s32.totalorder %s70, %s71
    %p83 = scmp.eq.s32.totalorder %s19, 1
    %p84 = por %p82, %p83
    %p86 = scmp.ne.s32.totalorder %s71, %s85
    %p87 = scmp.eq.s32.totalorder %s19, 0
    %p88 = por %p86, %p87
    %s90 = sadd.s32 %s89, 1
    %p93 = scmp.eq.s32.totalorder %s13, 1
    %p94 = scmp.ne.s32.totalorder %s89, %s91
    %p95 = scmp.eq.s32.totalorder %s13, 0
    %p96 = por %p94, %p95
    %p97 = scmp.ne.s32.totalorder %s89, %s91
    %p98 = scmp.eq.s32.totalorder %s18, 1
    %p99 = por %p97, %p98
    %p100 = scmp.ne.s32.totalorder %s91, %s92
    %p101 = scmp.eq.s32.totalorder %s18, 0
    %p102 = por %p100, %p101
    %p103 = scmp.ne.s32.totalorder %s91, %s92
    %p104 = scmp.eq.s32.totalorder %s19, 1
    %p105 = por %p103, %p104
    %p107 = scmp.ne.s32.totalorder %s92, %s106
    %p108 = scmp.eq.s32.totalorder %s19, 0
    %p109 = por %p107, %p108
    %s111 = sadd.s32 %s110, 1
    %p114 = scmp.eq.s32.totalorder %s13, 1
    %p115 = scmp.ne.s32.totalorder %s110, %s112
    %p116 = scmp.eq.s32.totalorder %s13, 0
    %p117 = por %p115, %p116
    %p118 = scmp.ne.s32.totalorder %s110, %s112
    %p119 = scmp.eq.s32.totalorder %s18, 1
    %p120 = por %p118, %p119
    %p121 = scmp.ne.s32.totalorder %s112, %s113
    %p122 = scmp.eq.s32.totalorder %s18, 0
    %p123 = por %p121, %p122
    %p124 = scmp.ne.s32.totalorder %s112, %s113
    %p125 = scmp.eq.s32.totalorder %s19, 1
    %p126 = por %p124, %p125
    %p128 = scmp.ne.s32.totalorder %s113, %s127
    %p129 = scmp.eq.s32.totalorder %s19, 0
    %p130 = por %p128, %p129
    %s131 = ssub.s32 %s13, %s20
    %p132 = scmp.eq.s32.totalorder %s131, 0
    %s134 = sadd.s32 %s133, 1
    %s135 = scalar_select %p132, %s133, %s134
    %p138 = pneg %p132
    %p139 = scmp.eq.s32.totalorder %s13, 1
    %p140 = por %p138, %p139
    %p141 = scmp.ne.s32.totalorder %s133, %s136
    %p142 = scmp.eq.s32.totalorder %s13, 0
    %p143 = por %p141, %p142
    %p144 = scmp.ne.s32.totalorder %s133, %s136
    %p145 = scmp.eq.s32.totalorder %s18, 1
    %p146 = por %p144, %p145
    %p147 = scmp.ne.s32.totalorder %s136, %s137
    %p148 = scmp.eq.s32.totalorder %s18, 0
    %p149 = por %p147, %p148
    %p150 = scmp.ne.s32.totalorder %s136, %s137
    %p151 = scmp.eq.s32.totalorder %s19, 1
    %p152 = por %p150, %p151
    %p154 = scmp.ne.s32.totalorder %s137, %s153
    %p155 = scmp.eq.s32.totalorder %s19, 0
    %p156 = por %p154, %p155
    %s157 = ssub.s32 %s13, %s20
    %p158 = scmp.eq.s32.totalorder %s157, 0
    %s160 = sadd.s32 %s159, 1
    %s161 = scalar_select %p158, %s159, %s160
    %p164 = pneg %p158
    %p165 = scmp.eq.s32.totalorder %s13, 1
    %p166 = por %p164, %p165
    %p167 = scmp.ne.s32.totalorder %s159, %s162
    %p168 = scmp.eq.s32.totalorder %s13, 0
    %p169 = por %p167, %p168
    %p170 = scmp.ne.s32.totalorder %s159, %s162
    %p171 = scmp.eq.s32.totalorder %s18, 1
    %p172 = por %p170, %p171
    %p173 = scmp.ne.s32.totalorder %s162, %s163
    %p174 = scmp.eq.s32.totalorder %s18, 0
    %p175 = por %p173, %p174
    %p176 = scmp.ne.s32.totalorder %s162, %s163
    %p177 = scmp.eq.s32.totalorder %s19, 1
    %p178 = por %p176, %p177
    %p180 = scmp.ne.s32.totalorder %s163, %s179
    %p181 = scmp.eq.s32.totalorder %s19, 0
    %p182 = por %p180, %p181
    %p183 = scmp.le.s32.totalorder 1, %s13
    %p184 = scmp.lt.s32.totalorder %s13, 3
    %p185 = pnand %p183, %p184
    %p186 = pneg %p185
    // Predicated region
    $region9: #{bottleneck_forward.3} parent=5 // pred_check
      _
    $region10: #{bottleneck_forward.3} parent=5 // pred_check_branch
      %188 = sbr.rel (%p185) target = $region12
    $region11: #{bottleneck_forward.3} parent=5 // pred_region
      %s189 = ssub.s32 %s13, 1
      // Predicated region
      $region13: #{bottleneck_forward.3} parent=11 // pred_check
        %p190 = pneg %p60
      $region14: #{bottleneck_forward.3} parent=11 // pred_check_branch
        %192 = sbr.rel (%p190) target = $region16
      $region15: #{bottleneck_forward.3} parent=11 // pred_region
        _
      $region16: #{bottleneck_forward.3} parent=11 // pred_fallthru
        _
      // Predicated region
      $region17: #{bottleneck_forward.3} parent=11 // pred_check
        %p193 = pneg %p81
      $region18: #{bottleneck_forward.3} parent=11 // pred_check_branch
        %195 = sbr.rel (%p193) target = $region20
      $region19: #{bottleneck_forward.3} parent=11 // pred_region
        _
      $region20: #{bottleneck_forward.3} parent=11 // pred_fallthru
        _
      // Predicated region
      $region21: #{bottleneck_forward.3} parent=11 // pred_check
        %p196 = pneg %p102
      $region22: #{bottleneck_forward.3} parent=11 // pred_check_branch
        %198 = sbr.rel (%p196) target = $region24
      $region23: #{bottleneck_forward.3} parent=11 // pred_region
        _
      $region24: #{bottleneck_forward.3} parent=11 // pred_fallthru
        _
      // Predicated region
      $region25: #{bottleneck_forward.3} parent=11 // pred_check
        %p199 = pneg %p123
      $region26: #{bottleneck_forward.3} parent=11 // pred_check_branch
        %201 = sbr.rel (%p199) target = $region28
      $region27: #{bottleneck_forward.3} parent=11 // pred_region
        _
      $region28: #{bottleneck_forward.3} parent=11 // pred_fallthru
        _
    $region12: #{bottleneck_forward.3} parent=5 // pred_fallthru
      _
    %p202 = scmp.lt.s32.totalorder %s13, 2
    // Predicated region
    $region29: #{bottleneck_forward.3} parent=5 // pred_check
      %p203 = pneg %p202
    $region30: #{bottleneck_forward.3} parent=5 // pred_check_branch
      %205 = sbr.rel (%p203) target = $region32
    $region31: #{bottleneck_forward.3} parent=5 // pred_region
      // Predicated region
      $region33: #{bottleneck_forward.3} parent=31 // pred_check
        %p206 = pneg %p33
      $region34: #{bottleneck_forward.3} parent=31 // pred_check_branch
        %208 = sbr.rel (%p206) target = $region36
      $region35: #{bottleneck_forward.3} parent=31 // pred_region
        %s209 = smul.u32 32, %s13
        %p210 = scmp.lt.s32.totalorder %s209, 63
        %s211 = scalar_select %p210, %s209, 63
        %s212 = smul.addr %s211, 8
        %s213 = scalar_lea.vmem %s0, %s212
        %s214 = smul.u32 32, %s13
      $region36: #{bottleneck_forward.3} parent=31 // pred_fallthru
        _
    $region32: #{bottleneck_forward.3} parent=5 // pred_fallthru
      _
    %p215 = scmp.le.s32.totalorder 1, %s13
    %p216 = scmp.lt.s32.totalorder %s13, 3
    %p217 = pnand %p215, %p216
    %p218 = pneg %p217
    // Predicated region
    $region37: #{bottleneck_forward.3} parent=5 // pred_check
      _
    $region38: #{bottleneck_forward.3} parent=5 // pred_check_branch
      %220 = sbr.rel (%p217) target = $region40
    $region39: #{bottleneck_forward.3} parent=5 // pred_region
      %s221 = ssub.s32 %s13, 1
      %s222 = smul.u32 32, %s18
      %p223 = scmp.lt.s32.totalorder %s222, 63
      %s224 = scalar_select %p223, %s222, 63
      %s225 = smul.addr %s224, 8
      %s226 = scalar_lea.vmem %s0, %s225
      %p227 = pneg %p39
      %p228 = pneg %p36
      %p229 = pneg %p60
      %p230 = pneg %p57
      %p231 = pneg %p81
      %p232 = pneg %p78
      %p233 = pneg %p102
      %p234 = pneg %p99
      %p235 = pneg %p123
      %p236 = pneg %p120
      %p237 = pneg %p149
      %p238 = pneg %p146
      %s239 = smul.u32 32, %s18
      %p240 = scmp.lt.s32.totalorder %s239, 63
      %s241 = scalar_select %p240, %s239, 63
      %s242 = smul.addr %s241, 8
      %s243 = scalar_lea.vmem %s5, %s242
      %p244 = pneg %p175
      %p245 = pneg %p172
      %s246 = smul.u32 32, %s18
      %p247 = scmp.lt.s32.totalorder %s246, 63
      %s248 = scalar_select %p247, %s246, 63
      %s249 = smul.addr %s248, 8
      %s250 = scalar_lea.vmem %s6, %s249
      %s251 = smul.u32 32, %s18
      %p252 = scmp.lt.s32.totalorder %s251, 63
      %s253 = scalar_select %p252, %s251, 63
      %s254 = smul.addr %s253, 8
      %s255 = scalar_lea.vmem %s0, %s254
      %s256 = smul.u32 32, %s18
      %s257 = smul.u32 32, %s18
      %p258 = scmp.lt.s32.totalorder %s257, 63
      %s259 = scalar_select %p258, %s257, 63
      %s260 = smul.addr %s259, 8
      %s261 = scalar_lea.vmem %s5, %s260
      %s262 = smul.u32 32, %s18
      %s263 = smul.u32 32, %s18
      %p264 = scmp.lt.s32.totalorder %s263, 63
      %s265 = scalar_select %p264, %s263, 63
      %s266 = smul.addr %s265, 8
      %s267 = scalar_lea.vmem %s6, %s266
      %s268 = smul.u32 32, %s18
      %v269 = vld [vmem:[%s255] sm:$0xff]
      %v270 = vld [vmem:[%s255 + $0x8] sm:$0xff]
      %v271 = vld [vmem:[%s255 + $0x10] sm:$0xff]
      %v272 = vld [vmem:[%s255 + $0x18] sm:$0xff]
      %v273 = vld [vmem:[%s255 + $0x20] sm:$0xff]
      %v274 = vld [vmem:[%s255 + $0x28] sm:$0xff]
      %v275 = vld [vmem:[%s255 + $0x30] sm:$0xff]
      %v276 = vld [vmem:[%s255 + $0x38] sm:$0xff]
      %v277 = vld [vmem:[%s255 + $0x40] sm:$0xff]
      %v278 = vld [vmem:[%s255 + $0x48] sm:$0xff]
      %v279 = vld [vmem:[%s255 + $0x50] sm:$0xff]
      %v280 = vld [vmem:[%s255 + $0x58] sm:$0xff]
      %v281 = vld [vmem:[%s255 + $0x60] sm:$0xff]
      %v282 = vld [vmem:[%s255 + $0x68] sm:$0xff]
      %v283 = vld [vmem:[%s255 + $0x70] sm:$0xff]
      %v284 = vld [vmem:[%s255 + $0x78] sm:$0xff]
      %v285 = vld [vmem:[%s255 + $0x80] sm:$0xff]
      %v286 = vld [vmem:[%s255 + $0x88] sm:$0xff]
      %v287 = vld [vmem:[%s255 + $0x90] sm:$0xff]
      %v288 = vld [vmem:[%s255 + $0x98] sm:$0xff]
      %v289 = vld [vmem:[%s255 + $0xa0] sm:$0xff]
      %v290 = vld [vmem:[%s255 + $0xa8] sm:$0xff]
      %v291 = vld [vmem:[%s255 + $0xb0] sm:$0xff]
      %v292 = vld [vmem:[%s255 + $0xb8] sm:$0xff]
      %v293 = vld [vmem:[%s255 + $0xc0] sm:$0xff]
      %v294 = vld [vmem:[%s255 + $0xc8] sm:$0xff]
      %v295 = vld [vmem:[%s255 + $0xd0] sm:$0xff]
      %v296 = vld [vmem:[%s255 + $0xd8] sm:$0xff]
      %v297 = vld [vmem:[%s255 + $0xe0] sm:$0xff]
      %v298 = vld [vmem:[%s255 + $0xe8] sm:$0xff]
      %v299 = vld [vmem:[%s255 + $0xf0] sm:$0xff]
      %v300 = vld [vmem:[%s255 + $0xf8] sm:$0xff]
      %v301 = vld [vmem:[%s1] sm:$0xff]
      %v302 = vld [vmem:[%s2] sm:$0x1]
      %v304 = vperm.slane %v302, 0
      %vm306 = vcmask 64512
      %v308 = vsel %vm306, %v269, 0
      %v311 = vsel %vm306, %v270, 0
      %v314 = vsel %vm306, %v271, 0
      %v317 = vsel %vm306, %v272, 0
      %v320 = vsel %vm306, %v273, 0
      %v323 = vsel %vm306, %v274, 0
      %v326 = vsel %vm306, %v275, 0
      %v329 = vsel %vm306, %v276, 0
      %v332 = vsel %vm306, %v277, 0
      %v335 = vsel %vm306, %v278, 0
      %v338 = vsel %vm306, %v279, 0
      %v341 = vsel %vm306, %v280, 0
      %v344 = vsel %vm306, %v281, 0
      %v347 = vsel %vm306, %v282, 0
      %v350 = vsel %vm306, %v283, 0
      %v353 = vsel %vm306, %v284, 0
      %v356 = vsel %vm306, %v285, 0
      %v359 = vsel %vm306, %v286, 0
      %v362 = vsel %vm306, %v287, 0
      %v365 = vsel %vm306, %v288, 0
      %v368 = vsel %vm306, %v289, 0
      %v371 = vsel %vm306, %v290, 0
      %v374 = vsel %vm306, %v291, 0
      %v377 = vsel %vm306, %v292, 0
      %v380 = vsel %vm306, %v293, 0
      %v383 = vsel %vm306, %v294, 0
      %v386 = vsel %vm306, %v295, 0
      %v389 = vsel %vm306, %v296, 0
      %v392 = vsel %vm306, %v297, 0
      %v395 = vsel %vm306, %v298, 0
      %v398 = vsel %vm306, %v299, 0
      %v401 = vsel %vm306, %v300, 0
      %403 = vmatpush.msra.mxu0 0.0
      %404 = vmatpush.msra.mxu0 0.0
      %405 = vmatpush.msra.mxu0 0.0
      %406 = vmatpush.msra.mxu0 0.0
      %407 = vmatpush.msra.mxu0 0.0
      %408 = vmatpush.msra.mxu0 0.0
      %409 = vmatpush.msra.mxu0 0.0
      %410 = vmatpush.msra.mxu0 0.0
      %411 = vmatpush.msra.mxu0 0.0
      %412 = vmatpush.msra.mxu0 0.0
      %413 = vmatpush.msra.mxu0 0.0
      %414 = vmatpush.msra.mxu0 0.0
      %415 = vmatpush.msra.mxu0 0.0
      %416 = vmatpush.msra.mxu0 0.0
      %417 = vmatpush.msra.mxu0 0.0
      %418 = vmatpush.msra.mxu0 %v301
      %419 = vmatmul.f32.gmra.mxu0 %v308
      %v420 = vpop.f32.mrf.mxu0
      %v421 = vadd.f32 %v304, %v420
      %422 = vmatmul.f32.gmra.mxu0 %v311
      %v423 = vpop.f32.mrf.mxu0
      %v424 = vadd.f32 %v304, %v423
      %425 = vmatmul.f32.gmra.mxu0 %v314
      %v426 = vpop.f32.mrf.mxu0
      %v427 = vadd.f32 %v304, %v426
      %428 = vmatmul.f32.gmra.mxu0 %v317
      %v429 = vpop.f32.mrf.mxu0
      %v430 = vadd.f32 %v304, %v429
      %431 = vmatmul.f32.gmra.mxu0 %v320
      %v432 = vpop.f32.mrf.mxu0
      %v433 = vadd.f32 %v304, %v432
      %434 = vmatmul.f32.gmra.mxu0 %v323
      %v435 = vpop.f32.mrf.mxu0
      %v436 = vadd.f32 %v304, %v435
      %437 = vmatmul.f32.gmra.mxu0 %v326
      %v438 = vpop.f32.mrf.mxu0
      %v439 = vadd.f32 %v304, %v438
      %440 = vmatmul.f32.gmra.mxu0 %v329
      %v441 = vpop.f32.mrf.mxu0
      %v442 = vadd.f32 %v304, %v441
      %443 = vmatmul.f32.gmra.mxu0 %v332
      %v444 = vpop.f32.mrf.mxu0
      %v445 = vadd.f32 %v304, %v444
      %446 = vmatmul.f32.gmra.mxu0 %v335
      %v447 = vpop.f32.mrf.mxu0
      %v448 = vadd.f32 %v304, %v447
      %449 = vmatmul.f32.gmra.mxu0 %v338
      %v450 = vpop.f32.mrf.mxu0
      %v451 = vadd.f32 %v304, %v450
      %452 = vmatmul.f32.gmra.mxu0 %v341
      %v453 = vpop.f32.mrf.mxu0
      %v454 = vadd.f32 %v304, %v453
      %455 = vmatmul.f32.gmra.mxu0 %v344
      %v456 = vpop.f32.mrf.mxu0
      %v457 = vadd.f32 %v304, %v456
      %458 = vmatmul.f32.gmra.mxu0 %v347
      %v459 = vpop.f32.mrf.mxu0
      %v460 = vadd.f32 %v304, %v459
      %461 = vmatmul.f32.gmra.mxu0 %v350
      %v462 = vpop.f32.mrf.mxu0
      %v463 = vadd.f32 %v304, %v462
      %464 = vmatmul.f32.gmra.mxu0 %v353
      %v465 = vpop.f32.mrf.mxu0
      %v466 = vadd.f32 %v304, %v465
      %467 = vmatmul.f32.gmra.mxu0 %v356
      %v468 = vpop.f32.mrf.mxu0
      %v469 = vadd.f32 %v304, %v468
      %470 = vmatmul.f32.gmra.mxu0 %v359
      %v471 = vpop.f32.mrf.mxu0
      %v472 = vadd.f32 %v304, %v471
      %473 = vmatmul.f32.gmra.mxu0 %v362
      %v474 = vpop.f32.mrf.mxu0
      %v475 = vadd.f32 %v304, %v474
      %476 = vmatmul.f32.gmra.mxu0 %v365
      %v477 = vpop.f32.mrf.mxu0
      %v478 = vadd.f32 %v304, %v477
      %479 = vmatmul.f32.gmra.mxu0 %v368
      %v480 = vpop.f32.mrf.mxu0
      %v481 = vadd.f32 %v304, %v480
      %482 = vmatmul.f32.gmra.mxu0 %v371
      %v483 = vpop.f32.mrf.mxu0
      %v484 = vadd.f32 %v304, %v483
      %485 = vmatmul.f32.gmra.mxu0 %v374
      %v486 = vpop.f32.mrf.mxu0
      %v487 = vadd.f32 %v304, %v486
      %488 = vmatmul.f32.gmra.mxu0 %v377
      %v489 = vpop.f32.mrf.mxu0
      %v490 = vadd.f32 %v304, %v489
      %491 = vmatmul.f32.gmra.mxu0 %v380
      %v492 = vpop.f32.mrf.mxu0
      %v493 = vadd.f32 %v304, %v492
      %494 = vmatmul.f32.gmra.mxu0 %v383
      %v495 = vpop.f32.mrf.mxu0
      %v496 = vadd.f32 %v304, %v495
      %497 = vmatmul.f32.gmra.mxu0 %v386
      %v498 = vpop.f32.mrf.mxu0
      %v499 = vadd.f32 %v304, %v498
      %500 = vmatmul.f32.gmra.mxu0 %v389
      %v501 = vpop.f32.mrf.mxu0
      %v502 = vadd.f32 %v304, %v501
      %503 = vmatmul.f32.gmra.mxu0 %v392
      %v504 = vpop.f32.mrf.mxu0
      %v505 = vadd.f32 %v304, %v504
      %506 = vmatmul.f32.gmra.mxu0 %v395
      %v507 = vpop.f32.mrf.mxu0
      %v508 = vadd.f32 %v304, %v507
      %509 = vmatmul.f32.gmra.mxu0 %v398
      %v510 = vpop.f32.mrf.mxu0
      %v511 = vadd.f32 %v304, %v510
      %512 = vmatmul.f32.gmra.mxu0 %v401
      %v513 = vpop.f32.mrf.mxu0
      %v514 = vadd.f32 %v304, %v513
      %515 = vdwg.mxu0
      %v516 = vmax.f32 %v421, 0.0
      %v517 = vmax.f32 %v424, 0.0
      %v518 = vmax.f32 %v427, 0.0
      %v519 = vmax.f32 %v430, 0.0
      %v520 = vmax.f32 %v433, 0.0
      %v521 = vmax.f32 %v436, 0.0
      %v522 = vmax.f32 %v439, 0.0
      %v523 = vmax.f32 %v442, 0.0
      %v524 = vmax.f32 %v445, 0.0
      %v525 = vmax.f32 %v448, 0.0
      %v526 = vmax.f32 %v451, 0.0
      %v527 = vmax.f32 %v454, 0.0
      %v528 = vmax.f32 %v457, 0.0
      %v529 = vmax.f32 %v460, 0.0
      %v530 = vmax.f32 %v463, 0.0
      %v531 = vmax.f32 %v466, 0.0
      %v532 = vmax.f32 %v469, 0.0
      %v533 = vmax.f32 %v472, 0.0
      %v534 = vmax.f32 %v475, 0.0
      %v535 = vmax.f32 %v478, 0.0
      %v536 = vmax.f32 %v481, 0.0
      %v537 = vmax.f32 %v484, 0.0
      %v538 = vmax.f32 %v487, 0.0
      %v539 = vmax.f32 %v490, 0.0
      %v540 = vmax.f32 %v493, 0.0
      %v541 = vmax.f32 %v496, 0.0
      %v542 = vmax.f32 %v499, 0.0
      %v543 = vmax.f32 %v502, 0.0
      %v544 = vmax.f32 %v505, 0.0
      %v545 = vmax.f32 %v508, 0.0
      %v546 = vmax.f32 %v511, 0.0
      %v547 = vmax.f32 %v514, 0.0
      %vm548 = vcmask 31744
      %549 = vst.msk [vmem:[%s261] sm:$0xff] %vm548, %v516
      %550 = vst.msk [vmem:[%s261 + $0x8] sm:$0xff] %vm548, %v517
      %551 = vst.msk [vmem:[%s261 + $0x10] sm:$0xff] %vm548, %v518
      %552 = vst.msk [vmem:[%s261 + $0x18] sm:$0xff] %vm548, %v519
      %553 = vst.msk [vmem:[%s261 + $0x20] sm:$0xff] %vm548, %v520
      %554 = vst.msk [vmem:[%s261 + $0x28] sm:$0xff] %vm548, %v521
      %555 = vst.msk [vmem:[%s261 + $0x30] sm:$0xff] %vm548, %v522
      %556 = vst.msk [vmem:[%s261 + $0x38] sm:$0xff] %vm548, %v523
      %557 = vst.msk [vmem:[%s261 + $0x40] sm:$0xff] %vm548, %v524
      %558 = vst.msk [vmem:[%s261 + $0x48] sm:$0xff] %vm548, %v525
      %559 = vst.msk [vmem:[%s261 + $0x50] sm:$0xff] %vm548, %v526
      %560 = vst.msk [vmem:[%s261 + $0x58] sm:$0xff] %vm548, %v527
      %561 = vst.msk [vmem:[%s261 + $0x60] sm:$0xff] %vm548, %v528
      %562 = vst.msk [vmem:[%s261 + $0x68] sm:$0xff] %vm548, %v529
      %563 = vst.msk [vmem:[%s261 + $0x70] sm:$0xff] %vm548, %v530
      %564 = vst.msk [vmem:[%s261 + $0x78] sm:$0xff] %vm548, %v531
      %565 = vst.msk [vmem:[%s261 + $0x80] sm:$0xff] %vm548, %v532
      %566 = vst.msk [vmem:[%s261 + $0x88] sm:$0xff] %vm548, %v533
      %567 = vst.msk [vmem:[%s261 + $0x90] sm:$0xff] %vm548, %v534
      %568 = vst.msk [vmem:[%s261 + $0x98] sm:$0xff] %vm548, %v535
      %569 = vst.msk [vmem:[%s261 + $0xa0] sm:$0xff] %vm548, %v536
      %570 = vst.msk [vmem:[%s261 + $0xa8] sm:$0xff] %vm548, %v537
      %571 = vst.msk [vmem:[%s261 + $0xb0] sm:$0xff] %vm548, %v538
      %572 = vst.msk [vmem:[%s261 + $0xb8] sm:$0xff] %vm548, %v539
      %573 = vst.msk [vmem:[%s261 + $0xc0] sm:$0xff] %vm548, %v540
      %574 = vst.msk [vmem:[%s261 + $0xc8] sm:$0xff] %vm548, %v541
      %575 = vst.msk [vmem:[%s261 + $0xd0] sm:$0xff] %vm548, %v542
      %576 = vst.msk [vmem:[%s261 + $0xd8] sm:$0xff] %vm548, %v543
      %577 = vst.msk [vmem:[%s261 + $0xe0] sm:$0xff] %vm548, %v544
      %578 = vst.msk [vmem:[%s261 + $0xe8] sm:$0xff] %vm548, %v545
      %579 = vst.msk [vmem:[%s261 + $0xf0] sm:$0xff] %vm548, %v546
      %580 = vst.msk [vmem:[%s261 + $0xf8] sm:$0xff] %vm548, %v547
      %v581 = vld [vmem:[%s3] sm:$0xff]
      %v582 = vld [vmem:[%s4] sm:$0x1]
      %v584 = vperm.slane %v582, 0
      %586 = vmatpush.msra.mxu0 0.0
      %587 = vmatpush.msra.mxu0 0.0
      %588 = vmatpush.msra.mxu0 0.0
      %589 = vmatpush.msra.mxu0 0.0
      %590 = vmatpush.msra.mxu0 0.0
      %591 = vmatpush.msra.mxu0 0.0
      %592 = vmatpush.msra.mxu0 0.0
      %593 = vmatpush.msra.mxu0 0.0
      %594 = vmatpush.msra.mxu0 0.0
      %595 = vmatpush.msra.mxu0 0.0
      %596 = vmatpush.msra.mxu0 0.0
      %597 = vmatpush.msra.mxu0 0.0
      %598 = vmatpush.msra.mxu0 0.0
      %599 = vmatpush.msra.mxu0 0.0
      %600 = vmatpush.msra.mxu0 0.0
      %601 = vmatpush.msra.mxu0 %v581
      %602 = vmatmul.f32.gmra.mxu0 %v308
      %v603 = vpop.f32.mrf.mxu0
      %v604 = vadd.f32 %v584, %v603
      %605 = vmatmul.f32.gmra.mxu0 %v311
      %v606 = vpop.f32.mrf.mxu0
      %v607 = vadd.f32 %v584, %v606
      %608 = vmatmul.f32.gmra.mxu0 %v314
      %v609 = vpop.f32.mrf.mxu0
      %v610 = vadd.f32 %v584, %v609
      %611 = vmatmul.f32.gmra.mxu0 %v317
      %v612 = vpop.f32.mrf.mxu0
      %v613 = vadd.f32 %v584, %v612
      %614 = vmatmul.f32.gmra.mxu0 %v320
      %v615 = vpop.f32.mrf.mxu0
      %v616 = vadd.f32 %v584, %v615
      %617 = vmatmul.f32.gmra.mxu0 %v323
      %v618 = vpop.f32.mrf.mxu0
      %v619 = vadd.f32 %v584, %v618
      %620 = vmatmul.f32.gmra.mxu0 %v326
      %v621 = vpop.f32.mrf.mxu0
      %v622 = vadd.f32 %v584, %v621
      %623 = vmatmul.f32.gmra.mxu0 %v329
      %v624 = vpop.f32.mrf.mxu0
      %v625 = vadd.f32 %v584, %v624
      %626 = vmatmul.f32.gmra.mxu0 %v332
      %v627 = vpop.f32.mrf.mxu0
      %v628 = vadd.f32 %v584, %v627
      %629 = vmatmul.f32.gmra.mxu0 %v335
      %v630 = vpop.f32.mrf.mxu0
      %v631 = vadd.f32 %v584, %v630
      %632 = vmatmul.f32.gmra.mxu0 %v338
      %v633 = vpop.f32.mrf.mxu0
      %v634 = vadd.f32 %v584, %v633
      %635 = vmatmul.f32.gmra.mxu0 %v341
      %v636 = vpop.f32.mrf.mxu0
      %v637 = vadd.f32 %v584, %v636
      %638 = vmatmul.f32.gmra.mxu0 %v344
      %v639 = vpop.f32.mrf.mxu0
      %v640 = vadd.f32 %v584, %v639
      %641 = vmatmul.f32.gmra.mxu0 %v347
      %v642 = vpop.f32.mrf.mxu0
      %v643 = vadd.f32 %v584, %v642
      %644 = vmatmul.f32.gmra.mxu0 %v350
      %v645 = vpop.f32.mrf.mxu0
      %v646 = vadd.f32 %v584, %v645
      %647 = vmatmul.f32.gmra.mxu0 %v353
      %v648 = vpop.f32.mrf.mxu0
      %v649 = vadd.f32 %v584, %v648
      %650 = vmatmul.f32.gmra.mxu0 %v356
      %v651 = vpop.f32.mrf.mxu0
      %v652 = vadd.f32 %v584, %v651
      %653 = vmatmul.f32.gmra.mxu0 %v359
      %v654 = vpop.f32.mrf.mxu0
      %v655 = vadd.f32 %v584, %v654
      %656 = vmatmul.f32.gmra.mxu0 %v362
      %v657 = vpop.f32.mrf.mxu0
      %v658 = vadd.f32 %v584, %v657
      %659 = vmatmul.f32.gmra.mxu0 %v365
      %v660 = vpop.f32.mrf.mxu0
      %v661 = vadd.f32 %v584, %v660
      %662 = vmatmul.f32.gmra.mxu0 %v368
      %v663 = vpop.f32.mrf.mxu0
      %v664 = vadd.f32 %v584, %v663
      %665 = vmatmul.f32.gmra.mxu0 %v371
      %v666 = vpop.f32.mrf.mxu0
      %v667 = vadd.f32 %v584, %v666
      %668 = vmatmul.f32.gmra.mxu0 %v374
      %v669 = vpop.f32.mrf.mxu0
      %v670 = vadd.f32 %v584, %v669
      %671 = vmatmul.f32.gmra.mxu0 %v377
      %v672 = vpop.f32.mrf.mxu0
      %v673 = vadd.f32 %v584, %v672
      %674 = vmatmul.f32.gmra.mxu0 %v380
      %v675 = vpop.f32.mrf.mxu0
      %v676 = vadd.f32 %v584, %v675
      %677 = vmatmul.f32.gmra.mxu0 %v383
      %v678 = vpop.f32.mrf.mxu0
      %v679 = vadd.f32 %v584, %v678
      %680 = vmatmul.f32.gmra.mxu0 %v386
      %v681 = vpop.f32.mrf.mxu0
      %v682 = vadd.f32 %v584, %v681
      %683 = vmatmul.f32.gmra.mxu0 %v389
      %v684 = vpop.f32.mrf.mxu0
      %v685 = vadd.f32 %v584, %v684
      %686 = vmatmul.f32.gmra.mxu0 %v392
      %v687 = vpop.f32.mrf.mxu0
      %v688 = vadd.f32 %v584, %v687
      %689 = vmatmul.f32.gmra.mxu0 %v395
      %v690 = vpop.f32.mrf.mxu0
      %v691 = vadd.f32 %v584, %v690
      %692 = vmatmul.f32.gmra.mxu0 %v398
      %v693 = vpop.f32.mrf.mxu0
      %v694 = vadd.f32 %v584, %v693
      %695 = vmatmul.f32.gmra.mxu0 %v401
      %v696 = vpop.f32.mrf.mxu0
      %v697 = vadd.f32 %v584, %v696
      %698 = vdwg.mxu0
      %vm699 = vcmask 130048
      %700 = vst.msk [vmem:[%s267] sm:$0xff] %vm699, %v604
      %701 = vst.msk [vmem:[%s267 + $0x8] sm:$0xff] %vm699, %v607
      %702 = vst.msk [vmem:[%s267 + $0x10] sm:$0xff] %vm699, %v610
      %703 = vst.msk [vmem:[%s267 + $0x18] sm:$0xff] %vm699, %v613
      %704 = vst.msk [vmem:[%s267 + $0x20] sm:$0xff] %vm699, %v616
      %705 = vst.msk [vmem:[%s267 + $0x28] sm:$0xff] %vm699, %v619
      %706 = vst.msk [vmem:[%s267 + $0x30] sm:$0xff] %vm699, %v622
      %707 = vst.msk [vmem:[%s267 + $0x38] sm:$0xff] %vm699, %v625
      %708 = vst.msk [vmem:[%s267 + $0x40] sm:$0xff] %vm699, %v628
      %709 = vst.msk [vmem:[%s267 + $0x48] sm:$0xff] %vm699, %v631
      %710 = vst.msk [vmem:[%s267 + $0x50] sm:$0xff] %vm699, %v634
      %711 = vst.msk [vmem:[%s267 + $0x58] sm:$0xff] %vm699, %v637
      %712 = vst.msk [vmem:[%s267 + $0x60] sm:$0xff] %vm699, %v640
      %713 = vst.msk [vmem:[%s267 + $0x68] sm:$0xff] %vm699, %v643
      %714 = vst.msk [vmem:[%s267 + $0x70] sm:$0xff] %vm699, %v646
      %715 = vst.msk [vmem:[%s267 + $0x78] sm:$0xff] %vm699, %v649
      %716 = vst.msk [vmem:[%s267 + $0x80] sm:$0xff] %vm699, %v652
      %717 = vst.msk [vmem:[%s267 + $0x88] sm:$0xff] %vm699, %v655
      %718 = vst.msk [vmem:[%s267 + $0x90] sm:$0xff] %vm699, %v658
      %719 = vst.msk [vmem:[%s267 + $0x98] sm:$0xff] %vm699, %v661
      %720 = vst.msk [vmem:[%s267 + $0xa0] sm:$0xff] %vm699, %v664
      %721 = vst.msk [vmem:[%s267 + $0xa8] sm:$0xff] %vm699, %v667
      %722 = vst.msk [vmem:[%s267 + $0xb0] sm:$0xff] %vm699, %v670
      %723 = vst.msk [vmem:[%s267 + $0xb8] sm:$0xff] %vm699, %v673
      %724 = vst.msk [vmem:[%s267 + $0xc0] sm:$0xff] %vm699, %v676
      %725 = vst.msk [vmem:[%s267 + $0xc8] sm:$0xff] %vm699, %v679
      %726 = vst.msk [vmem:[%s267 + $0xd0] sm:$0xff] %vm699, %v682
      %727 = vst.msk [vmem:[%s267 + $0xd8] sm:$0xff] %vm699, %v685
      %728 = vst.msk [vmem:[%s267 + $0xe0] sm:$0xff] %vm699, %v688
      %729 = vst.msk [vmem:[%s267 + $0xe8] sm:$0xff] %vm699, %v691
      %730 = vst.msk [vmem:[%s267 + $0xf0] sm:$0xff] %vm699, %v694
      %731 = vst.msk [vmem:[%s267 + $0xf8] sm:$0xff] %vm699, %v697
      %s732 = smul.u32 32, %s18
      %p733 = scmp.lt.s32.totalorder %s732, 63
      %s734 = scalar_select %p733, %s732, 63
      %s735 = smul.addr %s734, 8
      %s736 = scalar_lea.vmem %s5, %s735
      %s737 = smul.u32 32, %s18
      %p738 = scmp.lt.s32.totalorder %s737, 63
      %s739 = scalar_select %p738, %s737, 63
      %s740 = smul.addr %s739, 8
      %s741 = scalar_lea.vmem %s6, %s740
      // Predicated region
      $region41: #{bottleneck_forward.3} parent=39 // pred_check
        %p742 = pneg %p146
      $region42: #{bottleneck_forward.3} parent=39 // pred_check_branch
        %744 = sbr.rel (%p742) target = $region44
      $region43: #{bottleneck_forward.3} parent=39 // pred_region
        %s745 = smul.u32 32, %s18
      $region44: #{bottleneck_forward.3} parent=39 // pred_fallthru
        _
      // Predicated region
      $region45: #{bottleneck_forward.3} parent=39 // pred_check
        %p746 = pneg %p172
      $region46: #{bottleneck_forward.3} parent=39 // pred_check_branch
        %748 = sbr.rel (%p746) target = $region48
      $region47: #{bottleneck_forward.3} parent=39 // pred_region
        %s749 = smul.u32 32, %s18
      $region48: #{bottleneck_forward.3} parent=39 // pred_fallthru
        _
    $region40: #{bottleneck_forward.3} parent=5 // pred_fallthru
      _
    %p750 = scmp.le.s32.totalorder 2, %s13
    // Predicated region
    $region49: #{bottleneck_forward.3} parent=5 // pred_check
      %p751 = pneg %p750
    $region50: #{bottleneck_forward.3} parent=5 // pred_check_branch
      %753 = sbr.rel (%p751) target = $region52
    $region51: #{bottleneck_forward.3} parent=5 // pred_region
      %s754 = ssub.s32 %s13, 2
      // Predicated region
      $region53: #{bottleneck_forward.3} parent=51 // pred_check
        %p755 = pneg %p152
      $region54: #{bottleneck_forward.3} parent=51 // pred_check_branch
        %757 = sbr.rel (%p755) target = $region56
      $region55: #{bottleneck_forward.3} parent=51 // pred_region
        %s758 = smul.u32 32, %s19
        %p759 = scmp.lt.s32.totalorder %s758, 63
        %s760 = scalar_select %p759, %s758, 63
        %s761 = smul.addr %s760, 8
        %s762 = scalar_lea.vmem %s5, %s761
      $region56: #{bottleneck_forward.3} parent=51 // pred_fallthru
        _
      // Predicated region
      $region57: #{bottleneck_forward.3} parent=51 // pred_check
        %p763 = pneg %p178
      $region58: #{bottleneck_forward.3} parent=51 // pred_check_branch
        %765 = sbr.rel (%p763) target = $region60
      $region59: #{bottleneck_forward.3} parent=51 // pred_region
        %s766 = smul.u32 32, %s19
        %p767 = scmp.lt.s32.totalorder %s766, 63
        %s768 = scalar_select %p767, %s766, 63
        %s769 = smul.addr %s768, 8
        %s770 = scalar_lea.vmem %s6, %s769
      $region60: #{bottleneck_forward.3} parent=51 // pred_fallthru
        _
    $region52: #{bottleneck_forward.3} parent=5 // pred_fallthru
      _
  $region6: #{bottleneck_forward.3} parent=0 // loop_footer
    %s17 = sadd.s32 1, %s13
  $region7: #{bottleneck_forward.3} parent=0 // loop_footer_branch
    %12 = sbr.rel target = $region3
  $region8: #{bottleneck_forward.3} parent=0 // loop_exit
    _

// kernel: bottleneck_forward.5
$region0: #{bottleneck_forward.5}
  #allocation0 [shape = 'u32[]', space=smem, size = 0x4, offset = 0x4, fixed_abs, tag = 'smem constant byte address 0x4 - core index']
  #allocation1 [shape = 'u32[72,128]{1,0:T(1,128)}', space=vmem, size = 0x9000, scoped, tag = 'internal scratch']
  %s0 = inlined_call_operand.vmem [shape: f32[512,4], index: 0, kind: input, shape index: {}]
  %s1 = inlined_call_operand.vmem [shape: f32[4,16], index: 1, kind: input, shape index: {}]
  %s2 = inlined_call_operand.vmem [shape: f32[1,16], index: 2, kind: input, shape index: {}]
  %s3 = inlined_call_operand.vmem [shape: f32[512,16], index: 3, kind: input, shape index: {}]
  %s4 = inlined_call_operand.vmem [shape: f32[512,16], index: 4, kind: output, shape index: {}]
  %s5 = sld [smem:[#allocation0]]
  $region49: #{bottleneck_forward.5} parent=0
    _
  %s7 = ssub.s32 1, %s5
  %s8 = scalar_select 0, %s7, %s5
  loop: start=0, step=1, limit=4
  $region2: #{bottleneck_forward.5} parent=0 // loop_pre_header
    _
  $region3: #{bottleneck_forward.5} parent=0 // loop_header
    %s10 = sphi 0, %s14
    %p11 = scmp.ge.s32.totalorder %s10, 4
    %s20 = sphi 0, %s22
    %s23 = sphi 0, %s20
    %s24 = sphi 0, %s23
    %s40 = sphi 0, %s24
    %s44 = sphi 0, %s44
    %s46 = sphi 0, %s44
    %s47 = sphi 0, %s46
    %s61 = sphi 0, %s47
    %s65 = sphi 0, %s65
    %s67 = sphi 0, %s65
    %s68 = sphi 0, %s67
    %s82 = sphi 0, %s68
    %s88 = sphi 0, %s90
    %s91 = sphi 0, %s88
    %s92 = sphi 0, %s91
    %s108 = sphi 0, %s92
    %s114 = sphi 0, %s116
    %s117 = sphi 0, %s114
    %s118 = sphi 0, %s117
    %s134 = sphi 0, %s118
  $region4: #{bottleneck_forward.5} parent=0 // loop_header_branch
    %13 = sbr.rel (%p11) target = $region8
  $region5: #{bottleneck_forward.5} parent=0 // loop_body
    %s15 = ssub.s32 %s10, 1
    %s16 = ssub.s32 %s10, 2
    %s17 = sadd.s32 %s10, 1
    %s18 = ssub.s32 %s10, %s17
    %p19 = scmp.eq.s32.totalorder %s18, 0
    %s21 = sadd.s32 %s20, 1
    %s22 = scalar_select %p19, %s20, %s21
    %p25 = pneg %p19
    %p26 = scmp.eq.s32.totalorder %s10, 1
    %p27 = por %p25, %p26
    %p28 = scmp.ne.s32.totalorder %s20, %s23
    %p29 = scmp.eq.s32.totalorder %s10, 0
    %p30 = por %p28, %p29
    %p31 = scmp.ne.s32.totalorder %s20, %s23
    %p32 = scmp.eq.s32.totalorder %s15, 1
    %p33 = por %p31, %p32
    %p34 = scmp.ne.s32.totalorder %s23, %s24
    %p35 = scmp.eq.s32.totalorder %s15, 0
    %p36 = por %p34, %p35
    %p37 = scmp.ne.s32.totalorder %s23, %s24
    %p38 = scmp.eq.s32.totalorder %s16, 1
    %p39 = por %p37, %p38
    %p41 = scmp.ne.s32.totalorder %s24, %s40
    %p42 = scmp.eq.s32.totalorder %s16, 0
    %p43 = por %p41, %p42
    %s45 = sadd.s32 %s44, 1
    %p48 = scmp.eq.s32.totalorder %s10, 1
    %p49 = scmp.ne.s32.totalorder %s44, %s46
    %p50 = scmp.eq.s32.totalorder %s10, 0
    %p51 = por %p49, %p50
    %p52 = scmp.ne.s32.totalorder %s44, %s46
    %p53 = scmp.eq.s32.totalorder %s15, 1
    %p54 = por %p52, %p53
    %p55 = scmp.ne.s32.totalorder %s46, %s47
    %p56 = scmp.eq.s32.totalorder %s15, 0
    %p57 = por %p55, %p56
    %p58 = scmp.ne.s32.totalorder %s46, %s47
    %p59 = scmp.eq.s32.totalorder %s16, 1
    %p60 = por %p58, %p59
    %p62 = scmp.ne.s32.totalorder %s47, %s61
    %p63 = scmp.eq.s32.totalorder %s16, 0
    %p64 = por %p62, %p63
    %s66 = sadd.s32 %s65, 1
    %p69 = scmp.eq.s32.totalorder %s10, 1
    %p70 = scmp.ne.s32.totalorder %s65, %s67
    %p71 = scmp.eq.s32.totalorder %s10, 0
    %p72 = por %p70, %p71
    %p73 = scmp.ne.s32.totalorder %s65, %s67
    %p74 = scmp.eq.s32.totalorder %s15, 1
    %p75 = por %p73, %p74
    %p76 = scmp.ne.s32.totalorder %s67, %s68
    %p77 = scmp.eq.s32.totalorder %s15, 0
    %p78 = por %p76, %p77
    %p79 = scmp.ne.s32.totalorder %s67, %s68
    %p80 = scmp.eq.s32.totalorder %s16, 1
    %p81 = por %p79, %p80
    %p83 = scmp.ne.s32.totalorder %s68, %s82
    %p84 = scmp.eq.s32.totalorder %s16, 0
    %p85 = por %p83, %p84
    %s86 = ssub.s32 %s10, %s17
    %p87 = scmp.eq.s32.totalorder %s86, 0
    %s89 = sadd.s32 %s88, 1
    %s90 = scalar_select %p87, %s88, %s89
    %p93 = pneg %p87
    %p94 = scmp.eq.s32.totalorder %s10, 1
    %p95 = por %p93, %p94
    %p96 = scmp.ne.s32.totalorder %s88, %s91
    %p97 = scmp.eq.s32.totalorder %s10, 0
    %p98 = por %p96, %p97
    %p99 = scmp.ne.s32.totalorder %s88, %s91
    %p100 = scmp.eq.s32.totalorder %s15, 1
    %p101 = por %p99, %p100
    %p102 = scmp.ne.s32.totalorder %s91, %s92
    %p103 = scmp.eq.s32.totalorder %s15, 0
    %p104 = por %p102, %p103
    %p105 = scmp.ne.s32.totalorder %s91, %s92
    %p106 = scmp.eq.s32.totalorder %s16, 1
    %p107 = por %p105, %p106
    %p109 = scmp.ne.s32.totalorder %s92, %s108
    %p110 = scmp.eq.s32.totalorder %s16, 0
    %p111 = por %p109, %p110
    %s112 = ssub.s32 %s10, %s17
    %p113 = scmp.eq.s32.totalorder %s112, 0
    %s115 = sadd.s32 %s114, 1
    %s116 = scalar_select %p113, %s114, %s115
    %p119 = pneg %p113
    %p120 = scmp.eq.s32.totalorder %s10, 1
    %p121 = por %p119, %p120
    %p122 = scmp.ne.s32.totalorder %s114, %s117
    %p123 = scmp.eq.s32.totalorder %s10, 0
    %p124 = por %p122, %p123
    %p125 = scmp.ne.s32.totalorder %s114, %s117
    %p126 = scmp.eq.s32.totalorder %s15, 1
    %p127 = por %p125, %p126
    %p128 = scmp.ne.s32.totalorder %s117, %s118
    %p129 = scmp.eq.s32.totalorder %s15, 0
    %p130 = por %p128, %p129
    %p131 = scmp.ne.s32.totalorder %s117, %s118
    %p132 = scmp.eq.s32.totalorder %s16, 1
    %p133 = por %p131, %p132
    %p135 = scmp.ne.s32.totalorder %s118, %s134
    %p136 = scmp.eq.s32.totalorder %s16, 0
    %p137 = por %p135, %p136
    %p138 = scmp.le.s32.totalorder 1, %s10
    %p139 = scmp.lt.s32.totalorder %s10, 3
    %p140 = pnand %p138, %p139
    %p141 = pneg %p140
    // Predicated region
    $region9: #{bottleneck_forward.5} parent=5 // pred_check
      _
    $region10: #{bottleneck_forward.5} parent=5 // pred_check_branch
      %143 = sbr.rel (%p140) target = $region12
    $region11: #{bottleneck_forward.5} parent=5 // pred_region
      %s144 = ssub.s32 %s10, 1
      // Predicated region
      $region13: #{bottleneck_forward.5} parent=11 // pred_check
        %p145 = pneg %p57
      $region14: #{bottleneck_forward.5} parent=11 // pred_check_branch
        %147 = sbr.rel (%p145) target = $region16
      $region15: #{bottleneck_forward.5} parent=11 // pred_region
        _
      $region16: #{bottleneck_forward.5} parent=11 // pred_fallthru
        _
      // Predicated region
      $region17: #{bottleneck_forward.5} parent=11 // pred_check
        %p148 = pneg %p78
      $region18: #{bottleneck_forward.5} parent=11 // pred_check_branch
        %150 = sbr.rel (%p148) target = $region20
      $region19: #{bottleneck_forward.5} parent=11 // pred_region
        _
      $region20: #{bottleneck_forward.5} parent=11 // pred_fallthru
        _
    $region12: #{bottleneck_forward.5} parent=5 // pred_fallthru
      _
    %p151 = scmp.lt.s32.totalorder %s10, 2
    // Predicated region
    $region21: #{bottleneck_forward.5} parent=5 // pred_check
      %p152 = pneg %p151
    $region22: #{bottleneck_forward.5} parent=5 // pred_check_branch
      %154 = sbr.rel (%p152) target = $region24
    $region23: #{bottleneck_forward.5} parent=5 // pred_region
      // Predicated region
      $region25: #{bottleneck_forward.5} parent=23 // pred_check
        %p155 = pneg %p30
      $region26: #{bottleneck_forward.5} parent=23 // pred_check_branch
        %157 = sbr.rel (%p155) target = $region28
      $region27: #{bottleneck_forward.5} parent=23 // pred_region
        %s158 = smul.u32 32, %s10
        %p159 = scmp.lt.s32.totalorder %s158, 63
        %s160 = scalar_select %p159, %s158, 63
        %s161 = smul.addr %s160, 8
        %s162 = scalar_lea.vmem %s0, %s161
        %s163 = smul.u32 32, %s10
      $region28: #{bottleneck_forward.5} parent=23 // pred_fallthru
        _
      // Predicated region
      $region29: #{bottleneck_forward.5} parent=23 // pred_check
        %p164 = pneg %p98
      $region30: #{bottleneck_forward.5} parent=23 // pred_check_branch
        %166 = sbr.rel (%p164) target = $region32
      $region31: #{bottleneck_forward.5} parent=23 // pred_region
        %s167 = smul.u32 32, %s10
        %p168 = scmp.lt.s32.totalorder %s167, 63
        %s169 = scalar_select %p168, %s167, 63
        %s170 = smul.addr %s169, 8
        %s171 = scalar_lea.vmem %s3, %s170
        %s172 = smul.u32 32, %s10
      $region32: #{bottleneck_forward.5} parent=23 // pred_fallthru
        _
    $region24: #{bottleneck_forward.5} parent=5 // pred_fallthru
      _
    %p173 = scmp.le.s32.totalorder 1, %s10
    %p174 = scmp.lt.s32.totalorder %s10, 3
    %p175 = pnand %p173, %p174
    %p176 = pneg %p175
    // Predicated region
    $region33: #{bottleneck_forward.5} parent=5 // pred_check
      _
    $region34: #{bottleneck_forward.5} parent=5 // pred_check_branch
      %178 = sbr.rel (%p175) target = $region36
    $region35: #{bottleneck_forward.5} parent=5 // pred_region
      %s179 = ssub.s32 %s10, 1
      %s180 = smul.u32 32, %s15
      %p181 = scmp.lt.s32.totalorder %s180, 63
      %s182 = scalar_select %p181, %s180, 63
      %s183 = smul.addr %s182, 8
      %s184 = scalar_lea.vmem %s0, %s183
      %p185 = pneg %p36
      %p186 = pneg %p33
      %p187 = pneg %p57
      %p188 = pneg %p54
      %p189 = pneg %p78
      %p190 = pneg %p75
      %s191 = smul.u32 32, %s15
      %p192 = scmp.lt.s32.totalorder %s191, 63
      %s193 = scalar_select %p192, %s191, 63
      %s194 = smul.addr %s193, 8
      %s195 = scalar_lea.vmem %s3, %s194
      %p196 = pneg %p104
      %p197 = pneg %p101
      %p198 = pneg %p130
      %p199 = pneg %p127
      %s200 = smul.u32 32, %s15
      %p201 = scmp.lt.s32.totalorder %s200, 63
      %s202 = scalar_select %p201, %s200, 63
      %s203 = smul.addr %s202, 8
      %s204 = scalar_lea.vmem %s4, %s203
      %s205 = smul.u32 32, %s15
      %p206 = scmp.lt.s32.totalorder %s205, 63
      %s207 = scalar_select %p206, %s205, 63
      %s208 = smul.addr %s207, 8
      %s209 = scalar_lea.vmem %s0, %s208
      %s210 = smul.u32 32, %s15
      %s211 = smul.u32 32, %s15
      %p212 = scmp.lt.s32.totalorder %s211, 63
      %s213 = scalar_select %p212, %s211, 63
      %s214 = smul.addr %s213, 8
      %s215 = scalar_lea.vmem %s3, %s214
      %s216 = smul.u32 32, %s15
      %s217 = smul.u32 32, %s15
      %p218 = scmp.lt.s32.totalorder %s217, 63
      %s219 = scalar_select %p218, %s217, 63
      %s220 = smul.addr %s219, 8
      %s221 = scalar_lea.vmem %s4, %s220
      %s222 = smul.u32 32, %s15
      %v223 = vld [vmem:[%s209] sm:$0xff]
      %v224 = vld [vmem:[%s209 + $0x8] sm:$0xff]
      %v225 = vld [vmem:[%s209 + $0x10] sm:$0xff]
      %v226 = vld [vmem:[%s209 + $0x18] sm:$0xff]
      %v227 = vld [vmem:[%s209 + $0x20] sm:$0xff]
      %v228 = vld [vmem:[%s209 + $0x28] sm:$0xff]
      %v229 = vld [vmem:[%s209 + $0x30] sm:$0xff]
      %v230 = vld [vmem:[%s209 + $0x38] sm:$0xff]
      %v231 = vld [vmem:[%s209 + $0x40] sm:$0xff]
      %v232 = vld [vmem:[%s209 + $0x48] sm:$0xff]
      %v233 = vld [vmem:[%s209 + $0x50] sm:$0xff]
      %v234 = vld [vmem:[%s209 + $0x58] sm:$0xff]
      %v235 = vld [vmem:[%s209 + $0x60] sm:$0xff]
      %v236 = vld [vmem:[%s209 + $0x68] sm:$0xff]
      %v237 = vld [vmem:[%s209 + $0x70] sm:$0xff]
      %v238 = vld [vmem:[%s209 + $0x78] sm:$0xff]
      %v239 = vld [vmem:[%s209 + $0x80] sm:$0xff]
      %v240 = vld [vmem:[%s209 + $0x88] sm:$0xff]
      %v241 = vld [vmem:[%s209 + $0x90] sm:$0xff]
      %v242 = vld [vmem:[%s209 + $0x98] sm:$0xff]
      %v243 = vld [vmem:[%s209 + $0xa0] sm:$0xff]
      %v244 = vld [vmem:[%s209 + $0xa8] sm:$0xff]
      %v245 = vld [vmem:[%s209 + $0xb0] sm:$0xff]
      %v246 = vld [vmem:[%s209 + $0xb8] sm:$0xff]
      %v247 = vld [vmem:[%s209 + $0xc0] sm:$0xff]
      %v248 = vld [vmem:[%s209 + $0xc8] sm:$0xff]
      %v249 = vld [vmem:[%s209 + $0xd0] sm:$0xff]
      %v250 = vld [vmem:[%s209 + $0xd8] sm:$0xff]
      %v251 = vld [vmem:[%s209 + $0xe0] sm:$0xff]
      %v252 = vld [vmem:[%s209 + $0xe8] sm:$0xff]
      %v253 = vld [vmem:[%s209 + $0xf0] sm:$0xff]
      %v254 = vld [vmem:[%s209 + $0xf8] sm:$0xff]
      %v255 = vld [vmem:[%s1] sm:$0xf]
      %v256 = vld [vmem:[%s2] sm:$0x1]
      %v258 = vperm.slane %v256, 0
      %vm260 = vcmask 31744
      %v262 = vsel %vm260, %v223, 0
      %v265 = vsel %vm260, %v224, 0
      %v268 = vsel %vm260, %v225, 0
      %v271 = vsel %vm260, %v226, 0
      %v274 = vsel %vm260, %v227, 0
      %v277 = vsel %vm260, %v228, 0
      %v280 = vsel %vm260, %v229, 0
      %v283 = vsel %vm260, %v230, 0
      %v286 = vsel %vm260, %v231, 0
      %v289 = vsel %vm260, %v232, 0
      %v292 = vsel %vm260, %v233, 0
      %v295 = vsel %vm260, %v234, 0
      %v298 = vsel %vm260, %v235, 0
      %v301 = vsel %vm260, %v236, 0
      %v304 = vsel %vm260, %v237, 0
      %v307 = vsel %vm260, %v238, 0
      %v310 = vsel %vm260, %v239, 0
      %v313 = vsel %vm260, %v240, 0
      %v316 = vsel %vm260, %v241, 0
      %v319 = vsel %vm260, %v242, 0
      %v322 = vsel %vm260, %v243, 0
      %v325 = vsel %vm260, %v244, 0
      %v328 = vsel %vm260, %v245, 0
      %v331 = vsel %vm260, %v246, 0
      %v334 = vsel %vm260, %v247, 0
      %v337 = vsel %vm260, %v248, 0
      %v340 = vsel %vm260, %v249, 0
      %v343 = vsel %vm260, %v250, 0
      %v346 = vsel %vm260, %v251, 0
      %v349 = vsel %vm260, %v252, 0
      %v352 = vsel %vm260, %v253, 0
      %v355 = vsel %vm260, %v254, 0
      %vm357 = vcmask 1043456
      %v359 = vsel %vm357, %v255, 0
      %361 = vmatpush.msra.mxu0 0.0
      %362 = vmatpush.msra.mxu0 0.0
      %363 = vmatpush.msra.mxu0 0.0
      %364 = vmatpush.msra.mxu0 0.0
      %365 = vmatpush.msra.mxu0 0.0
      %366 = vmatpush.msra.mxu0 0.0
      %367 = vmatpush.msra.mxu0 0.0
      %368 = vmatpush.msra.mxu0 0.0
      %369 = vmatpush.msra.mxu0 0.0
      %370 = vmatpush.msra.mxu0 0.0
      %371 = vmatpush.msra.mxu0 0.0
      %372 = vmatpush.msra.mxu0 0.0
      %373 = vmatpush.msra.mxu0 0.0
      %374 = vmatpush.msra.mxu0 0.0
      %375 = vmatpush.msra.mxu0 0.0
      %376 = vmatpush.msra.mxu0 %v359
      %377 = vmatmul.f32.gmra.mxu0 %v262
      %v378 = vpop.f32.mrf.mxu0
      %v379 = vadd.f32 %v258, %v378
      %380 = vmatmul.f32.gmra.mxu0 %v265
      %v381 = vpop.f32.mrf.mxu0
      %v382 = vadd.f32 %v258, %v381
      %383 = vmatmul.f32.gmra.mxu0 %v268
      %v384 = vpop.f32.mrf.mxu0
      %v385 = vadd.f32 %v258, %v384
      %386 = vmatmul.f32.gmra.mxu0 %v271
      %v387 = vpop.f32.mrf.mxu0
      %v388 = vadd.f32 %v258, %v387
      %389 = vmatmul.f32.gmra.mxu0 %v274
      %v390 = vpop.f32.mrf.mxu0
      %v391 = vadd.f32 %v258, %v390
      %392 = vmatmul.f32.gmra.mxu0 %v277
      %v393 = vpop.f32.mrf.mxu0
      %v394 = vadd.f32 %v258, %v393
      %395 = vmatmul.f32.gmra.mxu0 %v280
      %v396 = vpop.f32.mrf.mxu0
      %v397 = vadd.f32 %v258, %v396
      %398 = vmatmul.f32.gmra.mxu0 %v283
      %v399 = vpop.f32.mrf.mxu0
      %v400 = vadd.f32 %v258, %v399
      %401 = vmatmul.f32.gmra.mxu0 %v286
      %v402 = vpop.f32.mrf.mxu0
      %v403 = vadd.f32 %v258, %v402
      %404 = vmatmul.f32.gmra.mxu0 %v289
      %v405 = vpop.f32.mrf.mxu0
      %v406 = vadd.f32 %v258, %v405
      %407 = vmatmul.f32.gmra.mxu0 %v292
      %v408 = vpop.f32.mrf.mxu0
      %v409 = vadd.f32 %v258, %v408
      %410 = vmatmul.f32.gmra.mxu0 %v295
      %v411 = vpop.f32.mrf.mxu0
      %v412 = vadd.f32 %v258, %v411
      %413 = vmatmul.f32.gmra.mxu0 %v298
      %v414 = vpop.f32.mrf.mxu0
      %v415 = vadd.f32 %v258, %v414
      %416 = vmatmul.f32.gmra.mxu0 %v301
      %v417 = vpop.f32.mrf.mxu0
      %v418 = vadd.f32 %v258, %v417
      %419 = vmatmul.f32.gmra.mxu0 %v304
      %v420 = vpop.f32.mrf.mxu0
      %v421 = vadd.f32 %v258, %v420
      %422 = vmatmul.f32.gmra.mxu0 %v307
      %v423 = vpop.f32.mrf.mxu0
      %v424 = vadd.f32 %v258, %v423
      %425 = vmatmul.f32.gmra.mxu0 %v310
      %v426 = vpop.f32.mrf.mxu0
      %v427 = vadd.f32 %v258, %v426
      %428 = vmatmul.f32.gmra.mxu0 %v313
      %v429 = vpop.f32.mrf.mxu0
      %v430 = vadd.f32 %v258, %v429
      %431 = vmatmul.f32.gmra.mxu0 %v316
      %v432 = vpop.f32.mrf.mxu0
      %v433 = vadd.f32 %v258, %v432
      %434 = vmatmul.f32.gmra.mxu0 %v319
      %v435 = vpop.f32.mrf.mxu0
      %v436 = vadd.f32 %v258, %v435
      %437 = vmatmul.f32.gmra.mxu0 %v322
      %v438 = vpop.f32.mrf.mxu0
      %v439 = vadd.f32 %v258, %v438
      %440 = vmatmul.f32.gmra.mxu0 %v325
      %v441 = vpop.f32.mrf.mxu0
      %v442 = vadd.f32 %v258, %v441
      %443 = vmatmul.f32.gmra.mxu0 %v328
      %v444 = vpop.f32.mrf.mxu0
      %v445 = vadd.f32 %v258, %v444
      %446 = vmatmul.f32.gmra.mxu0 %v331
      %v447 = vpop.f32.mrf.mxu0
      %v448 = vadd.f32 %v258, %v447
      %449 = vmatmul.f32.gmra.mxu0 %v334
      %v450 = vpop.f32.mrf.mxu0
      %v451 = vadd.f32 %v258, %v450
      %452 = vmatmul.f32.gmra.mxu0 %v337
      %v453 = vpop.f32.mrf.mxu0
      %v454 = vadd.f32 %v258, %v453
      %455 = vmatmul.f32.gmra.mxu0 %v340
      %v456 = vpop.f32.mrf.mxu0
      %v457 = vadd.f32 %v258, %v456
      %458 = vmatmul.f32.gmra.mxu0 %v343
      %v459 = vpop.f32.mrf.mxu0
      %v460 = vadd.f32 %v258, %v459
      %461 = vmatmul.f32.gmra.mxu0 %v346
      %v462 = vpop.f32.mrf.mxu0
      %v463 = vadd.f32 %v258, %v462
      %464 = vmatmul.f32.gmra.mxu0 %v349
      %v465 = vpop.f32.mrf.mxu0
      %v466 = vadd.f32 %v258, %v465
      %467 = vmatmul.f32.gmra.mxu0 %v352
      %v468 = vpop.f32.mrf.mxu0
      %v469 = vadd.f32 %v258, %v468
      %470 = vmatmul.f32.gmra.mxu0 %v355
      %v471 = vpop.f32.mrf.mxu0
      %v472 = vadd.f32 %v258, %v471
      %473 = vdwg.mxu0
      %v474 = vld [vmem:[%s215] sm:$0xff]
      %v475 = vld [vmem:[%s215 + $0x8] sm:$0xff]
      %v476 = vld [vmem:[%s215 + $0x10] sm:$0xff]
      %v477 = vld [vmem:[%s215 + $0x18] sm:$0xff]
      %v478 = vld [vmem:[%s215 + $0x20] sm:$0xff]
      %v479 = vld [vmem:[%s215 + $0x28] sm:$0xff]
      %v480 = vld [vmem:[%s215 + $0x30] sm:$0xff]
      %v481 = vld [vmem:[%s215 + $0x38] sm:$0xff]
      %v482 = vld [vmem:[%s215 + $0x40] sm:$0xff]
      %v483 = vld [vmem:[%s215 + $0x48] sm:$0xff]
      %v484 = vld [vmem:[%s215 + $0x50] sm:$0xff]
      %v485 = vld [vmem:[%s215 + $0x58] sm:$0xff]
      %v486 = vld [vmem:[%s215 + $0x60] sm:$0xff]
      %v487 = vld [vmem:[%s215 + $0x68] sm:$0xff]
      %v488 = vld [vmem:[%s215 + $0x70] sm:$0xff]
      %v489 = vld [vmem:[%s215 + $0x78] sm:$0xff]
      %v490 = vld [vmem:[%s215 + $0x80] sm:$0xff]
      %v491 = vld [vmem:[%s215 + $0x88] sm:$0xff]
      %v492 = vld [vmem:[%s215 + $0x90] sm:$0xff]
      %v493 = vld [vmem:[%s215 + $0x98] sm:$0xff]
      %v494 = vld [vmem:[%s215 + $0xa0] sm:$0xff]
      %v495 = vld [vmem:[%s215 + $0xa8] sm:$0xff]
      %v496 = vld [vmem:[%s215 + $0xb0] sm:$0xff]
      %v497 = vld [vmem:[%s215 + $0xb8] sm:$0xff]
      %v498 = vld [vmem:[%s215 + $0xc0] sm:$0xff]
      %v499 = vld [vmem:[%s215 + $0xc8] sm:$0xff]
      %v500 = vld [vmem:[%s215 + $0xd0] sm:$0xff]
      %v501 = vld [vmem:[%s215 + $0xd8] sm:$0xff]
      %v502 = vld [vmem:[%s215 + $0xe0] sm:$0xff]
      %v503 = vld [vmem:[%s215 + $0xe8] sm:$0xff]
      %v504 = vld [vmem:[%s215 + $0xf0] sm:$0xff]
      %v505 = vld [vmem:[%s215 + $0xf8] sm:$0xff]
      %v506 = vadd.f32 %v379, %v474
      %v507 = vadd.f32 %v382, %v475
      %v508 = vadd.f32 %v385, %v476
      %v509 = vadd.f32 %v388, %v477
      %v510 = vadd.f32 %v391, %v478
      %v511 = vadd.f32 %v394, %v479
      %v512 = vadd.f32 %v397, %v480
      %v513 = vadd.f32 %v400, %v481
      %v514 = vadd.f32 %v403, %v482
      %v515 = vadd.f32 %v406, %v483
      %v516 = vadd.f32 %v409, %v484
      %v517 = vadd.f32 %v412, %v485
      %v518 = vadd.f32 %v415, %v486
      %v519 = vadd.f32 %v418, %v487
      %v520 = vadd.f32 %v421, %v488
      %v521 = vadd.f32 %v424, %v489
      %v522 = vadd.f32 %v427, %v490
      %v523 = vadd.f32 %v430, %v491
      %v524 = vadd.f32 %v433, %v492
      %v525 = vadd.f32 %v436, %v493
      %v526 = vadd.f32 %v439, %v494
      %v527 = vadd.f32 %v442, %v495
      %v528 = vadd.f32 %v445, %v496
      %v529 = vadd.f32 %v448, %v497
      %v530 = vadd.f32 %v451, %v498
      %v531 = vadd.f32 %v454, %v499
      %v532 = vadd.f32 %v457, %v500
      %v533 = vadd.f32 %v460, %v501
      %v534 = vadd.f32 %v463, %v502
      %v535 = vadd.f32 %v466, %v503
      %v536 = vadd.f32 %v469, %v504
      %v537 = vadd.f32 %v472, %v505
      %v538 = vmax.f32 %v506, 0.0
      %v539 = vmax.f32 %v507, 0.0
      %v540 = vmax.f32 %v508, 0.0
      %v541 = vmax.f32 %v509, 0.0
      %v542 = vmax.f32 %v510, 0.0
      %v543 = vmax.f32 %v511, 0.0
      %v544 = vmax.f32 %v512, 0.0
      %v545 = vmax.f32 %v513, 0.0
      %v546 = vmax.f32 %v514, 0.0
      %v547 = vmax.f32 %v515, 0.0
      %v548 = vmax.f32 %v516, 0.0
      %v549 = vmax.f32 %v517, 0.0
      %v550 = vmax.f32 %v518, 0.0
      %v551 = vmax.f32 %v519, 0.0
      %v552 = vmax.f32 %v520, 0.0
      %v553 = vmax.f32 %v521, 0.0
      %v554 = vmax.f32 %v522, 0.0
      %v555 = vmax.f32 %v523, 0.0
      %v556 = vmax.f32 %v524, 0.0
      %v557 = vmax.f32 %v525, 0.0
      %v558 = vmax.f32 %v526, 0.0
      %v559 = vmax.f32 %v527, 0.0
      %v560 = vmax.f32 %v528, 0.0
      %v561 = vmax.f32 %v529, 0.0
      %v562 = vmax.f32 %v530, 0.0
      %v563 = vmax.f32 %v531, 0.0
      %v564 = vmax.f32 %v532, 0.0
      %v565 = vmax.f32 %v533, 0.0
      %v566 = vmax.f32 %v534, 0.0
      %v567 = vmax.f32 %v535, 0.0
      %v568 = vmax.f32 %v536, 0.0
      %v569 = vmax.f32 %v537, 0.0
      %vm570 = vcmask 130048
      %571 = vst.msk [vmem:[%s221] sm:$0xff] %vm570, %v538
      %572 = vst.msk [vmem:[%s221 + $0x8] sm:$0xff] %vm570, %v539
      %573 = vst.msk [vmem:[%s221 + $0x10] sm:$0xff] %vm570, %v540
      %574 = vst.msk [vmem:[%s221 + $0x18] sm:$0xff] %vm570, %v541
      %575 = vst.msk [vmem:[%s221 + $0x20] sm:$0xff] %vm570, %v542
      %576 = vst.msk [vmem:[%s221 + $0x28] sm:$0xff] %vm570, %v543
      %577 = vst.msk [vmem:[%s221 + $0x30] sm:$0xff] %vm570, %v544
      %578 = vst.msk [vmem:[%s221 + $0x38] sm:$0xff] %vm570, %v545
      %579 = vst.msk [vmem:[%s221 + $0x40] sm:$0xff] %vm570, %v546
      %580 = vst.msk [vmem:[%s221 + $0x48] sm:$0xff] %vm570, %v547
      %581 = vst.msk [vmem:[%s221 + $0x50] sm:$0xff] %vm570, %v548
      %582 = vst.msk [vmem:[%s221 + $0x58] sm:$0xff] %vm570, %v549
      %583 = vst.msk [vmem:[%s221 + $0x60] sm:$0xff] %vm570, %v550
      %584 = vst.msk [vmem:[%s221 + $0x68] sm:$0xff] %vm570, %v551
      %585 = vst.msk [vmem:[%s221 + $0x70] sm:$0xff] %vm570, %v552
      %586 = vst.msk [vmem:[%s221 + $0x78] sm:$0xff] %vm570, %v553
      %587 = vst.msk [vmem:[%s221 + $0x80] sm:$0xff] %vm570, %v554
      %588 = vst.msk [vmem:[%s221 + $0x88] sm:$0xff] %vm570, %v555
      %589 = vst.msk [vmem:[%s221 + $0x90] sm:$0xff] %vm570, %v556
      %590 = vst.msk [vmem:[%s221 + $0x98] sm:$0xff] %vm570, %v557
      %591 = vst.msk [vmem:[%s221 + $0xa0] sm:$0xff] %vm570, %v558
      %592 = vst.msk [vmem:[%s221 + $0xa8] sm:$0xff] %vm570, %v559
      %593 = vst.msk [vmem:[%s221 + $0xb0] sm:$0xff] %vm570, %v560
      %594 = vst.msk [vmem:[%s221 + $0xb8] sm:$0xff] %vm570, %v561
      %595 = vst.msk [vmem:[%s221 + $0xc0] sm:$0xff] %vm570, %v562
      %596 = vst.msk [vmem:[%s221 + $0xc8] sm:$0xff] %vm570, %v563
      %597 = vst.msk [vmem:[%s221 + $0xd0] sm:$0xff] %vm570, %v564
      %598 = vst.msk [vmem:[%s221 + $0xd8] sm:$0xff] %vm570, %v565
      %599 = vst.msk [vmem:[%s221 + $0xe0] sm:$0xff] %vm570, %v566
      %600 = vst.msk [vmem:[%s221 + $0xe8] sm:$0xff] %vm570, %v567
      %601 = vst.msk [vmem:[%s221 + $0xf0] sm:$0xff] %vm570, %v568
      %602 = vst.msk [vmem:[%s221 + $0xf8] sm:$0xff] %vm570, %v569
      %s603 = smul.u32 32, %s15
      %p604 = scmp.lt.s32.totalorder %s603, 63
      %s605 = scalar_select %p604, %s603, 63
      %s606 = smul.addr %s605, 8
      %s607 = scalar_lea.vmem %s4, %s606
      // Predicated region
      $region37: #{bottleneck_forward.5} parent=35 // pred_check
        %p608 = pneg %p127
      $region38: #{bottleneck_forward.5} parent=35 // pred_check_branch
        %610 = sbr.rel (%p608) target = $region40
      $region39: #{bottleneck_forward.5} parent=35 // pred_region
        %s611 = smul.u32 32, %s15
      $region40: #{bottleneck_forward.5} parent=35 // pred_fallthru
        _
    $region36: #{bottleneck_forward.5} parent=5 // pred_fallthru
      _
    %p612 = scmp.le.s32.totalorder 2, %s10
    // Predicated region
    $region41: #{bottleneck_forward.5} parent=5 // pred_check
      %p613 = pneg %p612
    $region42: #{bottleneck_forward.5} parent=5 // pred_check_branch
      %615 = sbr.rel (%p613) target = $region44
    $region43: #{bottleneck_forward.5} parent=5 // pred_region
      %s616 = ssub.s32 %s10, 2
      // Predicated region
      $region45: #{bottleneck_forward.5} parent=43 // pred_check
        %p617 = pneg %p133
      $region46: #{bottleneck_forward.5} parent=43 // pred_check_branch
        %619 = sbr.rel (%p617) target = $region48
      $region47: #{bottleneck_forward.5} parent=43 // pred_region
        %s620 = smul.u32 32, %s16
        %p621 = scmp.lt.s32.totalorder %s620, 63
        %s622 = scalar_select %p621, %s620, 63
        %s623 = smul.addr %s622, 8
        %s624 = scalar_lea.vmem %s4, %s623
      $region48: #{bottleneck_forward.5} parent=43 // pred_fallthru
        _
    $region44: #{bottleneck_forward.5} parent=5 // pred_fallthru
      _
  $region6: #{bottleneck_forward.5} parent=0 // loop_footer
    %s14 = sadd.s32 1, %s10
  $region7: #{bottleneck_forward.5} parent=0 // loop_footer_branch
    %9 = sbr.rel target = $region3
  $region8: #{bottleneck_forward.5} parent=0 // loop_exit
    _

// kernel: bottleneck_forward.4
$region0: #{bottleneck_forward.4}
  #allocation0 [shape = 'u32[]', space=smem, size = 0x4, offset = 0x4, fixed_abs, tag = 'smem constant byte address 0x4 - core index']
  #allocation1 [shape = 'u32[72,128]{1,0:T(1,128)}', space=vmem, size = 0x9000, scoped, tag = 'internal scratch']
  %s0 = inlined_call_operand.vmem [shape: f32[2,484,4], index: 0, kind: input, shape index: {}]
  %s1 = inlined_call_operand.vmem [shape: f32[9,4,4], index: 1, kind: input, shape index: {}]
  %s2 = inlined_call_operand.vmem [shape: f32[1,4], index: 2, kind: input, shape index: {}]
  %s3 = inlined_call_operand.vmem [shape: f32[2,400,4], index: 3, kind: output, shape index: {}]
  %s4 = sld [smem:[#allocation0]]
  $region45: #{bottleneck_forward.4} parent=0
    _
  %s6 = ssub.s32 1, %s4
  %s7 = scalar_select 0, %s6, %s4
  loop: start=0, step=1, limit=4
  $region2: #{bottleneck_forward.4} parent=0 // loop_pre_header
    _
  $region3: #{bottleneck_forward.4} parent=0 // loop_header
    %s9 = sphi 0, %s13
    %p10 = scmp.ge.s32.totalorder %s9, 4
    %s19 = sphi 0, %s21
    %s22 = sphi 0, %s19
    %s23 = sphi 0, %s22
    %s39 = sphi 0, %s23
    %s43 = sphi 0, %s43
    %s45 = sphi 0, %s43
    %s46 = sphi 0, %s45
    %s60 = sphi 0, %s46
    %s64 = sphi 0, %s64
    %s66 = sphi 0, %s64
    %s67 = sphi 0, %s66
    %s81 = sphi 0, %s67
    %s87 = sphi 0, %s89
    %s90 = sphi 0, %s87
    %s91 = sphi 0, %s90
    %s107 = sphi 0, %s91
  $region4: #{bottleneck_forward.4} parent=0 // loop_header_branch
    %12 = sbr.rel (%p10) target = $region8
  $region5: #{bottleneck_forward.4} parent=0 // loop_body
    %s14 = ssub.s32 %s9, 1
    %s15 = ssub.s32 %s9, 2
    %s16 = sadd.s32 %s9, 1
    %s17 = ssub.s32 %s9, %s16
    %p18 = scmp.eq.s32.totalorder %s17, 0
    %s20 = sadd.s32 %s19, 1
    %s21 = scalar_select %p18, %s19, %s20
    %p24 = pneg %p18
    %p25 = scmp.eq.s32.totalorder %s9, 1
    %p26 = por %p24, %p25
    %p27 = scmp.ne.s32.totalorder %s19, %s22
    %p28 = scmp.eq.s32.totalorder %s9, 0
    %p29 = por %p27, %p28
    %p30 = scmp.ne.s32.totalorder %s19, %s22
    %p31 = scmp.eq.s32.totalorder %s14, 1
    %p32 = por %p30, %p31
    %p33 = scmp.ne.s32.totalorder %s22, %s23
    %p34 = scmp.eq.s32.totalorder %s14, 0
    %p35 = por %p33, %p34
    %p36 = scmp.ne.s32.totalorder %s22, %s23
    %p37 = scmp.eq.s32.totalorder %s15, 1
    %p38 = por %p36, %p37
    %p40 = scmp.ne.s32.totalorder %s23, %s39
    %p41 = scmp.eq.s32.totalorder %s15, 0
    %p42 = por %p40, %p41
    %s44 = sadd.s32 %s43, 1
    %p47 = scmp.eq.s32.totalorder %s9, 1
    %p48 = scmp.ne.s32.totalorder %s43, %s45
    %p49 = scmp.eq.s32.totalorder %s9, 0
    %p50 = por %p48, %p49
    %p51 = scmp.ne.s32.totalorder %s43, %s45
    %p52 = scmp.eq.s32.totalorder %s14, 1
    %p53 = por %p51, %p52
    %p54 = scmp.ne.s32.totalorder %s45, %s46
    %p55 = scmp.eq.s32.totalorder %s14, 0
    %p56 = por %p54, %p55
    %p57 = scmp.ne.s32.totalorder %s45, %s46
    %p58 = scmp.eq.s32.totalorder %s15, 1
    %p59 = por %p57, %p58
    %p61 = scmp.ne.s32.totalorder %s46, %s60
    %p62 = scmp.eq.s32.totalorder %s15, 0
    %p63 = por %p61, %p62
    %s65 = sadd.s32 %s64, 1
    %p68 = scmp.eq.s32.totalorder %s9, 1
    %p69 = scmp.ne.s32.totalorder %s64, %s66
    %p70 = scmp.eq.s32.totalorder %s9, 0
    %p71 = por %p69, %p70
    %p72 = scmp.ne.s32.totalorder %s64, %s66
    %p73 = scmp.eq.s32.totalorder %s14, 1
    %p74 = por %p72, %p73
    %p75 = scmp.ne.s32.totalorder %s66, %s67
    %p76 = scmp.eq.s32.totalorder %s14, 0
    %p77 = por %p75, %p76
    %p78 = scmp.ne.s32.totalorder %s66, %s67
    %p79 = scmp.eq.s32.totalorder %s15, 1
    %p80 = por %p78, %p79
    %p82 = scmp.ne.s32.totalorder %s67, %s81
    %p83 = scmp.eq.s32.totalorder %s15, 0
    %p84 = por %p82, %p83
    %s85 = ssub.s32 %s9, %s16
    %p86 = scmp.eq.s32.totalorder %s85, 0
    %s88 = sadd.s32 %s87, 1
    %s89 = scalar_select %p86, %s87, %s88
    %p92 = pneg %p86
    %p93 = scmp.eq.s32.totalorder %s9, 1
    %p94 = por %p92, %p93
    %p95 = scmp.ne.s32.totalorder %s87, %s90
    %p96 = scmp.eq.s32.totalorder %s9, 0
    %p97 = por %p95, %p96
    %p98 = scmp.ne.s32.totalorder %s87, %s90
    %p99 = scmp.eq.s32.totalorder %s14, 1
    %p100 = por %p98, %p99
    %p101 = scmp.ne.s32.totalorder %s90, %s91
    %p102 = scmp.eq.s32.totalorder %s14, 0
    %p103 = por %p101, %p102
    %p104 = scmp.ne.s32.totalorder %s90, %s91
    %p105 = scmp.eq.s32.totalorder %s15, 1
    %p106 = por %p104, %p105
    %p108 = scmp.ne.s32.totalorder %s91, %s107
    %p109 = scmp.eq.s32.totalorder %s15, 0
    %p110 = por %p108, %p109
    %p111 = scmp.le.s32.totalorder 1, %s9
    %p112 = scmp.lt.s32.totalorder %s9, 3
    %p113 = pnand %p111, %p112
    %p114 = pneg %p113
    // Predicated region
    $region9: #{bottleneck_forward.4} parent=5 // pred_check
      _
    $region10: #{bottleneck_forward.4} parent=5 // pred_check_branch
      %116 = sbr.rel (%p113) target = $region12
    $region11: #{bottleneck_forward.4} parent=5 // pred_region
      %s117 = ssub.s32 %s9, 1
      // Predicated region
      $region13: #{bottleneck_forward.4} parent=11 // pred_check
        %p118 = pneg %p56
      $region14: #{bottleneck_forward.4} parent=11 // pred_check_branch
        %120 = sbr.rel (%p118) target = $region16
      $region15: #{bottleneck_forward.4} parent=11 // pred_region
        _
      $region16: #{bottleneck_forward.4} parent=11 // pred_fallthru
        _
      // Predicated region
      $region17: #{bottleneck_forward.4} parent=11 // pred_check
        %p121 = pneg %p77
      $region18: #{bottleneck_forward.4} parent=11 // pred_check_branch
        %123 = sbr.rel (%p121) target = $region20
      $region19: #{bottleneck_forward.4} parent=11 // pred_region
        _
      $region20: #{bottleneck_forward.4} parent=11 // pred_fallthru
        _
    $region12: #{bottleneck_forward.4} parent=5 // pred_fallthru
      _
    %p124 = scmp.lt.s32.totalorder %s9, 2
    // Predicated region
    $region21: #{bottleneck_forward.4} parent=5 // pred_check
      %p125 = pneg %p124
    $region22: #{bottleneck_forward.4} parent=5 // pred_check_branch
      %127 = sbr.rel (%p125) target = $region24
    $region23: #{bottleneck_forward.4} parent=5 // pred_region
      // Predicated region
      $region25: #{bottleneck_forward.4} parent=23 // pred_check
        %p128 = pneg %p29
      $region26: #{bottleneck_forward.4} parent=23 // pred_check_branch
        %130 = sbr.rel (%p128) target = $region28
      $region27: #{bottleneck_forward.4} parent=23 // pred_region
        %p131 = scmp.lt.s32.totalorder %s9, 1
        %s132 = scalar_select %p131, %s9, 1
        %s133 = smul.addr %s132, 61
        %s134 = smul.addr %s133, 8
        %s135 = scalar_lea.vmem %s0, %s134
      $region28: #{bottleneck_forward.4} parent=23 // pred_fallthru
        _
    $region24: #{bottleneck_forward.4} parent=5 // pred_fallthru
      _
    %p136 = scmp.le.s32.totalorder 1, %s9
    %p137 = scmp.lt.s32.totalorder %s9, 3
    %p138 = pnand %p136, %p137
    %p139 = pneg %p138
    // Predicated region
    $region29: #{bottleneck_forward.4} parent=5 // pred_check
      _
    $region30: #{bottleneck_forward.4} parent=5 // pred_check_branch
      %141 = sbr.rel (%p138) target = $region32
    $region31: #{bottleneck_forward.4} parent=5 // pred_region
      %s142 = ssub.s32 %s9, 1
      %p143 = scmp.lt.s32.totalorder %s14, 1
      %s144 = scalar_select %p143, %s14, 1
      %s145 = smul.addr %s144, 61
      %s146 = smul.addr %s145, 8
      %s147 = scalar_lea.vmem %s0, %s146
      %p148 = pneg %p35
      %p149 = pneg %p32
      %p150 = pneg %p56
      %p151 = pneg %p53
      %p152 = pneg %p77
      %p153 = pneg %p74
      %p154 = pneg %p103
      %p155 = pneg %p100
      %p156 = scmp.lt.s32.totalorder %s14, 1
      %s157 = scalar_select %p156, %s14, 1
      %s158 = smul.addr %s157, 50
      %s159 = smul.addr %s158, 8
      %s160 = scalar_lea.vmem %s3, %s159
      %p161 = scmp.lt.s32.totalorder %s14, 1
      %s162 = scalar_select %p161, %s14, 1
      %s163 = smul.addr %s162, 61
      %s164 = smul.addr %s163, 8
      %s165 = scalar_lea.vmem %s0, %s164
      %p166 = scmp.lt.s32.totalorder %s14, 1
      %s167 = scalar_select %p166, %s14, 1
      %s168 = smul.addr %s167, 50
      %s169 = smul.addr %s168, 8
      %s170 = scalar_lea.vmem %s3, %s169
      %v171 = vld [vmem:[%s165] sm:$0xff]
      %v172 = vld [vmem:[%s165 + $0x8] sm:$0xff]
      %v173 = vld [vmem:[%s165 + $0x10] sm:$0xff]
      %v174 = vld [vmem:[%s165 + $0x18] sm:$0xff]
      %v175 = vld [vmem:[%s165 + $0x20] sm:$0xff]
      %v176 = vld [vmem:[%s165 + $0x28] sm:$0xff]
      %v177 = vld [vmem:[%s165 + $0x30] sm:$0xff]
      %v178 = vld [vmem:[%s165 + $0x38] sm:$0xff]
      %v179 = vld [vmem:[%s165 + $0x40] sm:$0xff]
      %v180 = vld [vmem:[%s165 + $0x48] sm:$0xff]
      %v181 = vld [vmem:[%s165 + $0x50] sm:$0xff]
      %v182 = vld [vmem:[%s165 + $0x58] sm:$0xff]
      %v183 = vld [vmem:[%s165 + $0x60] sm:$0xff]
      %v184 = vld [vmem:[%s165 + $0x68] sm:$0xff]
      %v185 = vld [vmem:[%s165 + $0x70] sm:$0xff]
      %v186 = vld [vmem:[%s165 + $0x78] sm:$0xff]
      %v187 = vld [vmem:[%s165 + $0x80] sm:$0xff]
      %v188 = vld [vmem:[%s165 + $0x88] sm:$0xff]
      %v189 = vld [vmem:[%s165 + $0x90] sm:$0xff]
      %v190 = vld [vmem:[%s165 + $0x98] sm:$0xff]
      %v191 = vld [vmem:[%s165 + $0xa0] sm:$0xff]
      %v192 = vld [vmem:[%s165 + $0xa8] sm:$0xff]
      %v193 = vld [vmem:[%s165 + $0xb0] sm:$0xff]
      %v194 = vld [vmem:[%s165 + $0xb8] sm:$0xff]
      %v195 = vld [vmem:[%s165 + $0xc0] sm:$0xff]
      %v196 = vld [vmem:[%s165 + $0xc8] sm:$0xff]
      %v197 = vld [vmem:[%s165 + $0xd0] sm:$0xff]
      %v198 = vld [vmem:[%s165 + $0xd8] sm:$0xff]
      %v199 = vld [vmem:[%s165 + $0xe0] sm:$0xff]
      %v200 = vld [vmem:[%s165 + $0xe8] sm:$0xff]
      %v201 = vld [vmem:[%s165 + $0xf0] sm:$0xff]
      %v202 = vld [vmem:[%s165 + $0xf8] sm:$0xff]
      %v203 = vld [vmem:[%s165 + $0x100] sm:$0xff]
      %v204 = vld [vmem:[%s165 + $0x108] sm:$0xff]
      %v205 = vld [vmem:[%s165 + $0x110] sm:$0xff]
      %v206 = vld [vmem:[%s165 + $0x118] sm:$0xff]
      %v207 = vld [vmem:[%s165 + $0x120] sm:$0xff]
      %v208 = vld [vmem:[%s165 + $0x128] sm:$0xff]
      %v209 = vld [vmem:[%s165 + $0x130] sm:$0xff]
      %v210 = vld [vmem:[%s165 + $0x138] sm:$0xff]
      %v211 = vld [vmem:[%s165 + $0x140] sm:$0xff]
      %v212 = vld [vmem:[%s165 + $0x148] sm:$0xff]
      %v213 = vld [vmem:[%s165 + $0x150] sm:$0xff]
      %v214 = vld [vmem:[%s165 + $0x158] sm:$0xff]
      %v215 = vld [vmem:[%s165 + $0x160] sm:$0xff]
      %v216 = vld [vmem:[%s165 + $0x168] sm:$0xff]
      %v217 = vld [vmem:[%s165 + $0x170] sm:$0xff]
      %v218 = vld [vmem:[%s165 + $0x178] sm:$0xff]
      %v219 = vld [vmem:[%s165 + $0x180] sm:$0xff]
      %v220 = vld [vmem:[%s165 + $0x188] sm:$0xff]
      %v221 = vld [vmem:[%s1] sm:$0xf]
      %v222 = vld [vmem:[%s165 + $0x2] sm:$0xff]
      %v223 = vld [vmem:[%s165 + $0xa] sm:$0xff]
      %v224 = vld [vmem:[%s165 + $0x12] sm:$0xff]
      %v225 = vld [vmem:[%s165 + $0x1a] sm:$0xff]
      %v226 = vld [vmem:[%s165 + $0x22] sm:$0xff]
      %v227 = vld [vmem:[%s165 + $0x2a] sm:$0xff]
      %v228 = vld [vmem:[%s165 + $0x32] sm:$0xff]
      %v229 = vld [vmem:[%s165 + $0x3a] sm:$0xff]
      %v230 = vld [vmem:[%s165 + $0x42] sm:$0xff]
      %v231 = vld [vmem:[%s165 + $0x4a] sm:$0xff]
      %v232 = vld [vmem:[%s165 + $0x52] sm:$0xff]
      %v233 = vld [vmem:[%s165 + $0x5a] sm:$0xff]
      %v234 = vld [vmem:[%s165 + $0x62] sm:$0xff]
      %v235 = vld [vmem:[%s165 + $0x6a] sm:$0xff]
      %v236 = vld [vmem:[%s165 + $0x72] sm:$0xff]
      %v237 = vld [vmem:[%s165 + $0x7a] sm:$0xff]
      %v238 = vld [vmem:[%s165 + $0x82] sm:$0xff]
      %v239 = vld [vmem:[%s165 + $0x8a] sm:$0xff]
      %v240 = vld [vmem:[%s165 + $0x92] sm:$0xff]
      %v241 = vld [vmem:[%s165 + $0x9a] sm:$0xff]
      %v242 = vld [vmem:[%s165 + $0xa2] sm:$0xff]
      %v243 = vld [vmem:[%s165 + $0xaa] sm:$0xff]
      %v244 = vld [vmem:[%s165 + $0xb2] sm:$0xff]
      %v245 = vld [vmem:[%s165 + $0xba] sm:$0xff]
      %v246 = vld [vmem:[%s165 + $0xc2] sm:$0xff]
      %v247 = vld [vmem:[%s165 + $0xca] sm:$0xff]
      %v248 = vld [vmem:[%s165 + $0xd2] sm:$0xff]
      %v249 = vld [vmem:[%s165 + $0xda] sm:$0xff]
      %v250 = vld [vmem:[%s165 + $0xe2] sm:$0xff]
      %v251 = vld [vmem:[%s165 + $0xea] sm:$0xff]
      %v252 = vld [vmem:[%s165 + $0xf2] sm:$0xff]
      %v253 = vld [vmem:[%s165 + $0xfa] sm:$0xff]
      %v254 = vld [vmem:[%s165 + $0x102] sm:$0xff]
      %v255 = vld [vmem:[%s165 + $0x10a] sm:$0xff]
      %v256 = vld [vmem:[%s165 + $0x112] sm:$0xff]
      %v257 = vld [vmem:[%s165 + $0x11a] sm:$0xff]
      %v258 = vld [vmem:[%s165 + $0x122] sm:$0xff]
      %v259 = vld [vmem:[%s165 + $0x12a] sm:$0xff]
      %v260 = vld [vmem:[%s165 + $0x132] sm:$0xff]
      %v261 = vld [vmem:[%s165 + $0x13a] sm:$0xff]
      %v262 = vld [vmem:[%s165 + $0x142] sm:$0xff]
      %v263 = vld [vmem:[%s165 + $0x14a] sm:$0xff]
      %v264 = vld [vmem:[%s165 + $0x152] sm:$0xff]
      %v265 = vld [vmem:[%s165 + $0x15a] sm:$0xff]
      %v266 = vld [vmem:[%s165 + $0x162] sm:$0xff]
      %v267 = vld [vmem:[%s165 + $0x16a] sm:$0xff]
      %v268 = vld [vmem:[%s165 + $0x172] sm:$0xff]
      %v269 = vld [vmem:[%s165 + $0x17a] sm:$0xff]
      %v270 = vld [vmem:[%s165 + $0x182] sm:$0xff]
      %v271 = vld [vmem:[%s165 + $0x18a] sm:$0xff]
      %s272 = scalar_lea.vmem %s1, 4
      %v273 = vld [vmem:[%s272] sm:$0xf]
      %vm274 = vcmask 31744
      %v276 = vsel %vm274, %v222, 0
      %v279 = vsel %vm274, %v223, 0
      %v282 = vsel %vm274, %v224, 0
      %v285 = vsel %vm274, %v225, 0
      %v288 = vsel %vm274, %v226, 0
      %v291 = vsel %vm274, %v227, 0
      %v294 = vsel %vm274, %v228, 0
      %v297 = vsel %vm274, %v229, 0
      %v300 = vsel %vm274, %v230, 0
      %v303 = vsel %vm274, %v231, 0
      %v306 = vsel %vm274, %v232, 0
      %v309 = vsel %vm274, %v233, 0
      %v312 = vsel %vm274, %v234, 0
      %v315 = vsel %vm274, %v235, 0
      %v318 = vsel %vm274, %v236, 0
      %v321 = vsel %vm274, %v237, 0
      %v324 = vsel %vm274, %v238, 0
      %v327 = vsel %vm274, %v239, 0
      %v330 = vsel %vm274, %v240, 0
      %v333 = vsel %vm274, %v241, 0
      %v336 = vsel %vm274, %v242, 0
      %v339 = vsel %vm274, %v243, 0
      %v342 = vsel %vm274, %v244, 0
      %v345 = vsel %vm274, %v245, 0
      %v348 = vsel %vm274, %v246, 0
      %v351 = vsel %vm274, %v247, 0
      %v354 = vsel %vm274, %v248, 0
      %v357 = vsel %vm274, %v249, 0
      %v360 = vsel %vm274, %v250, 0
      %v363 = vsel %vm274, %v251, 0
      %v366 = vsel %vm274, %v252, 0
      %v369 = vsel %vm274, %v253, 0
      %v372 = vsel %vm274, %v254, 0
      %v375 = vsel %vm274, %v255, 0
      %v378 = vsel %vm274, %v256, 0
      %v381 = vsel %vm274, %v257, 0
      %v384 = vsel %vm274, %v258, 0
      %v387 = vsel %vm274, %v259, 0
      %v390 = vsel %vm274, %v260, 0
      %v393 = vsel %vm274, %v261, 0
      %v396 = vsel %vm274, %v262, 0
      %v399 = vsel %vm274, %v263, 0
      %v402 = vsel %vm274, %v264, 0
      %v405 = vsel %vm274, %v265, 0
      %v408 = vsel %vm274, %v266, 0
      %v411 = vsel %vm274, %v267, 0
      %v414 = vsel %vm274, %v268, 0
      %v417 = vsel %vm274, %v269, 0
      %v420 = vsel %vm274, %v270, 0
      %v423 = vsel %vm274, %v271, 0
      %vm425 = vcmask 1043456
      %v427 = vsel %vm425, %v273, 0
      %429 = vmatpush.msra.mxu0 0.0
      %430 = vmatpush.msra.mxu0 0.0
      %431 = vmatpush.msra.mxu0 0.0
      %432 = vmatpush.msra.mxu0 0.0
      %433 = vmatpush.msra.mxu0 0.0
      %434 = vmatpush.msra.mxu0 0.0
      %435 = vmatpush.msra.mxu0 0.0
      %436 = vmatpush.msra.mxu0 0.0
      %437 = vmatpush.msra.mxu0 0.0
      %438 = vmatpush.msra.mxu0 0.0
      %439 = vmatpush.msra.mxu0 0.0
      %440 = vmatpush.msra.mxu0 0.0
      %441 = vmatpush.msra.mxu0 0.0
      %442 = vmatpush.msra.mxu0 0.0
      %443 = vmatpush.msra.mxu0 0.0
      %444 = vmatpush.msra.mxu0 %v427
      %445 = vmatmul.f32.gmra.mxu0 %v276
      %v446 = vpop.f32.mrf.mxu0
      %v447 = vadd.f32 0.0, %v446
      %448 = vmatmul.f32.gmra.mxu0 %v279
      %v449 = vpop.f32.mrf.mxu0
      %v450 = vadd.f32 0.0, %v449
      %451 = vmatmul.f32.gmra.mxu0 %v282
      %v452 = vpop.f32.mrf.mxu0
      %v453 = vadd.f32 0.0, %v452
      %454 = vmatmul.f32.gmra.mxu0 %v285
      %v455 = vpop.f32.mrf.mxu0
      %v456 = vadd.f32 0.0, %v455
      %457 = vmatmul.f32.gmra.mxu0 %v288
      %v458 = vpop.f32.mrf.mxu0
      %v459 = vadd.f32 0.0, %v458
      %460 = vmatmul.f32.gmra.mxu0 %v291
      %v461 = vpop.f32.mrf.mxu0
      %v462 = vadd.f32 0.0, %v461
      %463 = vmatmul.f32.gmra.mxu0 %v294
      %v464 = vpop.f32.mrf.mxu0
      %v465 = vadd.f32 0.0, %v464
      %466 = vmatmul.f32.gmra.mxu0 %v297
      %v467 = vpop.f32.mrf.mxu0
      %v468 = vadd.f32 0.0, %v467
      %469 = vmatmul.f32.gmra.mxu0 %v300
      %v470 = vpop.f32.mrf.mxu0
      %v471 = vadd.f32 0.0, %v470
      %472 = vmatmul.f32.gmra.mxu0 %v303
      %v473 = vpop.f32.mrf.mxu0
      %v474 = vadd.f32 0.0, %v473
      %475 = vmatmul.f32.gmra.mxu0 %v306
      %v476 = vpop.f32.mrf.mxu0
      %v477 = vadd.f32 0.0, %v476
      %478 = vmatmul.f32.gmra.mxu0 %v309
      %v479 = vpop.f32.mrf.mxu0
      %v480 = vadd.f32 0.0, %v479
      %481 = vmatmul.f32.gmra.mxu0 %v312
      %v482 = vpop.f32.mrf.mxu0
      %v483 = vadd.f32 0.0, %v482
      %484 = vmatmul.f32.gmra.mxu0 %v315
      %v485 = vpop.f32.mrf.mxu0
      %v486 = vadd.f32 0.0, %v485
      %487 = vmatmul.f32.gmra.mxu0 %v318
      %v488 = vpop.f32.mrf.mxu0
      %v489 = vadd.f32 0.0, %v488
      %490 = vmatmul.f32.gmra.mxu0 %v321
      %v491 = vpop.f32.mrf.mxu0
      %v492 = vadd.f32 0.0, %v491
      %493 = vmatmul.f32.gmra.mxu0 %v324
      %v494 = vpop.f32.mrf.mxu0
      %v495 = vadd.f32 0.0, %v494
      %496 = vmatmul.f32.gmra.mxu0 %v327
      %v497 = vpop.f32.mrf.mxu0
      %v498 = vadd.f32 0.0, %v497
      %499 = vmatmul.f32.gmra.mxu0 %v330
      %v500 = vpop.f32.mrf.mxu0
      %v501 = vadd.f32 0.0, %v500
      %502 = vmatmul.f32.gmra.mxu0 %v333
      %v503 = vpop.f32.mrf.mxu0
      %v504 = vadd.f32 0.0, %v503
      %505 = vmatmul.f32.gmra.mxu0 %v336
      %v506 = vpop.f32.mrf.mxu0
      %v507 = vadd.f32 0.0, %v506
      %508 = vmatmul.f32.gmra.mxu0 %v339
      %v509 = vpop.f32.mrf.mxu0
      %v510 = vadd.f32 0.0, %v509
      %511 = vmatmul.f32.gmra.mxu0 %v342
      %v512 = vpop.f32.mrf.mxu0
      %v513 = vadd.f32 0.0, %v512
      %514 = vmatmul.f32.gmra.mxu0 %v345
      %v515 = vpop.f32.mrf.mxu0
      %v516 = vadd.f32 0.0, %v515
      %517 = vmatmul.f32.gmra.mxu0 %v348
      %v518 = vpop.f32.mrf.mxu0
      %v519 = vadd.f32 0.0, %v518
      %520 = vmatmul.f32.gmra.mxu0 %v351
      %v521 = vpop.f32.mrf.mxu0
      %v522 = vadd.f32 0.0, %v521
      %523 = vmatmul.f32.gmra.mxu0 %v354
      %v524 = vpop.f32.mrf.mxu0
      %v525 = vadd.f32 0.0, %v524
      %526 = vmatmul.f32.gmra.mxu0 %v357
      %v527 = vpop.f32.mrf.mxu0
      %v528 = vadd.f32 0.0, %v527
      %529 = vmatmul.f32.gmra.mxu0 %v360
      %v530 = vpop.f32.mrf.mxu0
      %v531 = vadd.f32 0.0, %v530
      %532 = vmatmul.f32.gmra.mxu0 %v363
      %v533 = vpop.f32.mrf.mxu0
      %v534 = vadd.f32 0.0, %v533
      %535 = vmatmul.f32.gmra.mxu0 %v366
      %v536 = vpop.f32.mrf.mxu0
      %v537 = vadd.f32 0.0, %v536
      %538 = vmatmul.f32.gmra.mxu0 %v369
      %v539 = vpop.f32.mrf.mxu0
      %v540 = vadd.f32 0.0, %v539
      %541 = vmatmul.f32.gmra.mxu0 %v372
      %v542 = vpop.f32.mrf.mxu0
      %v543 = vadd.f32 0.0, %v542
      %544 = vmatmul.f32.gmra.mxu0 %v375
      %v545 = vpop.f32.mrf.mxu0
      %v546 = vadd.f32 0.0, %v545
      %547 = vmatmul.f32.gmra.mxu0 %v378
      %v548 = vpop.f32.mrf.mxu0
      %v549 = vadd.f32 0.0, %v548
      %550 = vmatmul.f32.gmra.mxu0 %v381
      %v551 = vpop.f32.mrf.mxu0
      %v552 = vadd.f32 0.0, %v551
      %553 = vmatmul.f32.gmra.mxu0 %v384
      %v554 = vpop.f32.mrf.mxu0
      %v555 = vadd.f32 0.0, %v554
      %556 = vmatmul.f32.gmra.mxu0 %v387
      %v557 = vpop.f32.mrf.mxu0
      %v558 = vadd.f32 0.0, %v557
      %559 = vmatmul.f32.gmra.mxu0 %v390
      %v560 = vpop.f32.mrf.mxu0
      %v561 = vadd.f32 0.0, %v560
      %562 = vmatmul.f32.gmra.mxu0 %v393
      %v563 = vpop.f32.mrf.mxu0
      %v564 = vadd.f32 0.0, %v563
      %565 = vmatmul.f32.gmra.mxu0 %v396
      %v566 = vpop.f32.mrf.mxu0
      %v567 = vadd.f32 0.0, %v566
      %568 = vmatmul.f32.gmra.mxu0 %v399
      %v569 = vpop.f32.mrf.mxu0
      %v570 = vadd.f32 0.0, %v569
      %571 = vmatmul.f32.gmra.mxu0 %v402
      %v572 = vpop.f32.mrf.mxu0
      %v573 = vadd.f32 0.0, %v572
      %574 = vmatmul.f32.gmra.mxu0 %v405
      %v575 = vpop.f32.mrf.mxu0
      %v576 = vadd.f32 0.0, %v575
      %577 = vmatmul.f32.gmra.mxu0 %v408
      %v578 = vpop.f32.mrf.mxu0
      %v579 = vadd.f32 0.0, %v578
      %580 = vmatmul.f32.gmra.mxu0 %v411
      %v581 = vpop.f32.mrf.mxu0
      %v582 = vadd.f32 0.0, %v581
      %583 = vmatmul.f32.gmra.mxu0 %v414
      %v584 = vpop.f32.mrf.mxu0
      %v585 = vadd.f32 0.0, %v584
      %586 = vmatmul.f32.gmra.mxu0 %v417
      %v587 = vpop.f32.mrf.mxu0
      %v588 = vadd.f32 0.0, %v587
      %589 = vmatmul.f32.gmra.mxu0 %v420
      %v590 = vpop.f32.mrf.mxu0
      %v591 = vadd.f32 0.0, %v590
      %592 = vmatmul.f32.gmra.mxu0 %v423
      %v593 = vpop.f32.mrf.mxu0
      %v594 = vadd.f32 0.0, %v593
      %595 = vdwg.mxu0
      %v597 = vsel %vm274, %v171, 0
      %v600 = vsel %vm274, %v172, 0
      %v603 = vsel %vm274, %v173, 0
      %v606 = vsel %vm274, %v174, 0
      %v609 = vsel %vm274, %v175, 0
      %v612 = vsel %vm274, %v176, 0
      %v615 = vsel %vm274, %v177, 0
      %v618 = vsel %vm274, %v178, 0
      %v621 = vsel %vm274, %v179, 0
      %v624 = vsel %vm274, %v180, 0
      %v627 = vsel %vm274, %v181, 0
      %v630 = vsel %vm274, %v182, 0
      %v633 = vsel %vm274, %v183, 0
      %v636 = vsel %vm274, %v184, 0
      %v639 = vsel %vm274, %v185, 0
      %v642 = vsel %vm274, %v186, 0
      %v645 = vsel %vm274, %v187, 0
      %v648 = vsel %vm274, %v188, 0
      %v651 = vsel %vm274, %v189, 0
      %v654 = vsel %vm274, %v190, 0
      %v657 = vsel %vm274, %v191, 0
      %v660 = vsel %vm274, %v192, 0
      %v663 = vsel %vm274, %v193, 0
      %v666 = vsel %vm274, %v194, 0
      %v669 = vsel %vm274, %v195, 0
      %v672 = vsel %vm274, %v196, 0
      %v675 = vsel %vm274, %v197, 0
      %v678 = vsel %vm274, %v198, 0
      %v681 = vsel %vm274, %v199, 0
      %v684 = vsel %vm274, %v200, 0
      %v687 = vsel %vm274, %v201, 0
      %v690 = vsel %vm274, %v202, 0
      %v693 = vsel %vm274, %v203, 0
      %v696 = vsel %vm274, %v204, 0
      %v699 = vsel %vm274, %v205, 0
      %v702 = vsel %vm274, %v206, 0
      %v705 = vsel %vm274, %v207, 0
      %v708 = vsel %vm274, %v208, 0
      %v711 = vsel %vm274, %v209, 0
      %v714 = vsel %vm274, %v210, 0
      %v717 = vsel %vm274, %v211, 0
      %v720 = vsel %vm274, %v212, 0
      %v723 = vsel %vm274, %v213, 0
      %v726 = vsel %vm274, %v214, 0
      %v729 = vsel %vm274, %v215, 0
      %v732 = vsel %vm274, %v216, 0
      %v735 = vsel %vm274, %v217, 0
      %v738 = vsel %vm274, %v218, 0
      %v741 = vsel %vm274, %v219, 0
      %v744 = vsel %vm274, %v220, 0
      %v747 = vsel %vm425, %v221, 0
      %749 = vmatpush.msra.mxu0 0.0
      %750 = vmatpush.msra.mxu0 0.0
      %751 = vmatpush.msra.mxu0 0.0
      %752 = vmatpush.msra.mxu0 0.0
      %753 = vmatpush.msra.mxu0 0.0
      %754 = vmatpush.msra.mxu0 0.0
      %755 = vmatpush.msra.mxu0 0.0
      %756 = vmatpush.msra.mxu0 0.0
      %757 = vmatpush.msra.mxu0 0.0
      %758 = vmatpush.msra.mxu0 0.0
      %759 = vmatpush.msra.mxu0 0.0
      %760 = vmatpush.msra.mxu0 0.0
      %761 = vmatpush.msra.mxu0 0.0
      %762 = vmatpush.msra.mxu0 0.0
      %763 = vmatpush.msra.mxu0 0.0
      %764 = vmatpush.msra.mxu0 %v747
      %765 = vmatmul.f32.gmra.mxu0 %v597
      %v766 = vpop.f32.mrf.mxu0
      %v767 = vadd.f32 %v447, %v766
      %768 = vmatmul.f32.gmra.mxu0 %v600
      %v769 = vpop.f32.mrf.mxu0
      %v770 = vadd.f32 %v450, %v769
      %771 = vmatmul.f32.gmra.mxu0 %v603
      %v772 = vpop.f32.mrf.mxu0
      %v773 = vadd.f32 %v453, %v772
      %774 = vmatmul.f32.gmra.mxu0 %v606
      %v775 = vpop.f32.mrf.mxu0
      %v776 = vadd.f32 %v456, %v775
      %777 = vmatmul.f32.gmra.mxu0 %v609
      %v778 = vpop.f32.mrf.mxu0
      %v779 = vadd.f32 %v459, %v778
      %780 = vmatmul.f32.gmra.mxu0 %v612
      %v781 = vpop.f32.mrf.mxu0
      %v782 = vadd.f32 %v462, %v781
      %783 = vmatmul.f32.gmra.mxu0 %v615
      %v784 = vpop.f32.mrf.mxu0
      %v785 = vadd.f32 %v465, %v784
      %786 = vmatmul.f32.gmra.mxu0 %v618
      %v787 = vpop.f32.mrf.mxu0
      %v788 = vadd.f32 %v468, %v787
      %789 = vmatmul.f32.gmra.mxu0 %v621
      %v790 = vpop.f32.mrf.mxu0
      %v791 = vadd.f32 %v471, %v790
      %792 = vmatmul.f32.gmra.mxu0 %v624
      %v793 = vpop.f32.mrf.mxu0
      %v794 = vadd.f32 %v474, %v793
      %795 = vmatmul.f32.gmra.mxu0 %v627
      %v796 = vpop.f32.mrf.mxu0
      %v797 = vadd.f32 %v477, %v796
      %798 = vmatmul.f32.gmra.mxu0 %v630
      %v799 = vpop.f32.mrf.mxu0
      %v800 = vadd.f32 %v480, %v799
      %801 = vmatmul.f32.gmra.mxu0 %v633
      %v802 = vpop.f32.mrf.mxu0
      %v803 = vadd.f32 %v483, %v802
      %804 = vmatmul.f32.gmra.mxu0 %v636
      %v805 = vpop.f32.mrf.mxu0
      %v806 = vadd.f32 %v486, %v805
      %807 = vmatmul.f32.gmra.mxu0 %v639
      %v808 = vpop.f32.mrf.mxu0
      %v809 = vadd.f32 %v489, %v808
      %810 = vmatmul.f32.gmra.mxu0 %v642
      %v811 = vpop.f32.mrf.mxu0
      %v812 = vadd.f32 %v492, %v811
      %813 = vmatmul.f32.gmra.mxu0 %v645
      %v814 = vpop.f32.mrf.mxu0
      %v815 = vadd.f32 %v495, %v814
      %816 = vmatmul.f32.gmra.mxu0 %v648
      %v817 = vpop.f32.mrf.mxu0
      %v818 = vadd.f32 %v498, %v817
      %819 = vmatmul.f32.gmra.mxu0 %v651
      %v820 = vpop.f32.mrf.mxu0
      %v821 = vadd.f32 %v501, %v820
      %822 = vmatmul.f32.gmra.mxu0 %v654
      %v823 = vpop.f32.mrf.mxu0
      %v824 = vadd.f32 %v504, %v823
      %825 = vmatmul.f32.gmra.mxu0 %v657
      %v826 = vpop.f32.mrf.mxu0
      %v827 = vadd.f32 %v507, %v826
      %828 = vmatmul.f32.gmra.mxu0 %v660
      %v829 = vpop.f32.mrf.mxu0
      %v830 = vadd.f32 %v510, %v829
      %831 = vmatmul.f32.gmra.mxu0 %v663
      %v832 = vpop.f32.mrf.mxu0
      %v833 = vadd.f32 %v513, %v832
      %834 = vmatmul.f32.gmra.mxu0 %v666
      %v835 = vpop.f32.mrf.mxu0
      %v836 = vadd.f32 %v516, %v835
      %837 = vmatmul.f32.gmra.mxu0 %v669
      %v838 = vpop.f32.mrf.mxu0
      %v839 = vadd.f32 %v519, %v838
      %840 = vmatmul.f32.gmra.mxu0 %v672
      %v841 = vpop.f32.mrf.mxu0
      %v842 = vadd.f32 %v522, %v841
      %843 = vmatmul.f32.gmra.mxu0 %v675
      %v844 = vpop.f32.mrf.mxu0
      %v845 = vadd.f32 %v525, %v844
      %846 = vmatmul.f32.gmra.mxu0 %v678
      %v847 = vpop.f32.mrf.mxu0
      %v848 = vadd.f32 %v528, %v847
      %849 = vmatmul.f32.gmra.mxu0 %v681
      %v850 = vpop.f32.mrf.mxu0
      %v851 = vadd.f32 %v531, %v850
      %852 = vmatmul.f32.gmra.mxu0 %v684
      %v853 = vpop.f32.mrf.mxu0
      %v854 = vadd.f32 %v534, %v853
      %855 = vmatmul.f32.gmra.mxu0 %v687
      %v856 = vpop.f32.mrf.mxu0
      %v857 = vadd.f32 %v537, %v856
      %858 = vmatmul.f32.gmra.mxu0 %v690
      %v859 = vpop.f32.mrf.mxu0
      %v860 = vadd.f32 %v540, %v859
      %861 = vmatmul.f32.gmra.mxu0 %v693
      %v862 = vpop.f32.mrf.mxu0
      %v863 = vadd.f32 %v543, %v862
      %864 = vmatmul.f32.gmra.mxu0 %v696
      %v865 = vpop.f32.mrf.mxu0
      %v866 = vadd.f32 %v546, %v865
      %867 = vmatmul.f32.gmra.mxu0 %v699
      %v868 = vpop.f32.mrf.mxu0
      %v869 = vadd.f32 %v549, %v868
      %870 = vmatmul.f32.gmra.mxu0 %v702
      %v871 = vpop.f32.mrf.mxu0
      %v872 = vadd.f32 %v552, %v871
      %873 = vmatmul.f32.gmra.mxu0 %v705
      %v874 = vpop.f32.mrf.mxu0
      %v875 = vadd.f32 %v555, %v874
      %876 = vmatmul.f32.gmra.mxu0 %v708
      %v877 = vpop.f32.mrf.mxu0
      %v878 = vadd.f32 %v558, %v877
      %879 = vmatmul.f32.gmra.mxu0 %v711
      %v880 = vpop.f32.mrf.mxu0
      %v881 = vadd.f32 %v561, %v880
      %882 = vmatmul.f32.gmra.mxu0 %v714
      %v883 = vpop.f32.mrf.mxu0
      %v884 = vadd.f32 %v564, %v883
      %885 = vmatmul.f32.gmra.mxu0 %v717
      %v886 = vpop.f32.mrf.mxu0
      %v887 = vadd.f32 %v567, %v886
      %888 = vmatmul.f32.gmra.mxu0 %v720
      %v889 = vpop.f32.mrf.mxu0
      %v890 = vadd.f32 %v570, %v889
      %891 = vmatmul.f32.gmra.mxu0 %v723
      %v892 = vpop.f32.mrf.mxu0
      %v893 = vadd.f32 %v573, %v892
      %894 = vmatmul.f32.gmra.mxu0 %v726
      %v895 = vpop.f32.mrf.mxu0
      %v896 = vadd.f32 %v576, %v895
      %897 = vmatmul.f32.gmra.mxu0 %v729
      %v898 = vpop.f32.mrf.mxu0
      %v899 = vadd.f32 %v579, %v898
      %900 = vmatmul.f32.gmra.mxu0 %v732
      %v901 = vpop.f32.mrf.mxu0
      %v902 = vadd.f32 %v582, %v901
      %903 = vmatmul.f32.gmra.mxu0 %v735
      %v904 = vpop.f32.mrf.mxu0
      %v905 = vadd.f32 %v585, %v904
      %906 = vmatmul.f32.gmra.mxu0 %v738
      %v907 = vpop.f32.mrf.mxu0
      %v908 = vadd.f32 %v588, %v907
      %909 = vmatmul.f32.gmra.mxu0 %v741
      %v910 = vpop.f32.mrf.mxu0
      %v911 = vadd.f32 %v591, %v910
      %912 = vmatmul.f32.gmra.mxu0 %v744
      %v913 = vpop.f32.mrf.mxu0
      %v914 = vadd.f32 %v594, %v913
      %915 = vdwg.mxu0
      %v916 = vld [vmem:[%s165 + $0x4] sm:$0xff]
      %v917 = vld [vmem:[%s165 + $0xc] sm:$0xff]
      %v918 = vld [vmem:[%s165 + $0x14] sm:$0xff]
      %v919 = vld [vmem:[%s165 + $0x1c] sm:$0xff]
      %v920 = vld [vmem:[%s165 + $0x24] sm:$0xff]
      %v921 = vld [vmem:[%s165 + $0x2c] sm:$0xff]
      %v922 = vld [vmem:[%s165 + $0x34] sm:$0xff]
      %v923 = vld [vmem:[%s165 + $0x3c] sm:$0xff]
      %v924 = vld [vmem:[%s165 + $0x44] sm:$0xff]
      %v925 = vld [vmem:[%s165 + $0x4c] sm:$0xff]
      %v926 = vld [vmem:[%s165 + $0x54] sm:$0xff]
      %v927 = vld [vmem:[%s165 + $0x5c] sm:$0xff]
      %v928 = vld [vmem:[%s165 + $0x64] sm:$0xff]
      %v929 = vld [vmem:[%s165 + $0x6c] sm:$0xff]
      %v930 = vld [vmem:[%s165 + $0x74] sm:$0xff]
      %v931 = vld [vmem:[%s165 + $0x7c] sm:$0xff]
      %v932 = vld [vmem:[%s165 + $0x84] sm:$0xff]
      %v933 = vld [vmem:[%s165 + $0x8c] sm:$0xff]
      %v934 = vld [vmem:[%s165 + $0x94] sm:$0xff]
      %v935 = vld [vmem:[%s165 + $0x9c] sm:$0xff]
      %v936 = vld [vmem:[%s165 + $0xa4] sm:$0xff]
      %v937 = vld [vmem:[%s165 + $0xac] sm:$0xff]
      %v938 = vld [vmem:[%s165 + $0xb4] sm:$0xff]
      %v939 = vld [vmem:[%s165 + $0xbc] sm:$0xff]
      %v940 = vld [vmem:[%s165 + $0xc4] sm:$0xff]
      %v941 = vld [vmem:[%s165 + $0xcc] sm:$0xff]
      %v942 = vld [vmem:[%s165 + $0xd4] sm:$0xff]
      %v943 = vld [vmem:[%s165 + $0xdc] sm:$0xff]
      %v944 = vld [vmem:[%s165 + $0xe4] sm:$0xff]
      %v945 = vld [vmem:[%s165 + $0xec] sm:$0xff]
      %v946 = vld [vmem:[%s165 + $0xf4] sm:$0xff]
      %v947 = vld [vmem:[%s165 + $0xfc] sm:$0xff]
      %v948 = vld [vmem:[%s165 + $0x104] sm:$0xff]
      %v949 = vld [vmem:[%s165 + $0x10c] sm:$0xff]
      %v950 = vld [vmem:[%s165 + $0x114] sm:$0xff]
      %v951 = vld [vmem:[%s165 + $0x11c] sm:$0xff]
      %v952 = vld [vmem:[%s165 + $0x124] sm:$0xff]
      %v953 = vld [vmem:[%s165 + $0x12c] sm:$0xff]
      %v954 = vld [vmem:[%s165 + $0x134] sm:$0xff]
      %v955 = vld [vmem:[%s165 + $0x13c] sm:$0xff]
      %v956 = vld [vmem:[%s165 + $0x144] sm:$0xff]
      %v957 = vld [vmem:[%s165 + $0x14c] sm:$0xff]
      %v958 = vld [vmem:[%s165 + $0x154] sm:$0xff]
      %v959 = vld [vmem:[%s165 + $0x15c] sm:$0xff]
      %v960 = vld [vmem:[%s165 + $0x164] sm:$0xff]
      %v961 = vld [vmem:[%s165 + $0x16c] sm:$0xff]
      %v962 = vld [vmem:[%s165 + $0x174] sm:$0xff]
      %v963 = vld [vmem:[%s165 + $0x17c] sm:$0xff]
      %v964 = vld [vmem:[%s165 + $0x184] sm:$0xff]
      %v965 = vld [vmem:[%s165 + $0x18c] sm:$0xff]
      %s966 = scalar_lea.vmem %s1, 8
      %v967 = vld [vmem:[%s966] sm:$0xf]
      %v969 = vsel %vm274, %v916, 0
      %v972 = vsel %vm274, %v917, 0
      %v975 = vsel %vm274, %v918, 0
      %v978 = vsel %vm274, %v919, 0
      %v981 = vsel %vm274, %v920, 0
      %v984 = vsel %vm274, %v921, 0
      %v987 = vsel %vm274, %v922, 0
      %v990 = vsel %vm274, %v923, 0
      %v993 = vsel %vm274, %v924, 0
      %v996 = vsel %vm274, %v925, 0
      %v999 = vsel %vm274, %v926, 0
      %v1002 = vsel %vm274, %v927, 0
      %v1005 = vsel %vm274, %v928, 0
      %v1008 = vsel %vm274, %v929, 0
      %v1011 = vsel %vm274, %v930, 0
      %v1014 = vsel %vm274, %v931, 0
      %v1017 = vsel %vm274, %v932, 0
      %v1020 = vsel %vm274, %v933, 0
      %v1023 = vsel %vm274, %v934, 0
      %v1026 = vsel %vm274, %v935, 0
      %v1029 = vsel %vm274, %v936, 0
      %v1032 = vsel %vm274, %v937, 0
      %v1035 = vsel %vm274, %v938, 0
      %v1038 = vsel %vm274, %v939, 0
      %v1041 = vsel %vm274, %v940, 0
      %v1044 = vsel %vm274, %v941, 0
      %v1047 = vsel %vm274, %v942, 0
      %v1050 = vsel %vm274, %v943, 0
      %v1053 = vsel %vm274, %v944, 0
      %v1056 = vsel %vm274, %v945, 0
      %v1059 = vsel %vm274, %v946, 0
      %v1062 = vsel %vm274, %v947, 0
      %v1065 = vsel %vm274, %v948, 0
      %v1068 = vsel %vm274, %v949, 0
      %v1071 = vsel %vm274, %v950, 0
      %v1074 = vsel %vm274, %v951, 0
      %v1077 = vsel %vm274, %v952, 0
      %v1080 = vsel %vm274, %v953, 0
      %v1083 = vsel %vm274, %v954, 0
      %v1086 = vsel %vm274, %v955, 0
      %v1089 = vsel %vm274, %v956, 0
      %v1092 = vsel %vm274, %v957, 0
      %v1095 = vsel %vm274, %v958, 0
      %v1098 = vsel %vm274, %v959, 0
      %v1101 = vsel %vm274, %v960, 0
      %v1104 = vsel %vm274, %v961, 0
      %v1107 = vsel %vm274, %v962, 0
      %v1110 = vsel %vm274, %v963, 0
      %v1113 = vsel %vm274, %v964, 0
      %v1116 = vsel %vm274, %v965, 0
      %v1119 = vsel %vm425, %v967, 0
      %1121 = vmatpush.msra.mxu0 0.0
      %1122 = vmatpush.msra.mxu0 0.0
      %1123 = vmatpush.msra.mxu0 0.0
      %1124 = vmatpush.msra.mxu0 0.0
      %1125 = vmatpush.msra.mxu0 0.0
      %1126 = vmatpush.msra.mxu0 0.0
      %1127 = vmatpush.msra.mxu0 0.0
      %1128 = vmatpush.msra.mxu0 0.0
      %1129 = vmatpush.msra.mxu0 0.0
      %1130 = vmatpush.msra.mxu0 0.0
      %1131 = vmatpush.msra.mxu0 0.0
      %1132 = vmatpush.msra.mxu0 0.0
      %1133 = vmatpush.msra.mxu0 0.0
      %1134 = vmatpush.msra.mxu0 0.0
      %1135 = vmatpush.msra.mxu0 0.0
      %1136 = vmatpush.msra.mxu0 %v1119
      %1137 = vmatmul.f32.gmra.mxu0 %v969
      %v1138 = vpop.f32.mrf.mxu0
      %v1139 = vadd.f32 0.0, %v1138
      %1140 = vmatmul.f32.gmra.mxu0 %v972
      %v1141 = vpop.f32.mrf.mxu0
      %v1142 = vadd.f32 0.0, %v1141
      %1143 = vmatmul.f32.gmra.mxu0 %v975
      %v1144 = vpop.f32.mrf.mxu0
      %v1145 = vadd.f32 0.0, %v1144
      %1146 = vmatmul.f32.gmra.mxu0 %v978
      %v1147 = vpop.f32.mrf.mxu0
      %v1148 = vadd.f32 0.0, %v1147
      %1149 = vmatmul.f32.gmra.mxu0 %v981
      %v1150 = vpop.f32.mrf.mxu0
      %v1151 = vadd.f32 0.0, %v1150
      %1152 = vmatmul.f32.gmra.mxu0 %v984
      %v1153 = vpop.f32.mrf.mxu0
      %v1154 = vadd.f32 0.0, %v1153
      %1155 = vmatmul.f32.gmra.mxu0 %v987
      %v1156 = vpop.f32.mrf.mxu0
      %v1157 = vadd.f32 0.0, %v1156
      %1158 = vmatmul.f32.gmra.mxu0 %v990
      %v1159 = vpop.f32.mrf.mxu0
      %v1160 = vadd.f32 0.0, %v1159
      %1161 = vmatmul.f32.gmra.mxu0 %v993
      %v1162 = vpop.f32.mrf.mxu0
      %v1163 = vadd.f32 0.0, %v1162
      %1164 = vmatmul.f32.gmra.mxu0 %v996
      %v1165 = vpop.f32.mrf.mxu0
      %v1166 = vadd.f32 0.0, %v1165
      %1167 = vmatmul.f32.gmra.mxu0 %v999
      %v1168 = vpop.f32.mrf.mxu0
      %v1169 = vadd.f32 0.0, %v1168
      %1170 = vmatmul.f32.gmra.mxu0 %v1002
      %v1171 = vpop.f32.mrf.mxu0
      %v1172 = vadd.f32 0.0, %v1171
      %1173 = vmatmul.f32.gmra.mxu0 %v1005
      %v1174 = vpop.f32.mrf.mxu0
      %v1175 = vadd.f32 0.0, %v1174
      %1176 = vmatmul.f32.gmra.mxu0 %v1008
      %v1177 = vpop.f32.mrf.mxu0
      %v1178 = vadd.f32 0.0, %v1177
      %1179 = vmatmul.f32.gmra.mxu0 %v1011
      %v1180 = vpop.f32.mrf.mxu0
      %v1181 = vadd.f32 0.0, %v1180
      %1182 = vmatmul.f32.gmra.mxu0 %v1014
      %v1183 = vpop.f32.mrf.mxu0
      %v1184 = vadd.f32 0.0, %v1183
      %1185 = vmatmul.f32.gmra.mxu0 %v1017
      %v1186 = vpop.f32.mrf.mxu0
      %v1187 = vadd.f32 0.0, %v1186
      %1188 = vmatmul.f32.gmra.mxu0 %v1020
      %v1189 = vpop.f32.mrf.mxu0
      %v1190 = vadd.f32 0.0, %v1189
      %1191 = vmatmul.f32.gmra.mxu0 %v1023
      %v1192 = vpop.f32.mrf.mxu0
      %v1193 = vadd.f32 0.0, %v1192
      %1194 = vmatmul.f32.gmra.mxu0 %v1026
      %v1195 = vpop.f32.mrf.mxu0
      %v1196 = vadd.f32 0.0, %v1195
      %1197 = vmatmul.f32.gmra.mxu0 %v1029
      %v1198 = vpop.f32.mrf.mxu0
      %v1199 = vadd.f32 0.0, %v1198
      %1200 = vmatmul.f32.gmra.mxu0 %v1032
      %v1201 = vpop.f32.mrf.mxu0
      %v1202 = vadd.f32 0.0, %v1201
      %1203 = vmatmul.f32.gmra.mxu0 %v1035
      %v1204 = vpop.f32.mrf.mxu0
      %v1205 = vadd.f32 0.0, %v1204
      %1206 = vmatmul.f32.gmra.mxu0 %v1038
      %v1207 = vpop.f32.mrf.mxu0
      %v1208 = vadd.f32 0.0, %v1207
      %1209 = vmatmul.f32.gmra.mxu0 %v1041
      %v1210 = vpop.f32.mrf.mxu0
      %v1211 = vadd.f32 0.0, %v1210
      %1212 = vmatmul.f32.gmra.mxu0 %v1044
      %v1213 = vpop.f32.mrf.mxu0
      %v1214 = vadd.f32 0.0, %v1213
      %1215 = vmatmul.f32.gmra.mxu0 %v1047
      %v1216 = vpop.f32.mrf.mxu0
      %v1217 = vadd.f32 0.0, %v1216
      %1218 = vmatmul.f32.gmra.mxu0 %v1050
      %v1219 = vpop.f32.mrf.mxu0
      %v1220 = vadd.f32 0.0, %v1219
      %1221 = vmatmul.f32.gmra.mxu0 %v1053
      %v1222 = vpop.f32.mrf.mxu0
      %v1223 = vadd.f32 0.0, %v1222
      %1224 = vmatmul.f32.gmra.mxu0 %v1056
      %v1225 = vpop.f32.mrf.mxu0
      %v1226 = vadd.f32 0.0, %v1225
      %1227 = vmatmul.f32.gmra.mxu0 %v1059
      %v1228 = vpop.f32.mrf.mxu0
      %v1229 = vadd.f32 0.0, %v1228
      %1230 = vmatmul.f32.gmra.mxu0 %v1062
      %v1231 = vpop.f32.mrf.mxu0
      %v1232 = vadd.f32 0.0, %v1231
      %1233 = vmatmul.f32.gmra.mxu0 %v1065
      %v1234 = vpop.f32.mrf.mxu0
      %v1235 = vadd.f32 0.0, %v1234
      %1236 = vmatmul.f32.gmra.mxu0 %v1068
      %v1237 = vpop.f32.mrf.mxu0
      %v1238 = vadd.f32 0.0, %v1237
      %1239 = vmatmul.f32.gmra.mxu0 %v1071
      %v1240 = vpop.f32.mrf.mxu0
      %v1241 = vadd.f32 0.0, %v1240
      %1242 = vmatmul.f32.gmra.mxu0 %v1074
      %v1243 = vpop.f32.mrf.mxu0
      %v1244 = vadd.f32 0.0, %v1243
      %1245 = vmatmul.f32.gmra.mxu0 %v1077
      %v1246 = vpop.f32.mrf.mxu0
      %v1247 = vadd.f32 0.0, %v1246
      %1248 = vmatmul.f32.gmra.mxu0 %v1080
      %v1249 = vpop.f32.mrf.mxu0
      %v1250 = vadd.f32 0.0, %v1249
      %1251 = vmatmul.f32.gmra.mxu0 %v1083
      %v1252 = vpop.f32.mrf.mxu0
      %v1253 = vadd.f32 0.0, %v1252
      %1254 = vmatmul.f32.gmra.mxu0 %v1086
      %v1255 = vpop.f32.mrf.mxu0
      %v1256 = vadd.f32 0.0, %v1255
      %1257 = vmatmul.f32.gmra.mxu0 %v1089
      %v1258 = vpop.f32.mrf.mxu0
      %v1259 = vadd.f32 0.0, %v1258
      %1260 = vmatmul.f32.gmra.mxu0 %v1092
      %v1261 = vpop.f32.mrf.mxu0
      %v1262 = vadd.f32 0.0, %v1261
      %1263 = vmatmul.f32.gmra.mxu0 %v1095
      %v1264 = vpop.f32.mrf.mxu0
      %v1265 = vadd.f32 0.0, %v1264
      %1266 = vmatmul.f32.gmra.mxu0 %v1098
      %v1267 = vpop.f32.mrf.mxu0
      %v1268 = vadd.f32 0.0, %v1267
      %1269 = vmatmul.f32.gmra.mxu0 %v1101
      %v1270 = vpop.f32.mrf.mxu0
      %v1271 = vadd.f32 0.0, %v1270
      %1272 = vmatmul.f32.gmra.mxu0 %v1104
      %v1273 = vpop.f32.mrf.mxu0
      %v1274 = vadd.f32 0.0, %v1273
      %1275 = vmatmul.f32.gmra.mxu0 %v1107
      %v1276 = vpop.f32.mrf.mxu0
      %v1277 = vadd.f32 0.0, %v1276
      %1278 = vmatmul.f32.gmra.mxu0 %v1110
      %v1279 = vpop.f32.mrf.mxu0
      %v1280 = vadd.f32 0.0, %v1279
      %1281 = vmatmul.f32.gmra.mxu0 %v1113
      %v1282 = vpop.f32.mrf.mxu0
      %v1283 = vadd.f32 0.0, %v1282
      %1284 = vmatmul.f32.gmra.mxu0 %v1116
      %v1285 = vpop.f32.mrf.mxu0
      %v1286 = vadd.f32 0.0, %v1285
      %1287 = vdwg.mxu0
      %v1288 = vadd.f32 %v767, %v1139
      %v1289 = vadd.f32 %v770, %v1142
      %v1290 = vadd.f32 %v773, %v1145
      %v1291 = vadd.f32 %v776, %v1148
      %v1292 = vadd.f32 %v779, %v1151
      %v1293 = vadd.f32 %v782, %v1154
      %v1294 = vadd.f32 %v785, %v1157
      %v1295 = vadd.f32 %v788, %v1160
      %v1296 = vadd.f32 %v791, %v1163
      %v1297 = vadd.f32 %v794, %v1166
      %v1298 = vadd.f32 %v797, %v1169
      %v1299 = vadd.f32 %v800, %v1172
      %v1300 = vadd.f32 %v803, %v1175
      %v1301 = vadd.f32 %v806, %v1178
      %v1302 = vadd.f32 %v809, %v1181
      %v1303 = vadd.f32 %v812, %v1184
      %v1304 = vadd.f32 %v815, %v1187
      %v1305 = vadd.f32 %v818, %v1190
      %v1306 = vadd.f32 %v821, %v1193
      %v1307 = vadd.f32 %v824, %v1196
      %v1308 = vadd.f32 %v827, %v1199
      %v1309 = vadd.f32 %v830, %v1202
      %v1310 = vadd.f32 %v833, %v1205
      %v1311 = vadd.f32 %v836, %v1208
      %v1312 = vadd.f32 %v839, %v1211
      %v1313 = vadd.f32 %v842, %v1214
      %v1314 = vadd.f32 %v845, %v1217
      %v1315 = vadd.f32 %v848, %v1220
      %v1316 = vadd.f32 %v851, %v1223
      %v1317 = vadd.f32 %v854, %v1226
      %v1318 = vadd.f32 %v857, %v1229
      %v1319 = vadd.f32 %v860, %v1232
      %v1320 = vadd.f32 %v863, %v1235
      %v1321 = vadd.f32 %v866, %v1238
      %v1322 = vadd.f32 %v869, %v1241
      %v1323 = vadd.f32 %v872, %v1244
      %v1324 = vadd.f32 %v875, %v1247
      %v1325 = vadd.f32 %v878, %v1250
      %v1326 = vadd.f32 %v881, %v1253
      %v1327 = vadd.f32 %v884, %v1256
      %v1328 = vadd.f32 %v887, %v1259
      %v1329 = vadd.f32 %v890, %v1262
      %v1330 = vadd.f32 %v893, %v1265
      %v1331 = vadd.f32 %v896, %v1268
      %v1332 = vadd.f32 %v899, %v1271
      %v1333 = vadd.f32 %v902, %v1274
      %v1334 = vadd.f32 %v905, %v1277
      %v1335 = vadd.f32 %v908, %v1280
      %v1336 = vadd.f32 %v911, %v1283
      %v1337 = vadd.f32 %v914, %v1286
      %v1338 = vld [vmem:[%s165 + $0x28] sm:$0xff]
      %v1339 = vld [vmem:[%s165 + $0x30] sm:$0xff]
      %v1340 = vld [vmem:[%s165 + $0x38] sm:$0xff]
      %v1341 = vld [vmem:[%s165 + $0x40] sm:$0xff]
      %v1342 = vld [vmem:[%s165 + $0x48] sm:$0xff]
      %v1343 = vld [vmem:[%s165 + $0x50] sm:$0xff]
      %v1344 = vld [vmem:[%s165 + $0x58] sm:$0xff]
      %v1345 = vld [vmem:[%s165 + $0x60] sm:$0xff]
      %v1346 = vld [vmem:[%s165 + $0x68] sm:$0xff]
      %v1347 = vld [vmem:[%s165 + $0x70] sm:$0xff]
      %v1348 = vld [vmem:[%s165 + $0x78] sm:$0xff]
      %v1349 = vld [vmem:[%s165 + $0x80] sm:$0xff]
      %v1350 = vld [vmem:[%s165 + $0x88] sm:$0xff]
      %v1351 = vld [vmem:[%s165 + $0x90] sm:$0xff]
      %v1352 = vld [vmem:[%s165 + $0x98] sm:$0xff]
      %v1353 = vld [vmem:[%s165 + $0xa0] sm:$0xff]
      %v1354 = vld [vmem:[%s165 + $0xa8] sm:$0xff]
      %v1355 = vld [vmem:[%s165 + $0xb0] sm:$0xff]
      %v1356 = vld [vmem:[%s165 + $0xb8] sm:$0xff]
      %v1357 = vld [vmem:[%s165 + $0xc0] sm:$0xff]
      %v1358 = vld [vmem:[%s165 + $0xc8] sm:$0xff]
      %v1359 = vld [vmem:[%s165 + $0xd0] sm:$0xff]
      %v1360 = vld [vmem:[%s165 + $0xd8] sm:$0xff]
      %v1361 = vld [vmem:[%s165 + $0xe0] sm:$0xff]
      %v1362 = vld [vmem:[%s165 + $0xe8] sm:$0xff]
      %v1363 = vld [vmem:[%s165 + $0xf0] sm:$0xff]
      %v1364 = vld [vmem:[%s165 + $0xf8] sm:$0xff]
      %v1365 = vld [vmem:[%s165 + $0x100] sm:$0xff]
      %v1366 = vld [vmem:[%s165 + $0x108] sm:$0xff]
      %v1367 = vld [vmem:[%s165 + $0x110] sm:$0xff]
      %v1368 = vld [vmem:[%s165 + $0x118] sm:$0xff]
      %v1369 = vld [vmem:[%s165 + $0x120] sm:$0xff]
      %v1370 = vld [vmem:[%s165 + $0x128] sm:$0xff]
      %v1371 = vld [vmem:[%s165 + $0x130] sm:$0xff]
      %v1372 = vld [vmem:[%s165 + $0x138] sm:$0xff]
      %v1373 = vld [vmem:[%s165 + $0x140] sm:$0xff]
      %v1374 = vld [vmem:[%s165 + $0x148] sm:$0xff]
      %v1375 = vld [vmem:[%s165 + $0x150] sm:$0xff]
      %v1376 = vld [vmem:[%s165 + $0x158] sm:$0xff]
      %v1377 = vld [vmem:[%s165 + $0x160] sm:$0xff]
      %v1378 = vld [vmem:[%s165 + $0x168] sm:$0xff]
      %v1379 = vld [vmem:[%s165 + $0x170] sm:$0xff]
      %v1380 = vld [vmem:[%s165 + $0x178] sm:$0xff]
      %v1381 = vld [vmem:[%s165 + $0x180] sm:$0xff]
      %v1382 = vld [vmem:[%s165 + $0x188] sm:$0xff]
      %v1383 = vld [vmem:[%s165 + $0x190] sm:$0xff]
      %v1384 = vld [vmem:[%s165 + $0x198] sm:$0xff]
      %v1385 = vld [vmem:[%s165 + $0x1a0] sm:$0xff]
      %v1386 = vld [vmem:[%s165 + $0x1a8] sm:$0xff]
      %v1387 = vld [vmem:[%s165 + $0x1b0] sm:$0xff]
      %s1388 = scalar_lea.vmem %s1, 12
      %v1389 = vld [vmem:[%s1388] sm:$0xf]
      %v1391 = vsel %vm274, %v1338, 0
      %v1394 = vsel %vm274, %v1339, 0
      %v1397 = vsel %vm274, %v1340, 0
      %v1400 = vsel %vm274, %v1341, 0
      %v1403 = vsel %vm274, %v1342, 0
      %v1406 = vsel %vm274, %v1343, 0
      %v1409 = vsel %vm274, %v1344, 0
      %v1412 = vsel %vm274, %v1345, 0
      %v1415 = vsel %vm274, %v1346, 0
      %v1418 = vsel %vm274, %v1347, 0
      %v1421 = vsel %vm274, %v1348, 0
      %v1424 = vsel %vm274, %v1349, 0
      %v1427 = vsel %vm274, %v1350, 0
      %v1430 = vsel %vm274, %v1351, 0
      %v1433 = vsel %vm274, %v1352, 0
      %v1436 = vsel %vm274, %v1353, 0
      %v1439 = vsel %vm274, %v1354, 0
      %v1442 = vsel %vm274, %v1355, 0
      %v1445 = vsel %vm274, %v1356, 0
      %v1448 = vsel %vm274, %v1357, 0
      %v1451 = vsel %vm274, %v1358, 0
      %v1454 = vsel %vm274, %v1359, 0
      %v1457 = vsel %vm274, %v1360, 0
      %v1460 = vsel %vm274, %v1361, 0
      %v1463 = vsel %vm274, %v1362, 0
      %v1466 = vsel %vm274, %v1363, 0
      %v1469 = vsel %vm274, %v1364, 0
      %v1472 = vsel %vm274, %v1365, 0
      %v1475 = vsel %vm274, %v1366, 0
      %v1478 = vsel %vm274, %v1367, 0
      %v1481 = vsel %vm274, %v1368, 0
      %v1484 = vsel %vm274, %v1369, 0
      %v1487 = vsel %vm274, %v1370, 0
      %v1490 = vsel %vm274, %v1371, 0
      %v1493 = vsel %vm274, %v1372, 0
      %v1496 = vsel %vm274, %v1373, 0
      %v1499 = vsel %vm274, %v1374, 0
      %v1502 = vsel %vm274, %v1375, 0
      %v1505 = vsel %vm274, %v1376, 0
      %v1508 = vsel %vm274, %v1377, 0
      %v1511 = vsel %vm274, %v1378, 0
      %v1514 = vsel %vm274, %v1379, 0
      %v1517 = vsel %vm274, %v1380, 0
      %v1520 = vsel %vm274, %v1381, 0
      %v1523 = vsel %vm274, %v1382, 0
      %v1526 = vsel %vm274, %v1383, 0
      %v1529 = vsel %vm274, %v1384, 0
      %v1532 = vsel %vm274, %v1385, 0
      %v1535 = vsel %vm274, %v1386, 0
      %v1538 = vsel %vm274, %v1387, 0
      %v1541 = vsel %vm425, %v1389, 0
      %1543 = vmatpush.msra.mxu0 0.0
      %1544 = vmatpush.msra.mxu0 0.0
      %1545 = vmatpush.msra.mxu0 0.0
      %1546 = vmatpush.msra.mxu0 0.0
      %1547 = vmatpush.msra.mxu0 0.0
      %1548 = vmatpush.msra.mxu0 0.0
      %1549 = vmatpush.msra.mxu0 0.0
      %1550 = vmatpush.msra.mxu0 0.0
      %1551 = vmatpush.msra.mxu0 0.0
      %1552 = vmatpush.msra.mxu0 0.0
      %1553 = vmatpush.msra.mxu0 0.0
      %1554 = vmatpush.msra.mxu0 0.0
      %1555 = vmatpush.msra.mxu0 0.0
      %1556 = vmatpush.msra.mxu0 0.0
      %1557 = vmatpush.msra.mxu0 0.0
      %1558 = vmatpush.msra.mxu0 %v1541
      %1559 = vmatmul.f32.gmra.mxu0 %v1391
      %v1560 = vpop.f32.mrf.mxu0
      %v1561 = vadd.f32 0.0, %v1560
      %1562 = vmatmul.f32.gmra.mxu0 %v1394
      %v1563 = vpop.f32.mrf.mxu0
      %v1564 = vadd.f32 0.0, %v1563
      %1565 = vmatmul.f32.gmra.mxu0 %v1397
      %v1566 = vpop.f32.mrf.mxu0
      %v1567 = vadd.f32 0.0, %v1566
      %1568 = vmatmul.f32.gmra.mxu0 %v1400
      %v1569 = vpop.f32.mrf.mxu0
      %v1570 = vadd.f32 0.0, %v1569
      %1571 = vmatmul.f32.gmra.mxu0 %v1403
      %v1572 = vpop.f32.mrf.mxu0
      %v1573 = vadd.f32 0.0, %v1572
      %1574 = vmatmul.f32.gmra.mxu0 %v1406
      %v1575 = vpop.f32.mrf.mxu0
      %v1576 = vadd.f32 0.0, %v1575
      %1577 = vmatmul.f32.gmra.mxu0 %v1409
      %v1578 = vpop.f32.mrf.mxu0
      %v1579 = vadd.f32 0.0, %v1578
      %1580 = vmatmul.f32.gmra.mxu0 %v1412
      %v1581 = vpop.f32.mrf.mxu0
      %v1582 = vadd.f32 0.0, %v1581
      %1583 = vmatmul.f32.gmra.mxu0 %v1415
      %v1584 = vpop.f32.mrf.mxu0
      %v1585 = vadd.f32 0.0, %v1584
      %1586 = vmatmul.f32.gmra.mxu0 %v1418
      %v1587 = vpop.f32.mrf.mxu0
      %v1588 = vadd.f32 0.0, %v1587
      %1589 = vmatmul.f32.gmra.mxu0 %v1421
      %v1590 = vpop.f32.mrf.mxu0
      %v1591 = vadd.f32 0.0, %v1590
      %1592 = vmatmul.f32.gmra.mxu0 %v1424
      %v1593 = vpop.f32.mrf.mxu0
      %v1594 = vadd.f32 0.0, %v1593
      %1595 = vmatmul.f32.gmra.mxu0 %v1427
      %v1596 = vpop.f32.mrf.mxu0
      %v1597 = vadd.f32 0.0, %v1596
      %1598 = vmatmul.f32.gmra.mxu0 %v1430
      %v1599 = vpop.f32.mrf.mxu0
      %v1600 = vadd.f32 0.0, %v1599
      %1601 = vmatmul.f32.gmra.mxu0 %v1433
      %v1602 = vpop.f32.mrf.mxu0
      %v1603 = vadd.f32 0.0, %v1602
      %1604 = vmatmul.f32.gmra.mxu0 %v1436
      %v1605 = vpop.f32.mrf.mxu0
      %v1606 = vadd.f32 0.0, %v1605
      %1607 = vmatmul.f32.gmra.mxu0 %v1439
      %v1608 = vpop.f32.mrf.mxu0
      %v1609 = vadd.f32 0.0, %v1608
      %1610 = vmatmul.f32.gmra.mxu0 %v1442
      %v1611 = vpop.f32.mrf.mxu0
      %v1612 = vadd.f32 0.0, %v1611
      %1613 = vmatmul.f32.gmra.mxu0 %v1445
      %v1614 = vpop.f32.mrf.mxu0
      %v1615 = vadd.f32 0.0, %v1614
      %1616 = vmatmul.f32.gmra.mxu0 %v1448
      %v1617 = vpop.f32.mrf.mxu0
      %v1618 = vadd.f32 0.0, %v1617
      %1619 = vmatmul.f32.gmra.mxu0 %v1451
      %v1620 = vpop.f32.mrf.mxu0
      %v1621 = vadd.f32 0.0, %v1620
      %1622 = vmatmul.f32.gmra.mxu0 %v1454
      %v1623 = vpop.f32.mrf.mxu0
      %v1624 = vadd.f32 0.0, %v1623
      %1625 = vmatmul.f32.gmra.mxu0 %v1457
      %v1626 = vpop.f32.mrf.mxu0
      %v1627 = vadd.f32 0.0, %v1626
      %1628 = vmatmul.f32.gmra.mxu0 %v1460
      %v1629 = vpop.f32.mrf.mxu0
      %v1630 = vadd.f32 0.0, %v1629
      %1631 = vmatmul.f32.gmra.mxu0 %v1463
      %v1632 = vpop.f32.mrf.mxu0
      %v1633 = vadd.f32 0.0, %v1632
      %1634 = vmatmul.f32.gmra.mxu0 %v1466
      %v1635 = vpop.f32.mrf.mxu0
      %v1636 = vadd.f32 0.0, %v1635
      %1637 = vmatmul.f32.gmra.mxu0 %v1469
      %v1638 = vpop.f32.mrf.mxu0
      %v1639 = vadd.f32 0.0, %v1638
      %1640 = vmatmul.f32.gmra.mxu0 %v1472
      %v1641 = vpop.f32.mrf.mxu0
      %v1642 = vadd.f32 0.0, %v1641
      %1643 = vmatmul.f32.gmra.mxu0 %v1475
      %v1644 = vpop.f32.mrf.mxu0
      %v1645 = vadd.f32 0.0, %v1644
      %1646 = vmatmul.f32.gmra.mxu0 %v1478
      %v1647 = vpop.f32.mrf.mxu0
      %v1648 = vadd.f32 0.0, %v1647
      %1649 = vmatmul.f32.gmra.mxu0 %v1481
      %v1650 = vpop.f32.mrf.mxu0
      %v1651 = vadd.f32 0.0, %v1650
      %1652 = vmatmul.f32.gmra.mxu0 %v1484
      %v1653 = vpop.f32.mrf.mxu0
      %v1654 = vadd.f32 0.0, %v1653
      %1655 = vmatmul.f32.gmra.mxu0 %v1487
      %v1656 = vpop.f32.mrf.mxu0
      %v1657 = vadd.f32 0.0, %v1656
      %1658 = vmatmul.f32.gmra.mxu0 %v1490
      %v1659 = vpop.f32.mrf.mxu0
      %v1660 = vadd.f32 0.0, %v1659
      %1661 = vmatmul.f32.gmra.mxu0 %v1493
      %v1662 = vpop.f32.mrf.mxu0
      %v1663 = vadd.f32 0.0, %v1662
      %1664 = vmatmul.f32.gmra.mxu0 %v1496
      %v1665 = vpop.f32.mrf.mxu0
      %v1666 = vadd.f32 0.0, %v1665
      %1667 = vmatmul.f32.gmra.mxu0 %v1499
      %v1668 = vpop.f32.mrf.mxu0
      %v1669 = vadd.f32 0.0, %v1668
      %1670 = vmatmul.f32.gmra.mxu0 %v1502
      %v1671 = vpop.f32.mrf.mxu0
      %v1672 = vadd.f32 0.0, %v1671
      %1673 = vmatmul.f32.gmra.mxu0 %v1505
      %v1674 = vpop.f32.mrf.mxu0
      %v1675 = vadd.f32 0.0, %v1674
      %1676 = vmatmul.f32.gmra.mxu0 %v1508
      %v1677 = vpop.f32.mrf.mxu0
      %v1678 = vadd.f32 0.0, %v1677
      %1679 = vmatmul.f32.gmra.mxu0 %v1511
      %v1680 = vpop.f32.mrf.mxu0
      %v1681 = vadd.f32 0.0, %v1680
      %1682 = vmatmul.f32.gmra.mxu0 %v1514
      %v1683 = vpop.f32.mrf.mxu0
      %v1684 = vadd.f32 0.0, %v1683
      %1685 = vmatmul.f32.gmra.mxu0 %v1517
      %v1686 = vpop.f32.mrf.mxu0
      %v1687 = vadd.f32 0.0, %v1686
      %1688 = vmatmul.f32.gmra.mxu0 %v1520
      %v1689 = vpop.f32.mrf.mxu0
      %v1690 = vadd.f32 0.0, %v1689
      %1691 = vmatmul.f32.gmra.mxu0 %v1523
      %v1692 = vpop.f32.mrf.mxu0
      %v1693 = vadd.f32 0.0, %v1692
      %1694 = vmatmul.f32.gmra.mxu0 %v1526
      %v1695 = vpop.f32.mrf.mxu0
      %v1696 = vadd.f32 0.0, %v1695
      %1697 = vmatmul.f32.gmra.mxu0 %v1529
      %v1698 = vpop.f32.mrf.mxu0
      %v1699 = vadd.f32 0.0, %v1698
      %1700 = vmatmul.f32.gmra.mxu0 %v1532
      %v1701 = vpop.f32.mrf.mxu0
      %v1702 = vadd.f32 0.0, %v1701
      %1703 = vmatmul.f32.gmra.mxu0 %v1535
      %v1704 = vpop.f32.mrf.mxu0
      %v1705 = vadd.f32 0.0, %v1704
      %1706 = vmatmul.f32.gmra.mxu0 %v1538
      %v1707 = vpop.f32.mrf.mxu0
      %v1708 = vadd.f32 0.0, %v1707
      %1709 = vdwg.mxu0
      %v1710 = vadd.f32 %v1288, %v1561
      %v1711 = vadd.f32 %v1289, %v1564
      %v1712 = vadd.f32 %v1290, %v1567
      %v1713 = vadd.f32 %v1291, %v1570
      %v1714 = vadd.f32 %v1292, %v1573
      %v1715 = vadd.f32 %v1293, %v1576
      %v1716 = vadd.f32 %v1294, %v1579
      %v1717 = vadd.f32 %v1295, %v1582
      %v1718 = vadd.f32 %v1296, %v1585
      %v1719 = vadd.f32 %v1297, %v1588
      %v1720 = vadd.f32 %v1298, %v1591
      %v1721 = vadd.f32 %v1299, %v1594
      %v1722 = vadd.f32 %v1300, %v1597
      %v1723 = vadd.f32 %v1301, %v1600
      %v1724 = vadd.f32 %v1302, %v1603
      %v1725 = vadd.f32 %v1303, %v1606
      %v1726 = vadd.f32 %v1304, %v1609
      %v1727 = vadd.f32 %v1305, %v1612
      %v1728 = vadd.f32 %v1306, %v1615
      %v1729 = vadd.f32 %v1307, %v1618
      %v1730 = vadd.f32 %v1308, %v1621
      %v1731 = vadd.f32 %v1309, %v1624
      %v1732 = vadd.f32 %v1310, %v1627
      %v1733 = vadd.f32 %v1311, %v1630
      %v1734 = vadd.f32 %v1312, %v1633
      %v1735 = vadd.f32 %v1313, %v1636
      %v1736 = vadd.f32 %v1314, %v1639
      %v1737 = vadd.f32 %v1315, %v1642
      %v1738 = vadd.f32 %v1316, %v1645
      %v1739 = vadd.f32 %v1317, %v1648
      %v1740 = vadd.f32 %v1318, %v1651
      %v1741 = vadd.f32 %v1319, %v1654
      %v1742 = vadd.f32 %v1320, %v1657
      %v1743 = vadd.f32 %v1321, %v1660
      %v1744 = vadd.f32 %v1322, %v1663
      %v1745 = vadd.f32 %v1323, %v1666
      %v1746 = vadd.f32 %v1324, %v1669
      %v1747 = vadd.f32 %v1325, %v1672
      %v1748 = vadd.f32 %v1326, %v1675
      %v1749 = vadd.f32 %v1327, %v1678
      %v1750 = vadd.f32 %v1328, %v1681
      %v1751 = vadd.f32 %v1329, %v1684
      %v1752 = vadd.f32 %v1330, %v1687
      %v1753 = vadd.f32 %v1331, %v1690
      %v1754 = vadd.f32 %v1332, %v1693
      %v1755 = vadd.f32 %v1333, %v1696
      %v1756 = vadd.f32 %v1334, %v1699
      %v1757 = vadd.f32 %v1335, %v1702
      %v1758 = vadd.f32 %v1336, %v1705
      %v1759 = vadd.f32 %v1337, %v1708
      %v1760 = vld [vmem:[%s165 + $0x2a] sm:$0xff]
      %v1761 = vld [vmem:[%s165 + $0x32] sm:$0xff]
      %v1762 = vld [vmem:[%s165 + $0x3a] sm:$0xff]
      %v1763 = vld [vmem:[%s165 + $0x42] sm:$0xff]
      %v1764 = vld [vmem:[%s165 + $0x4a] sm:$0xff]
      %v1765 = vld [vmem:[%s165 + $0x52] sm:$0xff]
      %v1766 = vld [vmem:[%s165 + $0x5a] sm:$0xff]
      %v1767 = vld [vmem:[%s165 + $0x62] sm:$0xff]
      %v1768 = vld [vmem:[%s165 + $0x6a] sm:$0xff]
      %v1769 = vld [vmem:[%s165 + $0x72] sm:$0xff]
      %v1770 = vld [vmem:[%s165 + $0x7a] sm:$0xff]
      %v1771 = vld [vmem:[%s165 + $0x82] sm:$0xff]
      %v1772 = vld [vmem:[%s165 + $0x8a] sm:$0xff]
      %v1773 = vld [vmem:[%s165 + $0x92] sm:$0xff]
      %v1774 = vld [vmem:[%s165 + $0x9a] sm:$0xff]
      %v1775 = vld [vmem:[%s165 + $0xa2] sm:$0xff]
      %v1776 = vld [vmem:[%s165 + $0xaa] sm:$0xff]
      %v1777 = vld [vmem:[%s165 + $0xb2] sm:$0xff]
      %v1778 = vld [vmem:[%s165 + $0xba] sm:$0xff]
      %v1779 = vld [vmem:[%s165 + $0xc2] sm:$0xff]
      %v1780 = vld [vmem:[%s165 + $0xca] sm:$0xff]
      %v1781 = vld [vmem:[%s165 + $0xd2] sm:$0xff]
      %v1782 = vld [vmem:[%s165 + $0xda] sm:$0xff]
      %v1783 = vld [vmem:[%s165 + $0xe2] sm:$0xff]
      %v1784 = vld [vmem:[%s165 + $0xea] sm:$0xff]
      %v1785 = vld [vmem:[%s165 + $0xf2] sm:$0xff]
      %v1786 = vld [vmem:[%s165 + $0xfa] sm:$0xff]
      %v1787 = vld [vmem:[%s165 + $0x102] sm:$0xff]
      %v1788 = vld [vmem:[%s165 + $0x10a] sm:$0xff]
      %v1789 = vld [vmem:[%s165 + $0x112] sm:$0xff]
      %v1790 = vld [vmem:[%s165 + $0x11a] sm:$0xff]
      %v1791 = vld [vmem:[%s165 + $0x122] sm:$0xff]
      %v1792 = vld [vmem:[%s165 + $0x12a] sm:$0xff]
      %v1793 = vld [vmem:[%s165 + $0x132] sm:$0xff]
      %v1794 = vld [vmem:[%s165 + $0x13a] sm:$0xff]
      %v1795 = vld [vmem:[%s165 + $0x142] sm:$0xff]
      %v1796 = vld [vmem:[%s165 + $0x14a] sm:$0xff]
      %v1797 = vld [vmem:[%s165 + $0x152] sm:$0xff]
      %v1798 = vld [vmem:[%s165 + $0x15a] sm:$0xff]
      %v1799 = vld [vmem:[%s165 + $0x162] sm:$0xff]
      %v1800 = vld [vmem:[%s165 + $0x16a] sm:$0xff]
      %v1801 = vld [vmem:[%s165 + $0x172] sm:$0xff]
      %v1802 = vld [vmem:[%s165 + $0x17a] sm:$0xff]
      %v1803 = vld [vmem:[%s165 + $0x182] sm:$0xff]
      %v1804 = vld [vmem:[%s165 + $0x18a] sm:$0xff]
      %v1805 = vld [vmem:[%s165 + $0x192] sm:$0xff]
      %v1806 = vld [vmem:[%s165 + $0x19a] sm:$0xff]
      %v1807 = vld [vmem:[%s165 + $0x1a2] sm:$0xff]
      %v1808 = vld [vmem:[%s165 + $0x1aa] sm:$0xff]
      %v1809 = vld [vmem:[%s165 + $0x1b2] sm:$0xff]
      %s1810 = scalar_lea.vmem %s1, 16
      %v1811 = vld [vmem:[%s1810] sm:$0xf]
      %v1813 = vsel %vm274, %v1760, 0
      %v1816 = vsel %vm274, %v1761, 0
      %v1819 = vsel %vm274, %v1762, 0
      %v1822 = vsel %vm274, %v1763, 0
      %v1825 = vsel %vm274, %v1764, 0
      %v1828 = vsel %vm274, %v1765, 0
      %v1831 = vsel %vm274, %v1766, 0
      %v1834 = vsel %vm274, %v1767, 0
      %v1837 = vsel %vm274, %v1768, 0
      %v1840 = vsel %vm274, %v1769, 0
      %v1843 = vsel %vm274, %v1770, 0
      %v1846 = vsel %vm274, %v1771, 0
      %v1849 = vsel %vm274, %v1772, 0
      %v1852 = vsel %vm274, %v1773, 0
      %v1855 = vsel %vm274, %v1774, 0
      %v1858 = vsel %vm274, %v1775, 0
      %v1861 = vsel %vm274, %v1776, 0
      %v1864 = vsel %vm274, %v1777, 0
      %v1867 = vsel %vm274, %v1778, 0
      %v1870 = vsel %vm274, %v1779, 0
      %v1873 = vsel %vm274, %v1780, 0
      %v1876 = vsel %vm274, %v1781, 0
      %v1879 = vsel %vm274, %v1782, 0
      %v1882 = vsel %vm274, %v1783, 0
      %v1885 = vsel %vm274, %v1784, 0
      %v1888 = vsel %vm274, %v1785, 0
      %v1891 = vsel %vm274, %v1786, 0
      %v1894 = vsel %vm274, %v1787, 0
      %v1897 = vsel %vm274, %v1788, 0
      %v1900 = vsel %vm274, %v1789, 0
      %v1903 = vsel %vm274, %v1790, 0
      %v1906 = vsel %vm274, %v1791, 0
      %v1909 = vsel %vm274, %v1792, 0
      %v1912 = vsel %vm274, %v1793, 0
      %v1915 = vsel %vm274, %v1794, 0
      %v1918 = vsel %vm274, %v1795, 0
      %v1921 = vsel %vm274, %v1796, 0
      %v1924 = vsel %vm274, %v1797, 0
      %v1927 = vsel %vm274, %v1798, 0
      %v1930 = vsel %vm274, %v1799, 0
      %v1933 = vsel %vm274, %v1800, 0
      %v1936 = vsel %vm274, %v1801, 0
      %v1939 = vsel %vm274, %v1802, 0
      %v1942 = vsel %vm274, %v1803, 0
      %v1945 = vsel %vm274, %v1804, 0
      %v1948 = vsel %vm274, %v1805, 0
      %v1951 = vsel %vm274, %v1806, 0
      %v1954 = vsel %vm274, %v1807, 0
      %v1957 = vsel %vm274, %v1808, 0
      %v1960 = vsel %vm274, %v1809, 0
      %v1963 = vsel %vm425, %v1811, 0
      %1965 = vmatpush.msra.mxu0 0.0
      %1966 = vmatpush.msra.mxu0 0.0
      %1967 = vmatpush.msra.mxu0 0.0
      %1968 = vmatpush.msra.mxu0 0.0
      %1969 = vmatpush.msra.mxu0 0.0
      %1970 = vmatpush.msra.mxu0 0.0
      %1971 = vmatpush.msra.mxu0 0.0
      %1972 = vmatpush.msra.mxu0 0.0
      %1973 = vmatpush.msra.mxu0 0.0
      %1974 = vmatpush.msra.mxu0 0.0
      %1975 = vmatpush.msra.mxu0 0.0
      %1976 = vmatpush.msra.mxu0 0.0
      %1977 = vmatpush.msra.mxu0 0.0
      %1978 = vmatpush.msra.mxu0 0.0
      %1979 = vmatpush.msra.mxu0 0.0
      %1980 = vmatpush.msra.mxu0 %v1963
      %1981 = vmatmul.f32.gmra.mxu0 %v1813
      %v1982 = vpop.f32.mrf.mxu0
      %v1983 = vadd.f32 0.0, %v1982
      %1984 = vmatmul.f32.gmra.mxu0 %v1816
      %v1985 = vpop.f32.mrf.mxu0
      %v1986 = vadd.f32 0.0, %v1985
      %1987 = vmatmul.f32.gmra.mxu0 %v1819
      %v1988 = vpop.f32.mrf.mxu0
      %v1989 = vadd.f32 0.0, %v1988
      %1990 = vmatmul.f32.gmra.mxu0 %v1822
      %v1991 = vpop.f32.mrf.mxu0
      %v1992 = vadd.f32 0.0, %v1991
      %1993 = vmatmul.f32.gmra.mxu0 %v1825
      %v1994 = vpop.f32.mrf.mxu0
      %v1995 = vadd.f32 0.0, %v1994
      %1996 = vmatmul.f32.gmra.mxu0 %v1828
      %v1997 = vpop.f32.mrf.mxu0
      %v1998 = vadd.f32 0.0, %v1997
      %1999 = vmatmul.f32.gmra.mxu0 %v1831
      %v2000 = vpop.f32.mrf.mxu0
      %v2001 = vadd.f32 0.0, %v2000
      %2002 = vmatmul.f32.gmra.mxu0 %v1834
      %v2003 = vpop.f32.mrf.mxu0
      %v2004 = vadd.f32 0.0, %v2003
      %2005 = vmatmul.f32.gmra.mxu0 %v1837
      %v2006 = vpop.f32.mrf.mxu0
      %v2007 = vadd.f32 0.0, %v2006
      %2008 = vmatmul.f32.gmra.mxu0 %v1840
      %v2009 = vpop.f32.mrf.mxu0
      %v2010 = vadd.f32 0.0, %v2009
      %2011 = vmatmul.f32.gmra.mxu0 %v1843
      %v2012 = vpop.f32.mrf.mxu0
      %v2013 = vadd.f32 0.0, %v2012
      %2014 = vmatmul.f32.gmra.mxu0 %v1846
      %v2015 = vpop.f32.mrf.mxu0
      %v2016 = vadd.f32 0.0, %v2015
      %2017 = vmatmul.f32.gmra.mxu0 %v1849
      %v2018 = vpop.f32.mrf.mxu0
      %v2019 = vadd.f32 0.0, %v2018
      %2020 = vmatmul.f32.gmra.mxu0 %v1852
      %v2021 = vpop.f32.mrf.mxu0
      %v2022 = vadd.f32 0.0, %v2021
      %2023 = vmatmul.f32.gmra.mxu0 %v1855
      %v2024 = vpop.f32.mrf.mxu0
      %v2025 = vadd.f32 0.0, %v2024
      %2026 = vmatmul.f32.gmra.mxu0 %v1858
      %v2027 = vpop.f32.mrf.mxu0
      %v2028 = vadd.f32 0.0, %v2027
      %2029 = vmatmul.f32.gmra.mxu0 %v1861
      %v2030 = vpop.f32.mrf.mxu0
      %v2031 = vadd.f32 0.0, %v2030
      %2032 = vmatmul.f32.gmra.mxu0 %v1864
      %v2033 = vpop.f32.mrf.mxu0
      %v2034 = vadd.f32 0.0, %v2033
      %2035 = vmatmul.f32.gmra.mxu0 %v1867
      %v2036 = vpop.f32.mrf.mxu0
      %v2037 = vadd.f32 0.0, %v2036
      %2038 = vmatmul.f32.gmra.mxu0 %v1870
      %v2039 = vpop.f32.mrf.mxu0
      %v2040 = vadd.f32 0.0, %v2039
      %2041 = vmatmul.f32.gmra.mxu0 %v1873
      %v2042 = vpop.f32.mrf.mxu0
      %v2043 = vadd.f32 0.0, %v2042
      %2044 = vmatmul.f32.gmra.mxu0 %v1876
      %v2045 = vpop.f32.mrf.mxu0
      %v2046 = vadd.f32 0.0, %v2045
      %2047 = vmatmul.f32.gmra.mxu0 %v1879
      %v2048 = vpop.f32.mrf.mxu0
      %v2049 = vadd.f32 0.0, %v2048
      %2050 = vmatmul.f32.gmra.mxu0 %v1882
      %v2051 = vpop.f32.mrf.mxu0
      %v2052 = vadd.f32 0.0, %v2051
      %2053 = vmatmul.f32.gmra.mxu0 %v1885
      %v2054 = vpop.f32.mrf.mxu0
      %v2055 = vadd.f32 0.0, %v2054
      %2056 = vmatmul.f32.gmra.mxu0 %v1888
      %v2057 = vpop.f32.mrf.mxu0
      %v2058 = vadd.f32 0.0, %v2057
      %2059 = vmatmul.f32.gmra.mxu0 %v1891
      %v2060 = vpop.f32.mrf.mxu0
      %v2061 = vadd.f32 0.0, %v2060
      %2062 = vmatmul.f32.gmra.mxu0 %v1894
      %v2063 = vpop.f32.mrf.mxu0
      %v2064 = vadd.f32 0.0, %v2063
      %2065 = vmatmul.f32.gmra.mxu0 %v1897
      %v2066 = vpop.f32.mrf.mxu0
      %v2067 = vadd.f32 0.0, %v2066
      %2068 = vmatmul.f32.gmra.mxu0 %v1900
      %v2069 = vpop.f32.mrf.mxu0
      %v2070 = vadd.f32 0.0, %v2069
      %2071 = vmatmul.f32.gmra.mxu0 %v1903
      %v2072 = vpop.f32.mrf.mxu0
      %v2073 = vadd.f32 0.0, %v2072
      %2074 = vmatmul.f32.gmra.mxu0 %v1906
      %v2075 = vpop.f32.mrf.mxu0
      %v2076 = vadd.f32 0.0, %v2075
      %2077 = vmatmul.f32.gmra.mxu0 %v1909
      %v2078 = vpop.f32.mrf.mxu0
      %v2079 = vadd.f32 0.0, %v2078
      %2080 = vmatmul.f32.gmra.mxu0 %v1912
      %v2081 = vpop.f32.mrf.mxu0
      %v2082 = vadd.f32 0.0, %v2081
      %2083 = vmatmul.f32.gmra.mxu0 %v1915
      %v2084 = vpop.f32.mrf.mxu0
      %v2085 = vadd.f32 0.0, %v2084
      %2086 = vmatmul.f32.gmra.mxu0 %v1918
      %v2087 = vpop.f32.mrf.mxu0
      %v2088 = vadd.f32 0.0, %v2087
      %2089 = vmatmul.f32.gmra.mxu0 %v1921
      %v2090 = vpop.f32.mrf.mxu0
      %v2091 = vadd.f32 0.0, %v2090
      %2092 = vmatmul.f32.gmra.mxu0 %v1924
      %v2093 = vpop.f32.mrf.mxu0
      %v2094 = vadd.f32 0.0, %v2093
      %2095 = vmatmul.f32.gmra.mxu0 %v1927
      %v2096 = vpop.f32.mrf.mxu0
      %v2097 = vadd.f32 0.0, %v2096
      %2098 = vmatmul.f32.gmra.mxu0 %v1930
      %v2099 = vpop.f32.mrf.mxu0
      %v2100 = vadd.f32 0.0, %v2099
      %2101 = vmatmul.f32.gmra.mxu0 %v1933
      %v2102 = vpop.f32.mrf.mxu0
      %v2103 = vadd.f32 0.0, %v2102
      %2104 = vmatmul.f32.gmra.mxu0 %v1936
      %v2105 = vpop.f32.mrf.mxu0
      %v2106 = vadd.f32 0.0, %v2105
      %2107 = vmatmul.f32.gmra.mxu0 %v1939
      %v2108 = vpop.f32.mrf.mxu0
      %v2109 = vadd.f32 0.0, %v2108
      %2110 = vmatmul.f32.gmra.mxu0 %v1942
      %v2111 = vpop.f32.mrf.mxu0
      %v2112 = vadd.f32 0.0, %v2111
      %2113 = vmatmul.f32.gmra.mxu0 %v1945
      %v2114 = vpop.f32.mrf.mxu0
      %v2115 = vadd.f32 0.0, %v2114
      %2116 = vmatmul.f32.gmra.mxu0 %v1948
      %v2117 = vpop.f32.mrf.mxu0
      %v2118 = vadd.f32 0.0, %v2117
      %2119 = vmatmul.f32.gmra.mxu0 %v1951
      %v2120 = vpop.f32.mrf.mxu0
      %v2121 = vadd.f32 0.0, %v2120
      %2122 = vmatmul.f32.gmra.mxu0 %v1954
      %v2123 = vpop.f32.mrf.mxu0
      %v2124 = vadd.f32 0.0, %v2123
      %2125 = vmatmul.f32.gmra.mxu0 %v1957
      %v2126 = vpop.f32.mrf.mxu0
      %v2127 = vadd.f32 0.0, %v2126
      %2128 = vmatmul.f32.gmra.mxu0 %v1960
      %v2129 = vpop.f32.mrf.mxu0
      %v2130 = vadd.f32 0.0, %v2129
      %2131 = vdwg.mxu0
      %v2132 = vadd.f32 %v1710, %v1983
      %v2133 = vadd.f32 %v1711, %v1986
      %v2134 = vadd.f32 %v1712, %v1989
      %v2135 = vadd.f32 %v1713, %v1992
      %v2136 = vadd.f32 %v1714, %v1995
      %v2137 = vadd.f32 %v1715, %v1998
      %v2138 = vadd.f32 %v1716, %v2001
      %v2139 = vadd.f32 %v1717, %v2004
      %v2140 = vadd.f32 %v1718, %v2007
      %v2141 = vadd.f32 %v1719, %v2010
      %v2142 = vadd.f32 %v1720, %v2013
      %v2143 = vadd.f32 %v1721, %v2016
      %v2144 = vadd.f32 %v1722, %v2019
      %v2145 = vadd.f32 %v1723, %v2022
      %v2146 = vadd.f32 %v1724, %v2025
      %v2147 = vadd.f32 %v1725, %v2028
      %v2148 = vadd.f32 %v1726, %v2031
      %v2149 = vadd.f32 %v1727, %v2034
      %v2150 = vadd.f32 %v1728, %v2037
      %v2151 = vadd.f32 %v1729, %v2040
      %v2152 = vadd.f32 %v1730, %v2043
      %v2153 = vadd.f32 %v1731, %v2046
      %v2154 = vadd.f32 %v1732, %v2049
      %v2155 = vadd.f32 %v1733, %v2052
      %v2156 = vadd.f32 %v1734, %v2055
      %v2157 = vadd.f32 %v1735, %v2058
      %v2158 = vadd.f32 %v1736, %v2061
      %v2159 = vadd.f32 %v1737, %v2064
      %v2160 = vadd.f32 %v1738, %v2067
      %v2161 = vadd.f32 %v1739, %v2070
      %v2162 = vadd.f32 %v1740, %v2073
      %v2163 = vadd.f32 %v1741, %v2076
      %v2164 = vadd.f32 %v1742, %v2079
      %v2165 = vadd.f32 %v1743, %v2082
      %v2166 = vadd.f32 %v1744, %v2085
      %v2167 = vadd.f32 %v1745, %v2088
      %v2168 = vadd.f32 %v1746, %v2091
      %v2169 = vadd.f32 %v1747, %v2094
      %v2170 = vadd.f32 %v1748, %v2097
      %v2171 = vadd.f32 %v1749, %v2100
      %v2172 = vadd.f32 %v1750, %v2103
      %v2173 = vadd.f32 %v1751, %v2106
      %v2174 = vadd.f32 %v1752, %v2109
      %v2175 = vadd.f32 %v1753, %v2112
      %v2176 = vadd.f32 %v1754, %v2115
      %v2177 = vadd.f32 %v1755, %v2118
      %v2178 = vadd.f32 %v1756, %v2121
      %v2179 = vadd.f32 %v1757, %v2124
      %v2180 = vadd.f32 %v1758, %v2127
      %v2181 = vadd.f32 %v1759, %v2130
      %v2182 = vld [vmem:[%s165 + $0x2c] sm:$0xff]
      %v2183 = vld [vmem:[%s165 + $0x34] sm:$0xff]
      %v2184 = vld [vmem:[%s165 + $0x3c] sm:$0xff]
      %v2185 = vld [vmem:[%s165 + $0x44] sm:$0xff]
      %v2186 = vld [vmem:[%s165 + $0x4c] sm:$0xff]
      %v2187 = vld [vmem:[%s165 + $0x54] sm:$0xff]
      %v2188 = vld [vmem:[%s165 + $0x5c] sm:$0xff]
      %v2189 = vld [vmem:[%s165 + $0x64] sm:$0xff]
      %v2190 = vld [vmem:[%s165 + $0x6c] sm:$0xff]
      %v2191 = vld [vmem:[%s165 + $0x74] sm:$0xff]
      %v2192 = vld [vmem:[%s165 + $0x7c] sm:$0xff]
      %v2193 = vld [vmem:[%s165 + $0x84] sm:$0xff]
      %v2194 = vld [vmem:[%s165 + $0x8c] sm:$0xff]
      %v2195 = vld [vmem:[%s165 + $0x94] sm:$0xff]
      %v2196 = vld [vmem:[%s165 + $0x9c] sm:$0xff]
      %v2197 = vld [vmem:[%s165 + $0xa4] sm:$0xff]
      %v2198 = vld [vmem:[%s165 + $0xac] sm:$0xff]
      %v2199 = vld [vmem:[%s165 + $0xb4] sm:$0xff]
      %v2200 = vld [vmem:[%s165 + $0xbc] sm:$0xff]
      %v2201 = vld [vmem:[%s165 + $0xc4] sm:$0xff]
      %v2202 = vld [vmem:[%s165 + $0xcc] sm:$0xff]
      %v2203 = vld [vmem:[%s165 + $0xd4] sm:$0xff]
      %v2204 = vld [vmem:[%s165 + $0xdc] sm:$0xff]
      %v2205 = vld [vmem:[%s165 + $0xe4] sm:$0xff]
      %v2206 = vld [vmem:[%s165 + $0xec] sm:$0xff]
      %v2207 = vld [vmem:[%s165 + $0xf4] sm:$0xff]
      %v2208 = vld [vmem:[%s165 + $0xfc] sm:$0xff]
      %v2209 = vld [vmem:[%s165 + $0x104] sm:$0xff]
      %v2210 = vld [vmem:[%s165 + $0x10c] sm:$0xff]
      %v2211 = vld [vmem:[%s165 + $0x114] sm:$0xff]
      %v2212 = vld [vmem:[%s165 + $0x11c] sm:$0xff]
      %v2213 = vld [vmem:[%s165 + $0x124] sm:$0xff]
      %v2214 = vld [vmem:[%s165 + $0x12c] sm:$0xff]
      %v2215 = vld [vmem:[%s165 + $0x134] sm:$0xff]
      %v2216 = vld [vmem:[%s165 + $0x13c] sm:$0xff]
      %v2217 = vld [vmem:[%s165 + $0x144] sm:$0xff]
      %v2218 = vld [vmem:[%s165 + $0x14c] sm:$0xff]
      %v2219 = vld [vmem:[%s165 + $0x154] sm:$0xff]
      %v2220 = vld [vmem:[%s165 + $0x15c] sm:$0xff]
      %v2221 = vld [vmem:[%s165 + $0x164] sm:$0xff]
      %v2222 = vld [vmem:[%s165 + $0x16c] sm:$0xff]
      %v2223 = vld [vmem:[%s165 + $0x174] sm:$0xff]
      %v2224 = vld [vmem:[%s165 + $0x17c] sm:$0xff]
      %v2225 = vld [vmem:[%s165 + $0x184] sm:$0xff]
      %v2226 = vld [vmem:[%s165 + $0x18c] sm:$0xff]
      %v2227 = vld [vmem:[%s165 + $0x194] sm:$0xff]
      %v2228 = vld [vmem:[%s165 + $0x19c] sm:$0xff]
      %v2229 = vld [vmem:[%s165 + $0x1a4] sm:$0xff]
      %v2230 = vld [vmem:[%s165 + $0x1ac] sm:$0xff]
      %v2231 = vld [vmem:[%s165 + $0x1b4] sm:$0xff]
      %s2232 = scalar_lea.vmem %s1, 20
      %v2233 = vld [vmem:[%s2232] sm:$0xf]
      %v2235 = vsel %vm274, %v2182, 0
      %v2238 = vsel %vm274, %v2183, 0
      %v2241 = vsel %vm274, %v2184, 0
      %v2244 = vsel %vm274, %v2185, 0
      %v2247 = vsel %vm274, %v2186, 0
      %v2250 = vsel %vm274, %v2187, 0
      %v2253 = vsel %vm274, %v2188, 0
      %v2256 = vsel %vm274, %v2189, 0
      %v2259 = vsel %vm274, %v2190, 0
      %v2262 = vsel %vm274, %v2191, 0
      %v2265 = vsel %vm274, %v2192, 0
      %v2268 = vsel %vm274, %v2193, 0
      %v2271 = vsel %vm274, %v2194, 0
      %v2274 = vsel %vm274, %v2195, 0
      %v2277 = vsel %vm274, %v2196, 0
      %v2280 = vsel %vm274, %v2197, 0
      %v2283 = vsel %vm274, %v2198, 0
      %v2286 = vsel %vm274, %v2199, 0
      %v2289 = vsel %vm274, %v2200, 0
      %v2292 = vsel %vm274, %v2201, 0
      %v2295 = vsel %vm274, %v2202, 0
      %v2298 = vsel %vm274, %v2203, 0
      %v2301 = vsel %vm274, %v2204, 0
      %v2304 = vsel %vm274, %v2205, 0
      %v2307 = vsel %vm274, %v2206, 0
      %v2310 = vsel %vm274, %v2207, 0
      %v2313 = vsel %vm274, %v2208, 0
      %v2316 = vsel %vm274, %v2209, 0
      %v2319 = vsel %vm274, %v2210, 0
      %v2322 = vsel %vm274, %v2211, 0
      %v2325 = vsel %vm274, %v2212, 0
      %v2328 = vsel %vm274, %v2213, 0
      %v2331 = vsel %vm274, %v2214, 0
      %v2334 = vsel %vm274, %v2215, 0
      %v2337 = vsel %vm274, %v2216, 0
      %v2340 = vsel %vm274, %v2217, 0
      %v2343 = vsel %vm274, %v2218, 0
      %v2346 = vsel %vm274, %v2219, 0
      %v2349 = vsel %vm274, %v2220, 0
      %v2352 = vsel %vm274, %v2221, 0
      %v2355 = vsel %vm274, %v2222, 0
      %v2358 = vsel %vm274, %v2223, 0
      %v2361 = vsel %vm274, %v2224, 0
      %v2364 = vsel %vm274, %v2225, 0
      %v2367 = vsel %vm274, %v2226, 0
      %v2370 = vsel %vm274, %v2227, 0
      %v2373 = vsel %vm274, %v2228, 0
      %v2376 = vsel %vm274, %v2229, 0
      %v2379 = vsel %vm274, %v2230, 0
      %v2382 = vsel %vm274, %v2231, 0
      %v2385 = vsel %vm425, %v2233, 0
      %2387 = vmatpush.msra.mxu0 0.0
      %2388 = vmatpush.msra.mxu0 0.0
      %2389 = vmatpush.msra.mxu0 0.0
      %2390 = vmatpush.msra.mxu0 0.0
      %2391 = vmatpush.msra.mxu0 0.0
      %2392 = vmatpush.msra.mxu0 0.0
      %2393 = vmatpush.msra.mxu0 0.0
      %2394 = vmatpush.msra.mxu0 0.0
      %2395 = vmatpush.msra.mxu0 0.0
      %2396 = vmatpush.msra.mxu0 0.0
      %2397 = vmatpush.msra.mxu0 0.0
      %2398 = vmatpush.msra.mxu0 0.0
      %2399 = vmatpush.msra.mxu0 0.0
      %2400 = vmatpush.msra.mxu0 0.0
      %2401 = vmatpush.msra.mxu0 0.0
      %2402 = vmatpush.msra.mxu0 %v2385
      %2403 = vmatmul.f32.gmra.mxu0 %v2235
      %v2404 = vpop.f32.mrf.mxu0
      %v2405 = vadd.f32 0.0, %v2404
      %2406 = vmatmul.f32.gmra.mxu0 %v2238
      %v2407 = vpop.f32.mrf.mxu0
      %v2408 = vadd.f32 0.0, %v2407
      %2409 = vmatmul.f32.gmra.mxu0 %v2241
      %v2410 = vpop.f32.mrf.mxu0
      %v2411 = vadd.f32 0.0, %v2410
      %2412 = vmatmul.f32.gmra.mxu0 %v2244
      %v2413 = vpop.f32.mrf.mxu0
      %v2414 = vadd.f32 0.0, %v2413
      %2415 = vmatmul.f32.gmra.mxu0 %v2247
      %v2416 = vpop.f32.mrf.mxu0
      %v2417 = vadd.f32 0.0, %v2416
      %2418 = vmatmul.f32.gmra.mxu0 %v2250
      %v2419 = vpop.f32.mrf.mxu0
      %v2420 = vadd.f32 0.0, %v2419
      %2421 = vmatmul.f32.gmra.mxu0 %v2253
      %v2422 = vpop.f32.mrf.mxu0
      %v2423 = vadd.f32 0.0, %v2422
      %2424 = vmatmul.f32.gmra.mxu0 %v2256
      %v2425 = vpop.f32.mrf.mxu0
      %v2426 = vadd.f32 0.0, %v2425
      %2427 = vmatmul.f32.gmra.mxu0 %v2259
      %v2428 = vpop.f32.mrf.mxu0
      %v2429 = vadd.f32 0.0, %v2428
      %2430 = vmatmul.f32.gmra.mxu0 %v2262
      %v2431 = vpop.f32.mrf.mxu0
      %v2432 = vadd.f32 0.0, %v2431
      %2433 = vmatmul.f32.gmra.mxu0 %v2265
      %v2434 = vpop.f32.mrf.mxu0
      %v2435 = vadd.f32 0.0, %v2434
      %2436 = vmatmul.f32.gmra.mxu0 %v2268
      %v2437 = vpop.f32.mrf.mxu0
      %v2438 = vadd.f32 0.0, %v2437
      %2439 = vmatmul.f32.gmra.mxu0 %v2271
      %v2440 = vpop.f32.mrf.mxu0
      %v2441 = vadd.f32 0.0, %v2440
      %2442 = vmatmul.f32.gmra.mxu0 %v2274
      %v2443 = vpop.f32.mrf.mxu0
      %v2444 = vadd.f32 0.0, %v2443
      %2445 = vmatmul.f32.gmra.mxu0 %v2277
      %v2446 = vpop.f32.mrf.mxu0
      %v2447 = vadd.f32 0.0, %v2446
      %2448 = vmatmul.f32.gmra.mxu0 %v2280
      %v2449 = vpop.f32.mrf.mxu0
      %v2450 = vadd.f32 0.0, %v2449
      %2451 = vmatmul.f32.gmra.mxu0 %v2283
      %v2452 = vpop.f32.mrf.mxu0
      %v2453 = vadd.f32 0.0, %v2452
      %2454 = vmatmul.f32.gmra.mxu0 %v2286
      %v2455 = vpop.f32.mrf.mxu0
      %v2456 = vadd.f32 0.0, %v2455
      %2457 = vmatmul.f32.gmra.mxu0 %v2289
      %v2458 = vpop.f32.mrf.mxu0
      %v2459 = vadd.f32 0.0, %v2458
      %2460 = vmatmul.f32.gmra.mxu0 %v2292
      %v2461 = vpop.f32.mrf.mxu0
      %v2462 = vadd.f32 0.0, %v2461
      %2463 = vmatmul.f32.gmra.mxu0 %v2295
      %v2464 = vpop.f32.mrf.mxu0
      %v2465 = vadd.f32 0.0, %v2464
      %2466 = vmatmul.f32.gmra.mxu0 %v2298
      %v2467 = vpop.f32.mrf.mxu0
      %v2468 = vadd.f32 0.0, %v2467
      %2469 = vmatmul.f32.gmra.mxu0 %v2301
      %v2470 = vpop.f32.mrf.mxu0
      %v2471 = vadd.f32 0.0, %v2470
      %2472 = vmatmul.f32.gmra.mxu0 %v2304
      %v2473 = vpop.f32.mrf.mxu0
      %v2474 = vadd.f32 0.0, %v2473
      %2475 = vmatmul.f32.gmra.mxu0 %v2307
      %v2476 = vpop.f32.mrf.mxu0
      %v2477 = vadd.f32 0.0, %v2476
      %2478 = vmatmul.f32.gmra.mxu0 %v2310
      %v2479 = vpop.f32.mrf.mxu0
      %v2480 = vadd.f32 0.0, %v2479
      %2481 = vmatmul.f32.gmra.mxu0 %v2313
      %v2482 = vpop.f32.mrf.mxu0
      %v2483 = vadd.f32 0.0, %v2482
      %2484 = vmatmul.f32.gmra.mxu0 %v2316
      %v2485 = vpop.f32.mrf.mxu0
      %v2486 = vadd.f32 0.0, %v2485
      %2487 = vmatmul.f32.gmra.mxu0 %v2319
      %v2488 = vpop.f32.mrf.mxu0
      %v2489 = vadd.f32 0.0, %v2488
      %2490 = vmatmul.f32.gmra.mxu0 %v2322
      %v2491 = vpop.f32.mrf.mxu0
      %v2492 = vadd.f32 0.0, %v2491
      %2493 = vmatmul.f32.gmra.mxu0 %v2325
      %v2494 = vpop.f32.mrf.mxu0
      %v2495 = vadd.f32 0.0, %v2494
      %2496 = vmatmul.f32.gmra.mxu0 %v2328
      %v2497 = vpop.f32.mrf.mxu0
      %v2498 = vadd.f32 0.0, %v2497
      %2499 = vmatmul.f32.gmra.mxu0 %v2331
      %v2500 = vpop.f32.mrf.mxu0
      %v2501 = vadd.f32 0.0, %v2500
      %2502 = vmatmul.f32.gmra.mxu0 %v2334
      %v2503 = vpop.f32.mrf.mxu0
      %v2504 = vadd.f32 0.0, %v2503
      %2505 = vmatmul.f32.gmra.mxu0 %v2337
      %v2506 = vpop.f32.mrf.mxu0
      %v2507 = vadd.f32 0.0, %v2506
      %2508 = vmatmul.f32.gmra.mxu0 %v2340
      %v2509 = vpop.f32.mrf.mxu0
      %v2510 = vadd.f32 0.0, %v2509
      %2511 = vmatmul.f32.gmra.mxu0 %v2343
      %v2512 = vpop.f32.mrf.mxu0
      %v2513 = vadd.f32 0.0, %v2512
      %2514 = vmatmul.f32.gmra.mxu0 %v2346
      %v2515 = vpop.f32.mrf.mxu0
      %v2516 = vadd.f32 0.0, %v2515
      %2517 = vmatmul.f32.gmra.mxu0 %v2349
      %v2518 = vpop.f32.mrf.mxu0
      %v2519 = vadd.f32 0.0, %v2518
      %2520 = vmatmul.f32.gmra.mxu0 %v2352
      %v2521 = vpop.f32.mrf.mxu0
      %v2522 = vadd.f32 0.0, %v2521
      %2523 = vmatmul.f32.gmra.mxu0 %v2355
      %v2524 = vpop.f32.mrf.mxu0
      %v2525 = vadd.f32 0.0, %v2524
      %2526 = vmatmul.f32.gmra.mxu0 %v2358
      %v2527 = vpop.f32.mrf.mxu0
      %v2528 = vadd.f32 0.0, %v2527
      %2529 = vmatmul.f32.gmra.mxu0 %v2361
      %v2530 = vpop.f32.mrf.mxu0
      %v2531 = vadd.f32 0.0, %v2530
      %2532 = vmatmul.f32.gmra.mxu0 %v2364
      %v2533 = vpop.f32.mrf.mxu0
      %v2534 = vadd.f32 0.0, %v2533
      %2535 = vmatmul.f32.gmra.mxu0 %v2367
      %v2536 = vpop.f32.mrf.mxu0
      %v2537 = vadd.f32 0.0, %v2536
      %2538 = vmatmul.f32.gmra.mxu0 %v2370
      %v2539 = vpop.f32.mrf.mxu0
      %v2540 = vadd.f32 0.0, %v2539
      %2541 = vmatmul.f32.gmra.mxu0 %v2373
      %v2542 = vpop.f32.mrf.mxu0
      %v2543 = vadd.f32 0.0, %v2542
      %2544 = vmatmul.f32.gmra.mxu0 %v2376
      %v2545 = vpop.f32.mrf.mxu0
      %v2546 = vadd.f32 0.0, %v2545
      %2547 = vmatmul.f32.gmra.mxu0 %v2379
      %v2548 = vpop.f32.mrf.mxu0
      %v2549 = vadd.f32 0.0, %v2548
      %2550 = vmatmul.f32.gmra.mxu0 %v2382
      %v2551 = vpop.f32.mrf.mxu0
      %v2552 = vadd.f32 0.0, %v2551
      %2553 = vdwg.mxu0
      %v2554 = vadd.f32 %v2132, %v2405
      %v2555 = vadd.f32 %v2133, %v2408
      %v2556 = vadd.f32 %v2134, %v2411
      %v2557 = vadd.f32 %v2135, %v2414
      %v2558 = vadd.f32 %v2136, %v2417
      %v2559 = vadd.f32 %v2137, %v2420
      %v2560 = vadd.f32 %v2138, %v2423
      %v2561 = vadd.f32 %v2139, %v2426
      %v2562 = vadd.f32 %v2140, %v2429
      %v2563 = vadd.f32 %v2141, %v2432
      %v2564 = vadd.f32 %v2142, %v2435
      %v2565 = vadd.f32 %v2143, %v2438
      %v2566 = vadd.f32 %v2144, %v2441
      %v2567 = vadd.f32 %v2145, %v2444
      %v2568 = vadd.f32 %v2146, %v2447
      %v2569 = vadd.f32 %v2147, %v2450
      %v2570 = vadd.f32 %v2148, %v2453
      %v2571 = vadd.f32 %v2149, %v2456
      %v2572 = vadd.f32 %v2150, %v2459
      %v2573 = vadd.f32 %v2151, %v2462
      %v2574 = vadd.f32 %v2152, %v2465
      %v2575 = vadd.f32 %v2153, %v2468
      %v2576 = vadd.f32 %v2154, %v2471
      %v2577 = vadd.f32 %v2155, %v2474
      %v2578 = vadd.f32 %v2156, %v2477
      %v2579 = vadd.f32 %v2157, %v2480
      %v2580 = vadd.f32 %v2158, %v2483
      %v2581 = vadd.f32 %v2159, %v2486
      %v2582 = vadd.f32 %v2160, %v2489
      %v2583 = vadd.f32 %v2161, %v2492
      %v2584 = vadd.f32 %v2162, %v2495
      %v2585 = vadd.f32 %v2163, %v2498
      %v2586 = vadd.f32 %v2164, %v2501
      %v2587 = vadd.f32 %v2165, %v2504
      %v2588 = vadd.f32 %v2166, %v2507
      %v2589 = vadd.f32 %v2167, %v2510
      %v2590 = vadd.f32 %v2168, %v2513
      %v2591 = vadd.f32 %v2169, %v2516
      %v2592 = vadd.f32 %v2170, %v2519
      %v2593 = vadd.f32 %v2171, %v2522
      %v2594 = vadd.f32 %v2172, %v2525
      %v2595 = vadd.f32 %v2173, %v2528
      %v2596 = vadd.f32 %v2174, %v2531
      %v2597 = vadd.f32 %v2175, %v2534
      %v2598 = vadd.f32 %v2176, %v2537
      %v2599 = vadd.f32 %v2177, %v2540
      %v2600 = vadd.f32 %v2178, %v2543
      %v2601 = vadd.f32 %v2179, %v2546
      %v2602 = vadd.f32 %v2180, %v2549
      %v2603 = vadd.f32 %v2181, %v2552
      %v2604 = vld [vmem:[%s165 + $0x50] sm:$0xff]
      %v2605 = vld [vmem:[%s165 + $0x58] sm:$0xff]
      %v2606 = vld [vmem:[%s165 + $0x60] sm:$0xff]
      %v2607 = vld [vmem:[%s165 + $0x68] sm:$0xff]
      %v2608 = vld [vmem:[%s165 + $0x70] sm:$0xff]
      %v2609 = vld [vmem:[%s165 + $0x78] sm:$0xff]
      %v2610 = vld [vmem:[%s165 + $0x80] sm:$0xff]
      %v2611 = vld [vmem:[%s165 + $0x88] sm:$0xff]
      %v2612 = vld [vmem:[%s165 + $0x90] sm:$0xff]
      %v2613 = vld [vmem:[%s165 + $0x98] sm:$0xff]
      %v2614 = vld [vmem:[%s165 + $0xa0] sm:$0xff]
      %v2615 = vld [vmem:[%s165 + $0xa8] sm:$0xff]
      %v2616 = vld [vmem:[%s165 + $0xb0] sm:$0xff]
      %v2617 = vld [vmem:[%s165 + $0xb8] sm:$0xff]
      %v2618 = vld [vmem:[%s165 + $0xc0] sm:$0xff]
      %v2619 = vld [vmem:[%s165 + $0xc8] sm:$0xff]
      %v2620 = vld [vmem:[%s165 + $0xd0] sm:$0xff]
      %v2621 = vld [vmem:[%s165 + $0xd8] sm:$0xff]
      %v2622 = vld [vmem:[%s165 + $0xe0] sm:$0xff]
      %v2623 = vld [vmem:[%s165 + $0xe8] sm:$0xff]
      %v2624 = vld [vmem:[%s165 + $0xf0] sm:$0xff]
      %v2625 = vld [vmem:[%s165 + $0xf8] sm:$0xff]
      %v2626 = vld [vmem:[%s165 + $0x100] sm:$0xff]
      %v2627 = vld [vmem:[%s165 + $0x108] sm:$0xff]
      %v2628 = vld [vmem:[%s165 + $0x110] sm:$0xff]
      %v2629 = vld [vmem:[%s165 + $0x118] sm:$0xff]
      %v2630 = vld [vmem:[%s165 + $0x120] sm:$0xff]
      %v2631 = vld [vmem:[%s165 + $0x128] sm:$0xff]
      %v2632 = vld [vmem:[%s165 + $0x130] sm:$0xff]
      %v2633 = vld [vmem:[%s165 + $0x138] sm:$0xff]
      %v2634 = vld [vmem:[%s165 + $0x140] sm:$0xff]
      %v2635 = vld [vmem:[%s165 + $0x148] sm:$0xff]
      %v2636 = vld [vmem:[%s165 + $0x150] sm:$0xff]
      %v2637 = vld [vmem:[%s165 + $0x158] sm:$0xff]
      %v2638 = vld [vmem:[%s165 + $0x160] sm:$0xff]
      %v2639 = vld [vmem:[%s165 + $0x168] sm:$0xff]
      %v2640 = vld [vmem:[%s165 + $0x170] sm:$0xff]
      %v2641 = vld [vmem:[%s165 + $0x178] sm:$0xff]
      %v2642 = vld [vmem:[%s165 + $0x180] sm:$0xff]
      %v2643 = vld [vmem:[%s165 + $0x188] sm:$0xff]
      %v2644 = vld [vmem:[%s165 + $0x190] sm:$0xff]
      %v2645 = vld [vmem:[%s165 + $0x198] sm:$0xff]
      %v2646 = vld [vmem:[%s165 + $0x1a0] sm:$0xff]
      %v2647 = vld [vmem:[%s165 + $0x1a8] sm:$0xff]
      %v2648 = vld [vmem:[%s165 + $0x1b0] sm:$0xff]
      %v2649 = vld [vmem:[%s165 + $0x1b8] sm:$0xff]
      %v2650 = vld [vmem:[%s165 + $0x1c0] sm:$0xff]
      %v2651 = vld [vmem:[%s165 + $0x1c8] sm:$0xff]
      %v2652 = vld [vmem:[%s165 + $0x1d0] sm:$0xff]
      %v2653 = vld [vmem:[%s165 + $0x1d8] sm:$0xff]
      %s2654 = scalar_lea.vmem %s1, 24
      %v2655 = vld [vmem:[%s2654] sm:$0xf]
      %v2657 = vsel %vm274, %v2604, 0
      %v2660 = vsel %vm274, %v2605, 0
      %v2663 = vsel %vm274, %v2606, 0
      %v2666 = vsel %vm274, %v2607, 0
      %v2669 = vsel %vm274, %v2608, 0
      %v2672 = vsel %vm274, %v2609, 0
      %v2675 = vsel %vm274, %v2610, 0
      %v2678 = vsel %vm274, %v2611, 0
      %v2681 = vsel %vm274, %v2612, 0
      %v2684 = vsel %vm274, %v2613, 0
      %v2687 = vsel %vm274, %v2614, 0
      %v2690 = vsel %vm274, %v2615, 0
      %v2693 = vsel %vm274, %v2616, 0
      %v2696 = vsel %vm274, %v2617, 0
      %v2699 = vsel %vm274, %v2618, 0
      %v2702 = vsel %vm274, %v2619, 0
      %v2705 = vsel %vm274, %v2620, 0
      %v2708 = vsel %vm274, %v2621, 0
      %v2711 = vsel %vm274, %v2622, 0
      %v2714 = vsel %vm274, %v2623, 0
      %v2717 = vsel %vm274, %v2624, 0
      %v2720 = vsel %vm274, %v2625, 0
      %v2723 = vsel %vm274, %v2626, 0
      %v2726 = vsel %vm274, %v2627, 0
      %v2729 = vsel %vm274, %v2628, 0
      %v2732 = vsel %vm274, %v2629, 0
      %v2735 = vsel %vm274, %v2630, 0
      %v2738 = vsel %vm274, %v2631, 0
      %v2741 = vsel %vm274, %v2632, 0
      %v2744 = vsel %vm274, %v2633, 0
      %v2747 = vsel %vm274, %v2634, 0
      %v2750 = vsel %vm274, %v2635, 0
      %v2753 = vsel %vm274, %v2636, 0
      %v2756 = vsel %vm274, %v2637, 0
      %v2759 = vsel %vm274, %v2638, 0
      %v2762 = vsel %vm274, %v2639, 0
      %v2765 = vsel %vm274, %v2640, 0
      %v2768 = vsel %vm274, %v2641, 0
      %v2771 = vsel %vm274, %v2642, 0
      %v2774 = vsel %vm274, %v2643, 0
      %v2777 = vsel %vm274, %v2644, 0
      %v2780 = vsel %vm274, %v2645, 0
      %v2783 = vsel %vm274, %v2646, 0
      %v2786 = vsel %vm274, %v2647, 0
      %v2789 = vsel %vm274, %v2648, 0
      %v2792 = vsel %vm274, %v2649, 0
      %v2795 = vsel %vm274, %v2650, 0
      %v2798 = vsel %vm274, %v2651, 0
      %v2801 = vsel %vm274, %v2652, 0
      %v2804 = vsel %vm274, %v2653, 0
      %v2807 = vsel %vm425, %v2655, 0
      %2809 = vmatpush.msra.mxu0 0.0
      %2810 = vmatpush.msra.mxu0 0.0
      %2811 = vmatpush.msra.mxu0 0.0
      %2812 = vmatpush.msra.mxu0 0.0
      %2813 = vmatpush.msra.mxu0 0.0
      %2814 = vmatpush.msra.mxu0 0.0
      %2815 = vmatpush.msra.mxu0 0.0
      %2816 = vmatpush.msra.mxu0 0.0
      %2817 = vmatpush.msra.mxu0 0.0
      %2818 = vmatpush.msra.mxu0 0.0
      %2819 = vmatpush.msra.mxu0 0.0
      %2820 = vmatpush.msra.mxu0 0.0
      %2821 = vmatpush.msra.mxu0 0.0
      %2822 = vmatpush.msra.mxu0 0.0
      %2823 = vmatpush.msra.mxu0 0.0
      %2824 = vmatpush.msra.mxu0 %v2807
      %2825 = vmatmul.f32.gmra.mxu0 %v2657
      %v2826 = vpop.f32.mrf.mxu0
      %v2827 = vadd.f32 0.0, %v2826
      %2828 = vmatmul.f32.gmra.mxu0 %v2660
      %v2829 = vpop.f32.mrf.mxu0
      %v2830 = vadd.f32 0.0, %v2829
      %2831 = vmatmul.f32.gmra.mxu0 %v2663
      %v2832 = vpop.f32.mrf.mxu0
      %v2833 = vadd.f32 0.0, %v2832
      %2834 = vmatmul.f32.gmra.mxu0 %v2666
      %v2835 = vpop.f32.mrf.mxu0
      %v2836 = vadd.f32 0.0, %v2835
      %2837 = vmatmul.f32.gmra.mxu0 %v2669
      %v2838 = vpop.f32.mrf.mxu0
      %v2839 = vadd.f32 0.0, %v2838
      %2840 = vmatmul.f32.gmra.mxu0 %v2672
      %v2841 = vpop.f32.mrf.mxu0
      %v2842 = vadd.f32 0.0, %v2841
      %2843 = vmatmul.f32.gmra.mxu0 %v2675
      %v2844 = vpop.f32.mrf.mxu0
      %v2845 = vadd.f32 0.0, %v2844
      %2846 = vmatmul.f32.gmra.mxu0 %v2678
      %v2847 = vpop.f32.mrf.mxu0
      %v2848 = vadd.f32 0.0, %v2847
      %2849 = vmatmul.f32.gmra.mxu0 %v2681
      %v2850 = vpop.f32.mrf.mxu0
      %v2851 = vadd.f32 0.0, %v2850
      %2852 = vmatmul.f32.gmra.mxu0 %v2684
      %v2853 = vpop.f32.mrf.mxu0
      %v2854 = vadd.f32 0.0, %v2853
      %2855 = vmatmul.f32.gmra.mxu0 %v2687
      %v2856 = vpop.f32.mrf.mxu0
      %v2857 = vadd.f32 0.0, %v2856
      %2858 = vmatmul.f32.gmra.mxu0 %v2690
      %v2859 = vpop.f32.mrf.mxu0
      %v2860 = vadd.f32 0.0, %v2859
      %2861 = vmatmul.f32.gmra.mxu0 %v2693
      %v2862 = vpop.f32.mrf.mxu0
      %v2863 = vadd.f32 0.0, %v2862
      %2864 = vmatmul.f32.gmra.mxu0 %v2696
      %v2865 = vpop.f32.mrf.mxu0
      %v2866 = vadd.f32 0.0, %v2865
      %2867 = vmatmul.f32.gmra.mxu0 %v2699
      %v2868 = vpop.f32.mrf.mxu0
      %v2869 = vadd.f32 0.0, %v2868
      %2870 = vmatmul.f32.gmra.mxu0 %v2702
      %v2871 = vpop.f32.mrf.mxu0
      %v2872 = vadd.f32 0.0, %v2871
      %2873 = vmatmul.f32.gmra.mxu0 %v2705
      %v2874 = vpop.f32.mrf.mxu0
      %v2875 = vadd.f32 0.0, %v2874
      %2876 = vmatmul.f32.gmra.mxu0 %v2708
      %v2877 = vpop.f32.mrf.mxu0
      %v2878 = vadd.f32 0.0, %v2877
      %2879 = vmatmul.f32.gmra.mxu0 %v2711
      %v2880 = vpop.f32.mrf.mxu0
      %v2881 = vadd.f32 0.0, %v2880
      %2882 = vmatmul.f32.gmra.mxu0 %v2714
      %v2883 = vpop.f32.mrf.mxu0
      %v2884 = vadd.f32 0.0, %v2883
      %2885 = vmatmul.f32.gmra.mxu0 %v2717
      %v2886 = vpop.f32.mrf.mxu0
      %v2887 = vadd.f32 0.0, %v2886
      %2888 = vmatmul.f32.gmra.mxu0 %v2720
      %v2889 = vpop.f32.mrf.mxu0
      %v2890 = vadd.f32 0.0, %v2889
      %2891 = vmatmul.f32.gmra.mxu0 %v2723
      %v2892 = vpop.f32.mrf.mxu0
      %v2893 = vadd.f32 0.0, %v2892
      %2894 = vmatmul.f32.gmra.mxu0 %v2726
      %v2895 = vpop.f32.mrf.mxu0
      %v2896 = vadd.f32 0.0, %v2895
      %2897 = vmatmul.f32.gmra.mxu0 %v2729
      %v2898 = vpop.f32.mrf.mxu0
      %v2899 = vadd.f32 0.0, %v2898
      %2900 = vmatmul.f32.gmra.mxu0 %v2732
      %v2901 = vpop.f32.mrf.mxu0
      %v2902 = vadd.f32 0.0, %v2901
      %2903 = vmatmul.f32.gmra.mxu0 %v2735
      %v2904 = vpop.f32.mrf.mxu0
      %v2905 = vadd.f32 0.0, %v2904
      %2906 = vmatmul.f32.gmra.mxu0 %v2738
      %v2907 = vpop.f32.mrf.mxu0
      %v2908 = vadd.f32 0.0, %v2907
      %2909 = vmatmul.f32.gmra.mxu0 %v2741
      %v2910 = vpop.f32.mrf.mxu0
      %v2911 = vadd.f32 0.0, %v2910
      %2912 = vmatmul.f32.gmra.mxu0 %v2744
      %v2913 = vpop.f32.mrf.mxu0
      %v2914 = vadd.f32 0.0, %v2913
      %2915 = vmatmul.f32.gmra.mxu0 %v2747
      %v2916 = vpop.f32.mrf.mxu0
      %v2917 = vadd.f32 0.0, %v2916
      %2918 = vmatmul.f32.gmra.mxu0 %v2750
      %v2919 = vpop.f32.mrf.mxu0
      %v2920 = vadd.f32 0.0, %v2919
      %2921 = vmatmul.f32.gmra.mxu0 %v2753
      %v2922 = vpop.f32.mrf.mxu0
      %v2923 = vadd.f32 0.0, %v2922
      %2924 = vmatmul.f32.gmra.mxu0 %v2756
      %v2925 = vpop.f32.mrf.mxu0
      %v2926 = vadd.f32 0.0, %v2925
      %2927 = vmatmul.f32.gmra.mxu0 %v2759
      %v2928 = vpop.f32.mrf.mxu0
      %v2929 = vadd.f32 0.0, %v2928
      %2930 = vmatmul.f32.gmra.mxu0 %v2762
      %v2931 = vpop.f32.mrf.mxu0
      %v2932 = vadd.f32 0.0, %v2931
      %2933 = vmatmul.f32.gmra.mxu0 %v2765
      %v2934 = vpop.f32.mrf.mxu0
      %v2935 = vadd.f32 0.0, %v2934
      %2936 = vmatmul.f32.gmra.mxu0 %v2768
      %v2937 = vpop.f32.mrf.mxu0
      %v2938 = vadd.f32 0.0, %v2937
      %2939 = vmatmul.f32.gmra.mxu0 %v2771
      %v2940 = vpop.f32.mrf.mxu0
      %v2941 = vadd.f32 0.0, %v2940
      %2942 = vmatmul.f32.gmra.mxu0 %v2774
      %v2943 = vpop.f32.mrf.mxu0
      %v2944 = vadd.f32 0.0, %v2943
      %2945 = vmatmul.f32.gmra.mxu0 %v2777
      %v2946 = vpop.f32.mrf.mxu0
      %v2947 = vadd.f32 0.0, %v2946
      %2948 = vmatmul.f32.gmra.mxu0 %v2780
      %v2949 = vpop.f32.mrf.mxu0
      %v2950 = vadd.f32 0.0, %v2949
      %2951 = vmatmul.f32.gmra.mxu0 %v2783
      %v2952 = vpop.f32.mrf.mxu0
      %v2953 = vadd.f32 0.0, %v2952
      %2954 = vmatmul.f32.gmra.mxu0 %v2786
      %v2955 = vpop.f32.mrf.mxu0
      %v2956 = vadd.f32 0.0, %v2955
      %2957 = vmatmul.f32.gmra.mxu0 %v2789
      %v2958 = vpop.f32.mrf.mxu0
      %v2959 = vadd.f32 0.0, %v2958
      %2960 = vmatmul.f32.gmra.mxu0 %v2792
      %v2961 = vpop.f32.mrf.mxu0
      %v2962 = vadd.f32 0.0, %v2961
      %2963 = vmatmul.f32.gmra.mxu0 %v2795
      %v2964 = vpop.f32.mrf.mxu0
      %v2965 = vadd.f32 0.0, %v2964
      %2966 = vmatmul.f32.gmra.mxu0 %v2798
      %v2967 = vpop.f32.mrf.mxu0
      %v2968 = vadd.f32 0.0, %v2967
      %2969 = vmatmul.f32.gmra.mxu0 %v2801
      %v2970 = vpop.f32.mrf.mxu0
      %v2971 = vadd.f32 0.0, %v2970
      %2972 = vmatmul.f32.gmra.mxu0 %v2804
      %v2973 = vpop.f32.mrf.mxu0
      %v2974 = vadd.f32 0.0, %v2973
      %2975 = vdwg.mxu0
      %v2976 = vadd.f32 %v2554, %v2827
      %v2977 = vadd.f32 %v2555, %v2830
      %v2978 = vadd.f32 %v2556, %v2833
      %v2979 = vadd.f32 %v2557, %v2836
      %v2980 = vadd.f32 %v2558, %v2839
      %v2981 = vadd.f32 %v2559, %v2842
      %v2982 = vadd.f32 %v2560, %v2845
      %v2983 = vadd.f32 %v2561, %v2848
      %v2984 = vadd.f32 %v2562, %v2851
      %v2985 = vadd.f32 %v2563, %v2854
      %v2986 = vadd.f32 %v2564, %v2857
      %v2987 = vadd.f32 %v2565, %v2860
      %v2988 = vadd.f32 %v2566, %v2863
      %v2989 = vadd.f32 %v2567, %v2866
      %v2990 = vadd.f32 %v2568, %v2869
      %v2991 = vadd.f32 %v2569, %v2872
      %v2992 = vadd.f32 %v2570, %v2875
      %v2993 = vadd.f32 %v2571, %v2878
      %v2994 = vadd.f32 %v2572, %v2881
      %v2995 = vadd.f32 %v2573, %v2884
      %v2996 = vadd.f32 %v2574, %v2887
      %v2997 = vadd.f32 %v2575, %v2890
      %v2998 = vadd.f32 %v2576, %v2893
      %v2999 = vadd.f32 %v2577, %v2896
      %v3000 = vadd.f32 %v2578, %v2899
      %v3001 = vadd.f32 %v2579, %v2902
      %v3002 = vadd.f32 %v2580, %v2905
      %v3003 = vadd.f32 %v2581, %v2908
      %v3004 = vadd.f32 %v2582, %v2911
      %v3005 = vadd.f32 %v2583, %v2914
      %v3006 = vadd.f32 %v2584, %v2917
      %v3007 = vadd.f32 %v2585, %v2920
      %v3008 = vadd.f32 %v2586, %v2923
      %v3009 = vadd.f32 %v2587, %v2926
      %v3010 = vadd.f32 %v2588, %v2929
      %v3011 = vadd.f32 %v2589, %v2932
      %v3012 = vadd.f32 %v2590, %v2935
      %v3013 = vadd.f32 %v2591, %v2938
      %v3014 = vadd.f32 %v2592, %v2941
      %v3015 = vadd.f32 %v2593, %v2944
      %v3016 = vadd.f32 %v2594, %v2947
      %v3017 = vadd.f32 %v2595, %v2950
      %v3018 = vadd.f32 %v2596, %v2953
      %v3019 = vadd.f32 %v2597, %v2956
      %v3020 = vadd.f32 %v2598, %v2959
      %v3021 = vadd.f32 %v2599, %v2962
      %v3022 = vadd.f32 %v2600, %v2965
      %v3023 = vadd.f32 %v2601, %v2968
      %v3024 = vadd.f32 %v2602, %v2971
      %v3025 = vadd.f32 %v2603, %v2974
      %v3026 = vld [vmem:[%s165 + $0x52] sm:$0xff]
      %v3027 = vld [vmem:[%s165 + $0x5a] sm:$0xff]
      %v3028 = vld [vmem:[%s165 + $0x62] sm:$0xff]
      %v3029 = vld [vmem:[%s165 + $0x6a] sm:$0xff]
      %v3030 = vld [vmem:[%s165 + $0x72] sm:$0xff]
      %v3031 = vld [vmem:[%s165 + $0x7a] sm:$0xff]
      %v3032 = vld [vmem:[%s165 + $0x82] sm:$0xff]
      %v3033 = vld [vmem:[%s165 + $0x8a] sm:$0xff]
      %v3034 = vld [vmem:[%s165 + $0x92] sm:$0xff]
      %v3035 = vld [vmem:[%s165 + $0x9a] sm:$0xff]
      %v3036 = vld [vmem:[%s165 + $0xa2] sm:$0xff]
      %v3037 = vld [vmem:[%s165 + $0xaa] sm:$0xff]
      %v3038 = vld [vmem:[%s165 + $0xb2] sm:$0xff]
      %v3039 = vld [vmem:[%s165 + $0xba] sm:$0xff]
      %v3040 = vld [vmem:[%s165 + $0xc2] sm:$0xff]
      %v3041 = vld [vmem:[%s165 + $0xca] sm:$0xff]
      %v3042 = vld [vmem:[%s165 + $0xd2] sm:$0xff]
      %v3043 = vld [vmem:[%s165 + $0xda] sm:$0xff]
      %v3044 = vld [vmem:[%s165 + $0xe2] sm:$0xff]
      %v3045 = vld [vmem:[%s165 + $0xea] sm:$0xff]
      %v3046 = vld [vmem:[%s165 + $0xf2] sm:$0xff]
      %v3047 = vld [vmem:[%s165 + $0xfa] sm:$0xff]
      %v3048 = vld [vmem:[%s165 + $0x102] sm:$0xff]
      %v3049 = vld [vmem:[%s165 + $0x10a] sm:$0xff]
      %v3050 = vld [vmem:[%s165 + $0x112] sm:$0xff]
      %v3051 = vld [vmem:[%s165 + $0x11a] sm:$0xff]
      %v3052 = vld [vmem:[%s165 + $0x122] sm:$0xff]
      %v3053 = vld [vmem:[%s165 + $0x12a] sm:$0xff]
      %v3054 = vld [vmem:[%s165 + $0x132] sm:$0xff]
      %v3055 = vld [vmem:[%s165 + $0x13a] sm:$0xff]
      %v3056 = vld [vmem:[%s165 + $0x142] sm:$0xff]
      %v3057 = vld [vmem:[%s165 + $0x14a] sm:$0xff]
      %v3058 = vld [vmem:[%s165 + $0x152] sm:$0xff]
      %v3059 = vld [vmem:[%s165 + $0x15a] sm:$0xff]
      %v3060 = vld [vmem:[%s165 + $0x162] sm:$0xff]
      %v3061 = vld [vmem:[%s165 + $0x16a] sm:$0xff]
      %v3062 = vld [vmem:[%s165 + $0x172] sm:$0xff]
      %v3063 = vld [vmem:[%s165 + $0x17a] sm:$0xff]
      %v3064 = vld [vmem:[%s165 + $0x182] sm:$0xff]
      %v3065 = vld [vmem:[%s165 + $0x18a] sm:$0xff]
      %v3066 = vld [vmem:[%s165 + $0x192] sm:$0xff]
      %v3067 = vld [vmem:[%s165 + $0x19a] sm:$0xff]
      %v3068 = vld [vmem:[%s165 + $0x1a2] sm:$0xff]
      %v3069 = vld [vmem:[%s165 + $0x1aa] sm:$0xff]
      %v3070 = vld [vmem:[%s165 + $0x1b2] sm:$0xff]
      %v3071 = vld [vmem:[%s165 + $0x1ba] sm:$0xff]
      %v3072 = vld [vmem:[%s165 + $0x1c2] sm:$0xff]
      %v3073 = vld [vmem:[%s165 + $0x1ca] sm:$0xff]
      %v3074 = vld [vmem:[%s165 + $0x1d2] sm:$0xff]
      %v3075 = vld [vmem:[%s165 + $0x1da] sm:$0xff]
      %s3076 = scalar_lea.vmem %s1, 28
      %v3077 = vld [vmem:[%s3076] sm:$0xf]
      %v3079 = vsel %vm274, %v3026, 0
      %v3082 = vsel %vm274, %v3027, 0
      %v3085 = vsel %vm274, %v3028, 0
      %v3088 = vsel %vm274, %v3029, 0
      %v3091 = vsel %vm274, %v3030, 0
      %v3094 = vsel %vm274, %v3031, 0
      %v3097 = vsel %vm274, %v3032, 0
      %v3100 = vsel %vm274, %v3033, 0
      %v3103 = vsel %vm274, %v3034, 0
      %v3106 = vsel %vm274, %v3035, 0
      %v3109 = vsel %vm274, %v3036, 0
      %v3112 = vsel %vm274, %v3037, 0
      %v3115 = vsel %vm274, %v3038, 0
      %v3118 = vsel %vm274, %v3039, 0
      %v3121 = vsel %vm274, %v3040, 0
      %v3124 = vsel %vm274, %v3041, 0
      %v3127 = vsel %vm274, %v3042, 0
      %v3130 = vsel %vm274, %v3043, 0
      %v3133 = vsel %vm274, %v3044, 0
      %v3136 = vsel %vm274, %v3045, 0
      %v3139 = vsel %vm274, %v3046, 0
      %v3142 = vsel %vm274, %v3047, 0
      %v3145 = vsel %vm274, %v3048, 0
      %v3148 = vsel %vm274, %v3049, 0
      %v3151 = vsel %vm274, %v3050, 0
      %v3154 = vsel %vm274, %v3051, 0
      %v3157 = vsel %vm274, %v3052, 0
      %v3160 = vsel %vm274, %v3053, 0
      %v3163 = vsel %vm274, %v3054, 0
      %v3166 = vsel %vm274, %v3055, 0
      %v3169 = vsel %vm274, %v3056, 0
      %v3172 = vsel %vm274, %v3057, 0
      %v3175 = vsel %vm274, %v3058, 0
      %v3178 = vsel %vm274, %v3059, 0
      %v3181 = vsel %vm274, %v3060, 0
      %v3184 = vsel %vm274, %v3061, 0
      %v3187 = vsel %vm274, %v3062, 0
      %v3190 = vsel %vm274, %v3063, 0
      %v3193 = vsel %vm274, %v3064, 0
      %v3196 = vsel %vm274, %v3065, 0
      %v3199 = vsel %vm274, %v3066, 0
      %v3202 = vsel %vm274, %v3067, 0
      %v3205 = vsel %vm274, %v3068, 0
      %v3208 = vsel %vm274, %v3069, 0
      %v3211 = vsel %vm274, %v3070, 0
      %v3214 = vsel %vm274, %v3071, 0
      %v3217 = vsel %vm274, %v3072, 0
      %v3220 = vsel %vm274, %v3073, 0
      %v3223 = vsel %vm274, %v3074, 0
      %v3226 = vsel %vm274, %v3075, 0
      %v3229 = vsel %vm425, %v3077, 0
      %3231 = vmatpush.msra.mxu0 0.0
      %3232 = vmatpush.msra.mxu0 0.0
      %3233 = vmatpush.msra.mxu0 0.0
      %3234 = vmatpush.msra.mxu0 0.0
      %3235 = vmatpush.msra.mxu0 0.0
      %3236 = vmatpush.msra.mxu0 0.0
      %3237 = vmatpush.msra.mxu0 0.0
      %3238 = vmatpush.msra.mxu0 0.0
      %3239 = vmatpush.msra.mxu0 0.0
      %3240 = vmatpush.msra.mxu0 0.0
      %3241 = vmatpush.msra.mxu0 0.0
      %3242 = vmatpush.msra.mxu0 0.0
      %3243 = vmatpush.msra.mxu0 0.0
      %3244 = vmatpush.msra.mxu0 0.0
      %3245 = vmatpush.msra.mxu0 0.0
      %3246 = vmatpush.msra.mxu0 %v3229
      %3247 = vmatmul.f32.gmra.mxu0 %v3079
      %v3248 = vpop.f32.mrf.mxu0
      %v3249 = vadd.f32 0.0, %v3248
      %3250 = vmatmul.f32.gmra.mxu0 %v3082
      %v3251 = vpop.f32.mrf.mxu0
      %v3252 = vadd.f32 0.0, %v3251
      %3253 = vmatmul.f32.gmra.mxu0 %v3085
      %v3254 = vpop.f32.mrf.mxu0
      %v3255 = vadd.f32 0.0, %v3254
      %3256 = vmatmul.f32.gmra.mxu0 %v3088
      %v3257 = vpop.f32.mrf.mxu0
      %v3258 = vadd.f32 0.0, %v3257
      %3259 = vmatmul.f32.gmra.mxu0 %v3091
      %v3260 = vpop.f32.mrf.mxu0
      %v3261 = vadd.f32 0.0, %v3260
      %3262 = vmatmul.f32.gmra.mxu0 %v3094
      %v3263 = vpop.f32.mrf.mxu0
      %v3264 = vadd.f32 0.0, %v3263
      %3265 = vmatmul.f32.gmra.mxu0 %v3097
      %v3266 = vpop.f32.mrf.mxu0
      %v3267 = vadd.f32 0.0, %v3266
      %3268 = vmatmul.f32.gmra.mxu0 %v3100
      %v3269 = vpop.f32.mrf.mxu0
      %v3270 = vadd.f32 0.0, %v3269
      %3271 = vmatmul.f32.gmra.mxu0 %v3103
      %v3272 = vpop.f32.mrf.mxu0
      %v3273 = vadd.f32 0.0, %v3272
      %3274 = vmatmul.f32.gmra.mxu0 %v3106
      %v3275 = vpop.f32.mrf.mxu0
      %v3276 = vadd.f32 0.0, %v3275
      %3277 = vmatmul.f32.gmra.mxu0 %v3109
      %v3278 = vpop.f32.mrf.mxu0
      %v3279 = vadd.f32 0.0, %v3278
      %3280 = vmatmul.f32.gmra.mxu0 %v3112
      %v3281 = vpop.f32.mrf.mxu0
      %v3282 = vadd.f32 0.0, %v3281
      %3283 = vmatmul.f32.gmra.mxu0 %v3115
      %v3284 = vpop.f32.mrf.mxu0
      %v3285 = vadd.f32 0.0, %v3284
      %3286 = vmatmul.f32.gmra.mxu0 %v3118
      %v3287 = vpop.f32.mrf.mxu0
      %v3288 = vadd.f32 0.0, %v3287
      %3289 = vmatmul.f32.gmra.mxu0 %v3121
      %v3290 = vpop.f32.mrf.mxu0
      %v3291 = vadd.f32 0.0, %v3290
      %3292 = vmatmul.f32.gmra.mxu0 %v3124
      %v3293 = vpop.f32.mrf.mxu0
      %v3294 = vadd.f32 0.0, %v3293
      %3295 = vmatmul.f32.gmra.mxu0 %v3127
      %v3296 = vpop.f32.mrf.mxu0
      %v3297 = vadd.f32 0.0, %v3296
      %3298 = vmatmul.f32.gmra.mxu0 %v3130
      %v3299 = vpop.f32.mrf.mxu0
      %v3300 = vadd.f32 0.0, %v3299
      %3301 = vmatmul.f32.gmra.mxu0 %v3133
      %v3302 = vpop.f32.mrf.mxu0
      %v3303 = vadd.f32 0.0, %v3302
      %3304 = vmatmul.f32.gmra.mxu0 %v3136
      %v3305 = vpop.f32.mrf.mxu0
      %v3306 = vadd.f32 0.0, %v3305
      %3307 = vmatmul.f32.gmra.mxu0 %v3139
      %v3308 = vpop.f32.mrf.mxu0
      %v3309 = vadd.f32 0.0, %v3308
      %3310 = vmatmul.f32.gmra.mxu0 %v3142
      %v3311 = vpop.f32.mrf.mxu0
      %v3312 = vadd.f32 0.0, %v3311
      %3313 = vmatmul.f32.gmra.mxu0 %v3145
      %v3314 = vpop.f32.mrf.mxu0
      %v3315 = vadd.f32 0.0, %v3314
      %3316 = vmatmul.f32.gmra.mxu0 %v3148
      %v3317 = vpop.f32.mrf.mxu0
      %v3318 = vadd.f32 0.0, %v3317
      %3319 = vmatmul.f32.gmra.mxu0 %v3151
      %v3320 = vpop.f32.mrf.mxu0
      %v3321 = vadd.f32 0.0, %v3320
      %3322 = vmatmul.f32.gmra.mxu0 %v3154
      %v3323 = vpop.f32.mrf.mxu0
      %v3324 = vadd.f32 0.0, %v3323
      %3325 = vmatmul.f32.gmra.mxu0 %v3157
      %v3326 = vpop.f32.mrf.mxu0
      %v3327 = vadd.f32 0.0, %v3326
      %3328 = vmatmul.f32.gmra.mxu0 %v3160
      %v3329 = vpop.f32.mrf.mxu0
      %v3330 = vadd.f32 0.0, %v3329
      %3331 = vmatmul.f32.gmra.mxu0 %v3163
      %v3332 = vpop.f32.mrf.mxu0
      %v3333 = vadd.f32 0.0, %v3332
      %3334 = vmatmul.f32.gmra.mxu0 %v3166
      %v3335 = vpop.f32.mrf.mxu0
      %v3336 = vadd.f32 0.0, %v3335
      %3337 = vmatmul.f32.gmra.mxu0 %v3169
      %v3338 = vpop.f32.mrf.mxu0
      %v3339 = vadd.f32 0.0, %v3338
      %3340 = vmatmul.f32.gmra.mxu0 %v3172
      %v3341 = vpop.f32.mrf.mxu0
      %v3342 = vadd.f32 0.0, %v3341
      %3343 = vmatmul.f32.gmra.mxu0 %v3175
      %v3344 = vpop.f32.mrf.mxu0
      %v3345 = vadd.f32 0.0, %v3344
      %3346 = vmatmul.f32.gmra.mxu0 %v3178
      %v3347 = vpop.f32.mrf.mxu0
      %v3348 = vadd.f32 0.0, %v3347
      %3349 = vmatmul.f32.gmra.mxu0 %v3181
      %v3350 = vpop.f32.mrf.mxu0
      %v3351 = vadd.f32 0.0, %v3350
      %3352 = vmatmul.f32.gmra.mxu0 %v3184
      %v3353 = vpop.f32.mrf.mxu0
      %v3354 = vadd.f32 0.0, %v3353
      %3355 = vmatmul.f32.gmra.mxu0 %v3187
      %v3356 = vpop.f32.mrf.mxu0
      %v3357 = vadd.f32 0.0, %v3356
      %3358 = vmatmul.f32.gmra.mxu0 %v3190
      %v3359 = vpop.f32.mrf.mxu0
      %v3360 = vadd.f32 0.0, %v3359
      %3361 = vmatmul.f32.gmra.mxu0 %v3193
      %v3362 = vpop.f32.mrf.mxu0
      %v3363 = vadd.f32 0.0, %v3362
      %3364 = vmatmul.f32.gmra.mxu0 %v3196
      %v3365 = vpop.f32.mrf.mxu0
      %v3366 = vadd.f32 0.0, %v3365
      %3367 = vmatmul.f32.gmra.mxu0 %v3199
      %v3368 = vpop.f32.mrf.mxu0
      %v3369 = vadd.f32 0.0, %v3368
      %3370 = vmatmul.f32.gmra.mxu0 %v3202
      %v3371 = vpop.f32.mrf.mxu0
      %v3372 = vadd.f32 0.0, %v3371
      %3373 = vmatmul.f32.gmra.mxu0 %v3205
      %v3374 = vpop.f32.mrf.mxu0
      %v3375 = vadd.f32 0.0, %v3374
      %3376 = vmatmul.f32.gmra.mxu0 %v3208
      %v3377 = vpop.f32.mrf.mxu0
      %v3378 = vadd.f32 0.0, %v3377
      %3379 = vmatmul.f32.gmra.mxu0 %v3211
      %v3380 = vpop.f32.mrf.mxu0
      %v3381 = vadd.f32 0.0, %v3380
      %3382 = vmatmul.f32.gmra.mxu0 %v3214
      %v3383 = vpop.f32.mrf.mxu0
      %v3384 = vadd.f32 0.0, %v3383
      %3385 = vmatmul.f32.gmra.mxu0 %v3217
      %v3386 = vpop.f32.mrf.mxu0
      %v3387 = vadd.f32 0.0, %v3386
      %3388 = vmatmul.f32.gmra.mxu0 %v3220
      %v3389 = vpop.f32.mrf.mxu0
      %v3390 = vadd.f32 0.0, %v3389
      %3391 = vmatmul.f32.gmra.mxu0 %v3223
      %v3392 = vpop.f32.mrf.mxu0
      %v3393 = vadd.f32 0.0, %v3392
      %3394 = vmatmul.f32.gmra.mxu0 %v3226
      %v3395 = vpop.f32.mrf.mxu0
      %v3396 = vadd.f32 0.0, %v3395
      %3397 = vdwg.mxu0
      %v3398 = vadd.f32 %v2976, %v3249
      %v3399 = vadd.f32 %v2977, %v3252
      %v3400 = vadd.f32 %v2978, %v3255
      %v3401 = vadd.f32 %v2979, %v3258
      %v3402 = vadd.f32 %v2980, %v3261
      %v3403 = vadd.f32 %v2981, %v3264
      %v3404 = vadd.f32 %v2982, %v3267
      %v3405 = vadd.f32 %v2983, %v3270
      %v3406 = vadd.f32 %v2984, %v3273
      %v3407 = vadd.f32 %v2985, %v3276
      %v3408 = vadd.f32 %v2986, %v3279
      %v3409 = vadd.f32 %v2987, %v3282
      %v3410 = vadd.f32 %v2988, %v3285
      %v3411 = vadd.f32 %v2989, %v3288
      %v3412 = vadd.f32 %v2990, %v3291
      %v3413 = vadd.f32 %v2991, %v3294
      %v3414 = vadd.f32 %v2992, %v3297
      %v3415 = vadd.f32 %v2993, %v3300
      %v3416 = vadd.f32 %v2994, %v3303
      %v3417 = vadd.f32 %v2995, %v3306
      %v3418 = vadd.f32 %v2996, %v3309
      %v3419 = vadd.f32 %v2997, %v3312
      %v3420 = vadd.f32 %v2998, %v3315
      %v3421 = vadd.f32 %v2999, %v3318
      %v3422 = vadd.f32 %v3000, %v3321
      %v3423 = vadd.f32 %v3001, %v3324
      %v3424 = vadd.f32 %v3002, %v3327
      %v3425 = vadd.f32 %v3003, %v3330
      %v3426 = vadd.f32 %v3004, %v3333
      %v3427 = vadd.f32 %v3005, %v3336
      %v3428 = vadd.f32 %v3006, %v3339
      %v3429 = vadd.f32 %v3007, %v3342
      %v3430 = vadd.f32 %v3008, %v3345
      %v3431 = vadd.f32 %v3009, %v3348
      %v3432 = vadd.f32 %v3010, %v3351
      %v3433 = vadd.f32 %v3011, %v3354
      %v3434 = vadd.f32 %v3012, %v3357
      %v3435 = vadd.f32 %v3013, %v3360
      %v3436 = vadd.f32 %v3014, %v3363
      %v3437 = vadd.f32 %v3015, %v3366
      %v3438 = vadd.f32 %v3016, %v3369
      %v3439 = vadd.f32 %v3017, %v3372
      %v3440 = vadd.f32 %v3018, %v3375
      %v3441 = vadd.f32 %v3019, %v3378
      %v3442 = vadd.f32 %v3020, %v3381
      %v3443 = vadd.f32 %v3021, %v3384
      %v3444 = vadd.f32 %v3022, %v3387
      %v3445 = vadd.f32 %v3023, %v3390
      %v3446 = vadd.f32 %v3024, %v3393
      %v3447 = vadd.f32 %v3025, %v3396
      %v3448 = vld [vmem:[%s165 + $0x54] sm:$0xff]
      %v3449 = vld [vmem:[%s165 + $0x5c] sm:$0xff]
      %v3450 = vld [vmem:[%s165 + $0x64] sm:$0xff]
      %v3451 = vld [vmem:[%s165 + $0x6c] sm:$0xff]
      %v3452 = vld [vmem:[%s165 + $0x74] sm:$0xff]
      %v3453 = vld [vmem:[%s165 + $0x7c] sm:$0xff]
      %v3454 = vld [vmem:[%s165 + $0x84] sm:$0xff]
      %v3455 = vld [vmem:[%s165 + $0x8c] sm:$0xff]
      %v3456 = vld [vmem:[%s165 + $0x94] sm:$0xff]
      %v3457 = vld [vmem:[%s165 + $0x9c] sm:$0xff]
      %v3458 = vld [vmem:[%s165 + $0xa4] sm:$0xff]
      %v3459 = vld [vmem:[%s165 + $0xac] sm:$0xff]
      %v3460 = vld [vmem:[%s165 + $0xb4] sm:$0xff]
      %v3461 = vld [vmem:[%s165 + $0xbc] sm:$0xff]
      %v3462 = vld [vmem:[%s165 + $0xc4] sm:$0xff]
      %v3463 = vld [vmem:[%s165 + $0xcc] sm:$0xff]
      %v3464 = vld [vmem:[%s165 + $0xd4] sm:$0xff]
      %v3465 = vld [vmem:[%s165 + $0xdc] sm:$0xff]
      %v3466 = vld [vmem:[%s165 + $0xe4] sm:$0xff]
      %v3467 = vld [vmem:[%s165 + $0xec] sm:$0xff]
      %v3468 = vld [vmem:[%s165 + $0xf4] sm:$0xff]
      %v3469 = vld [vmem:[%s165 + $0xfc] sm:$0xff]
      %v3470 = vld [vmem:[%s165 + $0x104] sm:$0xff]
      %v3471 = vld [vmem:[%s165 + $0x10c] sm:$0xff]
      %v3472 = vld [vmem:[%s165 + $0x114] sm:$0xff]
      %v3473 = vld [vmem:[%s165 + $0x11c] sm:$0xff]
      %v3474 = vld [vmem:[%s165 + $0x124] sm:$0xff]
      %v3475 = vld [vmem:[%s165 + $0x12c] sm:$0xff]
      %v3476 = vld [vmem:[%s165 + $0x134] sm:$0xff]
      %v3477 = vld [vmem:[%s165 + $0x13c] sm:$0xff]
      %v3478 = vld [vmem:[%s165 + $0x144] sm:$0xff]
      %v3479 = vld [vmem:[%s165 + $0x14c] sm:$0xff]
      %v3480 = vld [vmem:[%s165 + $0x154] sm:$0xff]
      %v3481 = vld [vmem:[%s165 + $0x15c] sm:$0xff]
      %v3482 = vld [vmem:[%s165 + $0x164] sm:$0xff]
      %v3483 = vld [vmem:[%s165 + $0x16c] sm:$0xff]
      %v3484 = vld [vmem:[%s165 + $0x174] sm:$0xff]
      %v3485 = vld [vmem:[%s165 + $0x17c] sm:$0xff]
      %v3486 = vld [vmem:[%s165 + $0x184] sm:$0xff]
      %v3487 = vld [vmem:[%s165 + $0x18c] sm:$0xff]
      %v3488 = vld [vmem:[%s165 + $0x194] sm:$0xff]
      %v3489 = vld [vmem:[%s165 + $0x19c] sm:$0xff]
      %v3490 = vld [vmem:[%s165 + $0x1a4] sm:$0xff]
      %v3491 = vld [vmem:[%s165 + $0x1ac] sm:$0xff]
      %v3492 = vld [vmem:[%s165 + $0x1b4] sm:$0xff]
      %v3493 = vld [vmem:[%s165 + $0x1bc] sm:$0xff]
      %v3494 = vld [vmem:[%s165 + $0x1c4] sm:$0xff]
      %v3495 = vld [vmem:[%s165 + $0x1cc] sm:$0xff]
      %v3496 = vld [vmem:[%s165 + $0x1d4] sm:$0xff]
      %v3497 = vld [vmem:[%s165 + $0x1dc] sm:$0xff]
      %s3498 = scalar_lea.vmem %s1, 32
      %v3499 = vld [vmem:[%s3498] sm:$0xf]
      %v3501 = vsel %vm274, %v3448, 0
      %v3504 = vsel %vm274, %v3449, 0
      %v3507 = vsel %vm274, %v3450, 0
      %v3510 = vsel %vm274, %v3451, 0
      %v3513 = vsel %vm274, %v3452, 0
      %v3516 = vsel %vm274, %v3453, 0
      %v3519 = vsel %vm274, %v3454, 0
      %v3522 = vsel %vm274, %v3455, 0
      %v3525 = vsel %vm274, %v3456, 0
      %v3528 = vsel %vm274, %v3457, 0
      %v3531 = vsel %vm274, %v3458, 0
      %v3534 = vsel %vm274, %v3459, 0
      %v3537 = vsel %vm274, %v3460, 0
      %v3540 = vsel %vm274, %v3461, 0
      %v3543 = vsel %vm274, %v3462, 0
      %v3546 = vsel %vm274, %v3463, 0
      %v3549 = vsel %vm274, %v3464, 0
      %v3552 = vsel %vm274, %v3465, 0
      %v3555 = vsel %vm274, %v3466, 0
      %v3558 = vsel %vm274, %v3467, 0
      %v3561 = vsel %vm274, %v3468, 0
      %v3564 = vsel %vm274, %v3469, 0
      %v3567 = vsel %vm274, %v3470, 0
      %v3570 = vsel %vm274, %v3471, 0
      %v3573 = vsel %vm274, %v3472, 0
      %v3576 = vsel %vm274, %v3473, 0
      %v3579 = vsel %vm274, %v3474, 0
      %v3582 = vsel %vm274, %v3475, 0
      %v3585 = vsel %vm274, %v3476, 0
      %v3588 = vsel %vm274, %v3477, 0
      %v3591 = vsel %vm274, %v3478, 0
      %v3594 = vsel %vm274, %v3479, 0
      %v3597 = vsel %vm274, %v3480, 0
      %v3600 = vsel %vm274, %v3481, 0
      %v3603 = vsel %vm274, %v3482, 0
      %v3606 = vsel %vm274, %v3483, 0
      %v3609 = vsel %vm274, %v3484, 0
      %v3612 = vsel %vm274, %v3485, 0
      %v3615 = vsel %vm274, %v3486, 0
      %v3618 = vsel %vm274, %v3487, 0
      %v3621 = vsel %vm274, %v3488, 0
      %v3624 = vsel %vm274, %v3489, 0
      %v3627 = vsel %vm274, %v3490, 0
      %v3630 = vsel %vm274, %v3491, 0
      %v3633 = vsel %vm274, %v3492, 0
      %v3636 = vsel %vm274, %v3493, 0
      %v3639 = vsel %vm274, %v3494, 0
      %v3642 = vsel %vm274, %v3495, 0
      %v3645 = vsel %vm274, %v3496, 0
      %v3648 = vsel %vm274, %v3497, 0
      %v3651 = vsel %vm425, %v3499, 0
      %3653 = vmatpush.msra.mxu0 0.0
      %3654 = vmatpush.msra.mxu0 0.0
      %3655 = vmatpush.msra.mxu0 0.0
      %3656 = vmatpush.msra.mxu0 0.0
      %3657 = vmatpush.msra.mxu0 0.0
      %3658 = vmatpush.msra.mxu0 0.0
      %3659 = vmatpush.msra.mxu0 0.0
      %3660 = vmatpush.msra.mxu0 0.0
      %3661 = vmatpush.msra.mxu0 0.0
      %3662 = vmatpush.msra.mxu0 0.0
      %3663 = vmatpush.msra.mxu0 0.0
      %3664 = vmatpush.msra.mxu0 0.0
      %3665 = vmatpush.msra.mxu0 0.0
      %3666 = vmatpush.msra.mxu0 0.0
      %3667 = vmatpush.msra.mxu0 0.0
      %3668 = vmatpush.msra.mxu0 %v3651
      %3669 = vmatmul.f32.gmra.mxu0 %v3501
      %v3670 = vpop.f32.mrf.mxu0
      %v3671 = vadd.f32 0.0, %v3670
      %3672 = vmatmul.f32.gmra.mxu0 %v3504
      %v3673 = vpop.f32.mrf.mxu0
      %v3674 = vadd.f32 0.0, %v3673
      %3675 = vmatmul.f32.gmra.mxu0 %v3507
      %v3676 = vpop.f32.mrf.mxu0
      %v3677 = vadd.f32 0.0, %v3676
      %3678 = vmatmul.f32.gmra.mxu0 %v3510
      %v3679 = vpop.f32.mrf.mxu0
      %v3680 = vadd.f32 0.0, %v3679
      %3681 = vmatmul.f32.gmra.mxu0 %v3513
      %v3682 = vpop.f32.mrf.mxu0
      %v3683 = vadd.f32 0.0, %v3682
      %3684 = vmatmul.f32.gmra.mxu0 %v3516
      %v3685 = vpop.f32.mrf.mxu0
      %v3686 = vadd.f32 0.0, %v3685
      %3687 = vmatmul.f32.gmra.mxu0 %v3519
      %v3688 = vpop.f32.mrf.mxu0
      %v3689 = vadd.f32 0.0, %v3688
      %3690 = vmatmul.f32.gmra.mxu0 %v3522
      %v3691 = vpop.f32.mrf.mxu0
      %v3692 = vadd.f32 0.0, %v3691
      %3693 = vmatmul.f32.gmra.mxu0 %v3525
      %v3694 = vpop.f32.mrf.mxu0
      %v3695 = vadd.f32 0.0, %v3694
      %3696 = vmatmul.f32.gmra.mxu0 %v3528
      %v3697 = vpop.f32.mrf.mxu0
      %v3698 = vadd.f32 0.0, %v3697
      %3699 = vmatmul.f32.gmra.mxu0 %v3531
      %v3700 = vpop.f32.mrf.mxu0
      %v3701 = vadd.f32 0.0, %v3700
      %3702 = vmatmul.f32.gmra.mxu0 %v3534
      %v3703 = vpop.f32.mrf.mxu0
      %v3704 = vadd.f32 0.0, %v3703
      %3705 = vmatmul.f32.gmra.mxu0 %v3537
      %v3706 = vpop.f32.mrf.mxu0
      %v3707 = vadd.f32 0.0, %v3706
      %3708 = vmatmul.f32.gmra.mxu0 %v3540
      %v3709 = vpop.f32.mrf.mxu0
      %v3710 = vadd.f32 0.0, %v3709
      %3711 = vmatmul.f32.gmra.mxu0 %v3543
      %v3712 = vpop.f32.mrf.mxu0
      %v3713 = vadd.f32 0.0, %v3712
      %3714 = vmatmul.f32.gmra.mxu0 %v3546
      %v3715 = vpop.f32.mrf.mxu0
      %v3716 = vadd.f32 0.0, %v3715
      %3717 = vmatmul.f32.gmra.mxu0 %v3549
      %v3718 = vpop.f32.mrf.mxu0
      %v3719 = vadd.f32 0.0, %v3718
      %3720 = vmatmul.f32.gmra.mxu0 %v3552
      %v3721 = vpop.f32.mrf.mxu0
      %v3722 = vadd.f32 0.0, %v3721
      %3723 = vmatmul.f32.gmra.mxu0 %v3555
      %v3724 = vpop.f32.mrf.mxu0
      %v3725 = vadd.f32 0.0, %v3724
      %3726 = vmatmul.f32.gmra.mxu0 %v3558
      %v3727 = vpop.f32.mrf.mxu0
      %v3728 = vadd.f32 0.0, %v3727
      %3729 = vmatmul.f32.gmra.mxu0 %v3561
      %v3730 = vpop.f32.mrf.mxu0
      %v3731 = vadd.f32 0.0, %v3730
      %3732 = vmatmul.f32.gmra.mxu0 %v3564
      %v3733 = vpop.f32.mrf.mxu0
      %v3734 = vadd.f32 0.0, %v3733
      %3735 = vmatmul.f32.gmra.mxu0 %v3567
      %v3736 = vpop.f32.mrf.mxu0
      %v3737 = vadd.f32 0.0, %v3736
      %3738 = vmatmul.f32.gmra.mxu0 %v3570
      %v3739 = vpop.f32.mrf.mxu0
      %v3740 = vadd.f32 0.0, %v3739
      %3741 = vmatmul.f32.gmra.mxu0 %v3573
      %v3742 = vpop.f32.mrf.mxu0
      %v3743 = vadd.f32 0.0, %v3742
      %3744 = vmatmul.f32.gmra.mxu0 %v3576
      %v3745 = vpop.f32.mrf.mxu0
      %v3746 = vadd.f32 0.0, %v3745
      %3747 = vmatmul.f32.gmra.mxu0 %v3579
      %v3748 = vpop.f32.mrf.mxu0
      %v3749 = vadd.f32 0.0, %v3748
      %3750 = vmatmul.f32.gmra.mxu0 %v3582
      %v3751 = vpop.f32.mrf.mxu0
      %v3752 = vadd.f32 0.0, %v3751
      %3753 = vmatmul.f32.gmra.mxu0 %v3585
      %v3754 = vpop.f32.mrf.mxu0
      %v3755 = vadd.f32 0.0, %v3754
      %3756 = vmatmul.f32.gmra.mxu0 %v3588
      %v3757 = vpop.f32.mrf.mxu0
      %v3758 = vadd.f32 0.0, %v3757
      %3759 = vmatmul.f32.gmra.mxu0 %v3591
      %v3760 = vpop.f32.mrf.mxu0
      %v3761 = vadd.f32 0.0, %v3760
      %3762 = vmatmul.f32.gmra.mxu0 %v3594
      %v3763 = vpop.f32.mrf.mxu0
      %v3764 = vadd.f32 0.0, %v3763
      %3765 = vmatmul.f32.gmra.mxu0 %v3597
      %v3766 = vpop.f32.mrf.mxu0
      %v3767 = vadd.f32 0.0, %v3766
      %3768 = vmatmul.f32.gmra.mxu0 %v3600
      %v3769 = vpop.f32.mrf.mxu0
      %v3770 = vadd.f32 0.0, %v3769
      %3771 = vmatmul.f32.gmra.mxu0 %v3603
      %v3772 = vpop.f32.mrf.mxu0
      %v3773 = vadd.f32 0.0, %v3772
      %3774 = vmatmul.f32.gmra.mxu0 %v3606
      %v3775 = vpop.f32.mrf.mxu0
      %v3776 = vadd.f32 0.0, %v3775
      %3777 = vmatmul.f32.gmra.mxu0 %v3609
      %v3778 = vpop.f32.mrf.mxu0
      %v3779 = vadd.f32 0.0, %v3778
      %3780 = vmatmul.f32.gmra.mxu0 %v3612
      %v3781 = vpop.f32.mrf.mxu0
      %v3782 = vadd.f32 0.0, %v3781
      %3783 = vmatmul.f32.gmra.mxu0 %v3615
      %v3784 = vpop.f32.mrf.mxu0
      %v3785 = vadd.f32 0.0, %v3784
      %3786 = vmatmul.f32.gmra.mxu0 %v3618
      %v3787 = vpop.f32.mrf.mxu0
      %v3788 = vadd.f32 0.0, %v3787
      %3789 = vmatmul.f32.gmra.mxu0 %v3621
      %v3790 = vpop.f32.mrf.mxu0
      %v3791 = vadd.f32 0.0, %v3790
      %3792 = vmatmul.f32.gmra.mxu0 %v3624
      %v3793 = vpop.f32.mrf.mxu0
      %v3794 = vadd.f32 0.0, %v3793
      %3795 = vmatmul.f32.gmra.mxu0 %v3627
      %v3796 = vpop.f32.mrf.mxu0
      %v3797 = vadd.f32 0.0, %v3796
      %3798 = vmatmul.f32.gmra.mxu0 %v3630
      %v3799 = vpop.f32.mrf.mxu0
      %v3800 = vadd.f32 0.0, %v3799
      %3801 = vmatmul.f32.gmra.mxu0 %v3633
      %v3802 = vpop.f32.mrf.mxu0
      %v3803 = vadd.f32 0.0, %v3802
      %3804 = vmatmul.f32.gmra.mxu0 %v3636
      %v3805 = vpop.f32.mrf.mxu0
      %v3806 = vadd.f32 0.0, %v3805
      %3807 = vmatmul.f32.gmra.mxu0 %v3639
      %v3808 = vpop.f32.mrf.mxu0
      %v3809 = vadd.f32 0.0, %v3808
      %3810 = vmatmul.f32.gmra.mxu0 %v3642
      %v3811 = vpop.f32.mrf.mxu0
      %v3812 = vadd.f32 0.0, %v3811
      %3813 = vmatmul.f32.gmra.mxu0 %v3645
      %v3814 = vpop.f32.mrf.mxu0
      %v3815 = vadd.f32 0.0, %v3814
      %3816 = vmatmul.f32.gmra.mxu0 %v3648
      %v3817 = vpop.f32.mrf.mxu0
      %v3818 = vadd.f32 0.0, %v3817
      %3819 = vdwg.mxu0
      %v3820 = vadd.f32 %v3398, %v3671
      %v3821 = vadd.f32 %v3399, %v3674
      %v3822 = vadd.f32 %v3400, %v3677
      %v3823 = vadd.f32 %v3401, %v3680
      %v3824 = vadd.f32 %v3402, %v3683
      %v3825 = vadd.f32 %v3403, %v3686
      %v3826 = vadd.f32 %v3404, %v3689
      %v3827 = vadd.f32 %v3405, %v3692
      %v3828 = vadd.f32 %v3406, %v3695
      %v3829 = vadd.f32 %v3407, %v3698
      %v3830 = vadd.f32 %v3408, %v3701
      %v3831 = vadd.f32 %v3409, %v3704
      %v3832 = vadd.f32 %v3410, %v3707
      %v3833 = vadd.f32 %v3411, %v3710
      %v3834 = vadd.f32 %v3412, %v3713
      %v3835 = vadd.f32 %v3413, %v3716
      %v3836 = vadd.f32 %v3414, %v3719
      %v3837 = vadd.f32 %v3415, %v3722
      %v3838 = vadd.f32 %v3416, %v3725
      %v3839 = vadd.f32 %v3417, %v3728
      %v3840 = vadd.f32 %v3418, %v3731
      %v3841 = vadd.f32 %v3419, %v3734
      %v3842 = vadd.f32 %v3420, %v3737
      %v3843 = vadd.f32 %v3421, %v3740
      %v3844 = vadd.f32 %v3422, %v3743
      %v3845 = vadd.f32 %v3423, %v3746
      %v3846 = vadd.f32 %v3424, %v3749
      %v3847 = vadd.f32 %v3425, %v3752
      %v3848 = vadd.f32 %v3426, %v3755
      %v3849 = vadd.f32 %v3427, %v3758
      %v3850 = vadd.f32 %v3428, %v3761
      %v3851 = vadd.f32 %v3429, %v3764
      %v3852 = vadd.f32 %v3430, %v3767
      %v3853 = vadd.f32 %v3431, %v3770
      %v3854 = vadd.f32 %v3432, %v3773
      %v3855 = vadd.f32 %v3433, %v3776
      %v3856 = vadd.f32 %v3434, %v3779
      %v3857 = vadd.f32 %v3435, %v3782
      %v3858 = vadd.f32 %v3436, %v3785
      %v3859 = vadd.f32 %v3437, %v3788
      %v3860 = vadd.f32 %v3438, %v3791
      %v3861 = vadd.f32 %v3439, %v3794
      %v3862 = vadd.f32 %v3440, %v3797
      %v3863 = vadd.f32 %v3441, %v3800
      %v3864 = vadd.f32 %v3442, %v3803
      %v3865 = vadd.f32 %v3443, %v3806
      %v3866 = vadd.f32 %v3444, %v3809
      %v3867 = vadd.f32 %v3445, %v3812
      %v3868 = vadd.f32 %v3446, %v3815
      %v3869 = vadd.f32 %v3447, %v3818
      %v3870 = vld [vmem:[%s2] sm:$0x1]
      %v3872 = vperm.slane %v3870, 0
      %v3874 = vadd.f32 %v3820, %v3872
      %v3875 = vadd.f32 %v3821, %v3872
      %v3876 = vadd.f32 %v3822, %v3872
      %v3877 = vadd.f32 %v3823, %v3872
      %v3878 = vadd.f32 %v3824, %v3872
      %v3879 = vadd.f32 %v3825, %v3872
      %v3880 = vadd.f32 %v3826, %v3872
      %v3881 = vadd.f32 %v3827, %v3872
      %v3882 = vadd.f32 %v3828, %v3872
      %v3883 = vadd.f32 %v3829, %v3872
      %v3884 = vadd.f32 %v3830, %v3872
      %v3885 = vadd.f32 %v3831, %v3872
      %v3886 = vadd.f32 %v3832, %v3872
      %v3887 = vadd.f32 %v3833, %v3872
      %v3888 = vadd.f32 %v3834, %v3872
      %v3889 = vadd.f32 %v3835, %v3872
      %v3890 = vadd.f32 %v3836, %v3872
      %v3891 = vadd.f32 %v3837, %v3872
      %v3892 = vadd.f32 %v3838, %v3872
      %v3893 = vadd.f32 %v3839, %v3872
      %v3894 = vadd.f32 %v3840, %v3872
      %v3895 = vadd.f32 %v3841, %v3872
      %v3896 = vadd.f32 %v3842, %v3872
      %v3897 = vadd.f32 %v3843, %v3872
      %v3898 = vadd.f32 %v3844, %v3872
      %v3899 = vadd.f32 %v3845, %v3872
      %v3900 = vadd.f32 %v3846, %v3872
      %v3901 = vadd.f32 %v3847, %v3872
      %v3902 = vadd.f32 %v3848, %v3872
      %v3903 = vadd.f32 %v3849, %v3872
      %v3904 = vadd.f32 %v3850, %v3872
      %v3905 = vadd.f32 %v3851, %v3872
      %v3906 = vadd.f32 %v3852, %v3872
      %v3907 = vadd.f32 %v3853, %v3872
      %v3908 = vadd.f32 %v3854, %v3872
      %v3909 = vadd.f32 %v3855, %v3872
      %v3910 = vadd.f32 %v3856, %v3872
      %v3911 = vadd.f32 %v3857, %v3872
      %v3912 = vadd.f32 %v3858, %v3872
      %v3913 = vadd.f32 %v3859, %v3872
      %v3914 = vadd.f32 %v3860, %v3872
      %v3915 = vadd.f32 %v3861, %v3872
      %v3916 = vadd.f32 %v3862, %v3872
      %v3917 = vadd.f32 %v3863, %v3872
      %v3918 = vadd.f32 %v3864, %v3872
      %v3919 = vadd.f32 %v3865, %v3872
      %v3920 = vadd.f32 %v3866, %v3872
      %v3921 = vadd.f32 %v3867, %v3872
      %v3922 = vadd.f32 %v3868, %v3872
      %v3923 = vadd.f32 %v3869, %v3872
      %v3924 = vmax.f32 %v3874, 0.0
      %v3925 = vmax.f32 %v3875, 0.0
      %v3926 = vmax.f32 %v3876, 0.0
      %v3927 = vmax.f32 %v3877, 0.0
      %v3928 = vmax.f32 %v3878, 0.0
      %v3929 = vmax.f32 %v3879, 0.0
      %v3930 = vmax.f32 %v3880, 0.0
      %v3931 = vmax.f32 %v3881, 0.0
      %v3932 = vmax.f32 %v3882, 0.0
      %v3933 = vmax.f32 %v3883, 0.0
      %v3934 = vmax.f32 %v3884, 0.0
      %v3935 = vmax.f32 %v3885, 0.0
      %v3936 = vmax.f32 %v3886, 0.0
      %v3937 = vmax.f32 %v3887, 0.0
      %v3938 = vmax.f32 %v3888, 0.0
      %v3939 = vmax.f32 %v3889, 0.0
      %v3940 = vmax.f32 %v3890, 0.0
      %v3941 = vmax.f32 %v3891, 0.0
      %v3942 = vmax.f32 %v3892, 0.0
      %v3943 = vmax.f32 %v3893, 0.0
      %v3944 = vmax.f32 %v3894, 0.0
      %v3945 = vmax.f32 %v3895, 0.0
      %v3946 = vmax.f32 %v3896, 0.0
      %v3947 = vmax.f32 %v3897, 0.0
      %v3948 = vmax.f32 %v3898, 0.0
      %v3949 = vmax.f32 %v3899, 0.0
      %v3950 = vmax.f32 %v3900, 0.0
      %v3951 = vmax.f32 %v3901, 0.0
      %v3952 = vmax.f32 %v3902, 0.0
      %v3953 = vmax.f32 %v3903, 0.0
      %v3954 = vmax.f32 %v3904, 0.0
      %v3955 = vmax.f32 %v3905, 0.0
      %v3956 = vmax.f32 %v3906, 0.0
      %v3957 = vmax.f32 %v3907, 0.0
      %v3958 = vmax.f32 %v3908, 0.0
      %v3959 = vmax.f32 %v3909, 0.0
      %v3960 = vmax.f32 %v3910, 0.0
      %v3961 = vmax.f32 %v3911, 0.0
      %v3962 = vmax.f32 %v3912, 0.0
      %v3963 = vmax.f32 %v3913, 0.0
      %v3964 = vmax.f32 %v3914, 0.0
      %v3965 = vmax.f32 %v3915, 0.0
      %v3966 = vmax.f32 %v3916, 0.0
      %v3967 = vmax.f32 %v3917, 0.0
      %v3968 = vmax.f32 %v3918, 0.0
      %v3969 = vmax.f32 %v3919, 0.0
      %v3970 = vmax.f32 %v3920, 0.0
      %v3971 = vmax.f32 %v3921, 0.0
      %v3972 = vmax.f32 %v3922, 0.0
      %v3973 = vmax.f32 %v3923, 0.0
      %3974 = vst.msk [vmem:[%s170] sm:$0xff] %vm274, %v3924
      %3975 = vst.msk [vmem:[%s170 + $0x8] sm:$0xff] %vm274, %v3925
      %3976 = vst.msk [vmem:[%s170 + $0x10] sm:$0xff] %vm274, %v3926
      %3977 = vst.msk [vmem:[%s170 + $0x18] sm:$0xff] %vm274, %v3927
      %3978 = vst.msk [vmem:[%s170 + $0x20] sm:$0xff] %vm274, %v3928
      %3979 = vst.msk [vmem:[%s170 + $0x28] sm:$0xff] %vm274, %v3929
      %3980 = vst.msk [vmem:[%s170 + $0x30] sm:$0xff] %vm274, %v3930
      %3981 = vst.msk [vmem:[%s170 + $0x38] sm:$0xff] %vm274, %v3931
      %3982 = vst.msk [vmem:[%s170 + $0x40] sm:$0xff] %vm274, %v3932
      %3983 = vst.msk [vmem:[%s170 + $0x48] sm:$0xff] %vm274, %v3933
      %3984 = vst.msk [vmem:[%s170 + $0x50] sm:$0xff] %vm274, %v3934
      %3985 = vst.msk [vmem:[%s170 + $0x58] sm:$0xff] %vm274, %v3935
      %3986 = vst.msk [vmem:[%s170 + $0x60] sm:$0xff] %vm274, %v3936
      %3987 = vst.msk [vmem:[%s170 + $0x68] sm:$0xff] %vm274, %v3937
      %3988 = vst.msk [vmem:[%s170 + $0x70] sm:$0xff] %vm274, %v3938
      %3989 = vst.msk [vmem:[%s170 + $0x78] sm:$0xff] %vm274, %v3939
      %3990 = vst.msk [vmem:[%s170 + $0x80] sm:$0xff] %vm274, %v3940
      %3991 = vst.msk [vmem:[%s170 + $0x88] sm:$0xff] %vm274, %v3941
      %3992 = vst.msk [vmem:[%s170 + $0x90] sm:$0xff] %vm274, %v3942
      %3993 = vst.msk [vmem:[%s170 + $0x98] sm:$0xff] %vm274, %v3943
      %3994 = vst.msk [vmem:[%s170 + $0xa0] sm:$0xff] %vm274, %v3944
      %3995 = vst.msk [vmem:[%s170 + $0xa8] sm:$0xff] %vm274, %v3945
      %3996 = vst.msk [vmem:[%s170 + $0xb0] sm:$0xff] %vm274, %v3946
      %3997 = vst.msk [vmem:[%s170 + $0xb8] sm:$0xff] %vm274, %v3947
      %3998 = vst.msk [vmem:[%s170 + $0xc0] sm:$0xff] %vm274, %v3948
      %3999 = vst.msk [vmem:[%s170 + $0xc8] sm:$0xff] %vm274, %v3949
      %4000 = vst.msk [vmem:[%s170 + $0xd0] sm:$0xff] %vm274, %v3950
      %4001 = vst.msk [vmem:[%s170 + $0xd8] sm:$0xff] %vm274, %v3951
      %4002 = vst.msk [vmem:[%s170 + $0xe0] sm:$0xff] %vm274, %v3952
      %4003 = vst.msk [vmem:[%s170 + $0xe8] sm:$0xff] %vm274, %v3953
      %4004 = vst.msk [vmem:[%s170 + $0xf0] sm:$0xff] %vm274, %v3954
      %4005 = vst.msk [vmem:[%s170 + $0xf8] sm:$0xff] %vm274, %v3955
      %4006 = vst.msk [vmem:[%s170 + $0x100] sm:$0xff] %vm274, %v3956
      %4007 = vst.msk [vmem:[%s170 + $0x108] sm:$0xff] %vm274, %v3957
      %4008 = vst.msk [vmem:[%s170 + $0x110] sm:$0xff] %vm274, %v3958
      %4009 = vst.msk [vmem:[%s170 + $0x118] sm:$0xff] %vm274, %v3959
      %4010 = vst.msk [vmem:[%s170 + $0x120] sm:$0xff] %vm274, %v3960
      %4011 = vst.msk [vmem:[%s170 + $0x128] sm:$0xff] %vm274, %v3961
      %4012 = vst.msk [vmem:[%s170 + $0x130] sm:$0xff] %vm274, %v3962
      %4013 = vst.msk [vmem:[%s170 + $0x138] sm:$0xff] %vm274, %v3963
      %4014 = vst.msk [vmem:[%s170 + $0x140] sm:$0xff] %vm274, %v3964
      %4015 = vst.msk [vmem:[%s170 + $0x148] sm:$0xff] %vm274, %v3965
      %4016 = vst.msk [vmem:[%s170 + $0x150] sm:$0xff] %vm274, %v3966
      %4017 = vst.msk [vmem:[%s170 + $0x158] sm:$0xff] %vm274, %v3967
      %4018 = vst.msk [vmem:[%s170 + $0x160] sm:$0xff] %vm274, %v3968
      %4019 = vst.msk [vmem:[%s170 + $0x168] sm:$0xff] %vm274, %v3969
      %4020 = vst.msk [vmem:[%s170 + $0x170] sm:$0xff] %vm274, %v3970
      %4021 = vst.msk [vmem:[%s170 + $0x178] sm:$0xff] %vm274, %v3971
      %4022 = vst.msk [vmem:[%s170 + $0x180] sm:$0xff] %vm274, %v3972
      %4023 = vst.msk [vmem:[%s170 + $0x188] sm:$0xff] %vm274, %v3973
      %p4024 = scmp.lt.s32.totalorder %s14, 1
      %s4025 = scalar_select %p4024, %s14, 1
      %s4026 = smul.addr %s4025, 50
      %s4027 = smul.addr %s4026, 8
      %s4028 = scalar_lea.vmem %s3, %s4027
      // Predicated region
      $region33: #{bottleneck_forward.4} parent=31 // pred_check
        %p4029 = pneg %p100
      $region34: #{bottleneck_forward.4} parent=31 // pred_check_branch
        %4031 = sbr.rel (%p4029) target = $region36
      $region35: #{bottleneck_forward.4} parent=31 // pred_region
        _
      $region36: #{bottleneck_forward.4} parent=31 // pred_fallthru
        _
    $region32: #{bottleneck_forward.4} parent=5 // pred_fallthru
      _
    %p4032 = scmp.le.s32.totalorder 2, %s9
    // Predicated region
    $region37: #{bottleneck_forward.4} parent=5 // pred_check
      %p4033 = pneg %p4032
    $region38: #{bottleneck_forward.4} parent=5 // pred_check_branch
      %4035 = sbr.rel (%p4033) target = $region40
    $region39: #{bottleneck_forward.4} parent=5 // pred_region
      %s4036 = ssub.s32 %s9, 2
      // Predicated region
      $region41: #{bottleneck_forward.4} parent=39 // pred_check
        %p4037 = pneg %p106
      $region42: #{bottleneck_forward.4} parent=39 // pred_check_branch
        %4039 = sbr.rel (%p4037) target = $region44
      $region43: #{bottleneck_forward.4} parent=39 // pred_region
        %p4040 = scmp.lt.s32.totalorder %s15, 1
        %s4041 = scalar_select %p4040, %s15, 1
        %s4042 = smul.addr %s4041, 50
        %s4043 = smul.addr %s4042, 8
        %s4044 = scalar_lea.vmem %s3, %s4043
      $region44: #{bottleneck_forward.4} parent=39 // pred_fallthru
        _
    $region40: #{bottleneck_forward.4} parent=5 // pred_fallthru
      _
  $region6: #{bottleneck_forward.4} parent=0 // loop_footer
    %s13 = sadd.s32 1, %s9
  $region7: #{bottleneck_forward.4} parent=0 // loop_footer_branch
    %8 = sbr.rel target = $region3
  $region8: #{bottleneck_forward.4} parent=0 // loop_exit
    _

</llo_original>
